<compile_context>
chip_gen: v5e
topology: v5e:2x2
jax: 0.10.0
libtpu: 0.0.40
codegen_flags: <defaults>
</compile_context>

<pallas_src>
import math
from functools import partial

import jax
import jax.numpy as jnp
import numpy as np
from jax.experimental import pallas as pl
from jax.experimental.pallas import tpu as pltpu

F32 = jnp.float32
BF16 = jnp.bfloat16
EPS = 1e-5
NEG = -1e30          # MaxPool pad value (never selected)

# Columns of the packed per-channel vector table (shape (C, NVEC)).
V_S1, V_T1 = 0, 1              # DFB norm1 scale / shift
V_PT7, V_PT5, V_PT3 = 2, 3, 4  # depthwise bias + BN shift per branch
V_SUMT, V_WT = 5, 6            # shift after branch sum + norm2 ; gate-conv shift
V_T1A, V_T1M = 7, 8            # SAB first 1x1 shifts (ave / max head)
V_W2A, V_W2M = 9, 10           # SAB second 1x1 (C->1) weights as columns
V_CT2 = 11                     # CAB second 1x1 shift
NVEC = 12


def _round_up(v, m):
    return -(-v // m) * m


# ----------------------------- in-kernel math ------------------------------
def _erf(x):
    # Abramowitz & Stegun 7.1.26 polynomial (|err| < ~1e-4 with approx recip).
    a1, a2, a3, a4, a5 = (0.254829592, -0.284496736, 1.421413741,
                          -1.453152027, 1.061405429)
    p = 0.3275911
    s = jnp.where(x >= 0.0, 1.0, -1.0)
    z = jnp.abs(x)
    t = pl.reciprocal(1.0 + p * z, approx=True)        # EUP slot
    poly = ((((a5 * t + a4) * t + a3) * t + a2) * t + a1) * t
    return s * (1.0 - poly * jnp.exp(-z * z))


def _gelu(x):  # erf-based GELU, matching nn.GELU()
    return 0.5 * x * (1.0 + _erf(x * (1.0 / math.sqrt(2.0))))


def _sigmoid(x):
    return pl.reciprocal(1.0 + jnp.exp(-x), approx=True)


# -------------------------------- kernel ------------------------------------
def sfm_kernel(x_ref, vec_ref, dwt_ref, wmat_ref, cw_ref, scal_ref, mask_ref,
               o_ref, fp_ref, fa_ref, *, H, W, PADL):
    # Shapes:
    #   x_ref    (1, C, HW)       input image, pixels on lanes
    #   vec_ref  (C, NVEC)        per-channel scale/shift columns
    #   dwt_ref  (C, 83)          depthwise tap weights (49 + 25 + 9)
    #   wmat_ref (C, 8C)  bf16    [pw_cat(3C) | w_w | w1a | w1m | wc1t | wc2]
    #   cw_ref   (2, 49)          SAB 7x7 attention-conv taps (ave / max rows)
    #   scal_ref (2, >=3)         row0 = [t2a, t2m, c_shift]; row1 = CAB t_c1
    #   mask_ref (7, HW)          0/1 column masks for horizontal offsets -3..3
    #   fp_ref   (C, 2*PADL+HW)   flat width-padded spatial scratch
    #   fa_ref   (2, 2*PADL+HW)   flat scratch for the 2-channel attention map
    C = x_ref.shape[1]
    HW = H * W

    def vcol(c):                                   # (C, 1) per-channel column
        return vec_ref[:, pl.ds(c, 1)]

    def dwcol(k):                                  # (C, 1) depthwise tap
        return dwt_ref[:, pl.ds(k, 1)]

    def maskrow(bi):                               # (1, HW) 0/1 column mask
        return mask_ref[pl.ds(bi, 1), :]

    # --- pad-strip init (tiny; interiors are overwritten below) -------------
    zpadC = jnp.zeros((C, PADL), F32)
    fp_ref[:, pl.ds(0, PADL)] = zpadC
    fp_ref[:, pl.ds(PADL + HW, PADL)] = zpadC
    zpad2 = jnp.zeros((2, PADL), F32)
    fa_ref[:, pl.ds(0, PADL)] = zpad2
    fa_ref[:, pl.ds(PADL + HW, PADL)] = zpad2

    # ------------------------------- DFB -------------------------------------
    x = x_ref[0]                                          # (C, HW)
    x_norm = x * vcol(V_S1) + vcol(V_T1)                  # norm1 (inference BN)
    fp_ref[:, pl.ds(PADL, HW)] = x_norm

    # Depthwise 7x7 / 5x5 / 3x3 convolutions (all three branches in one tap
    # sweep).  One row-strip load per vertical offset; horizontal offsets are
    # value slices of that load; horizontal out-of-image taps are removed by
    # multiplying the per-offset partial sum with a 0/1 column mask.
    strips = [fp_ref[:, pl.ds(PADL + (ai - 3) * W - 3, HW + 6)]
              for ai in range(7)]                         # each (C, HW + 6)
    acc7 = jnp.zeros((C, HW), F32)
    acc5 = jnp.zeros((C, HW), F32)
    acc3 = jnp.zeros((C, HW), F32)
    for bi in range(7):
        p7 = jnp.zeros((C, HW), F32)
        p5 = jnp.zeros((C, HW), F32) if 1 <= bi <= 5 else None
        p3 = jnp.zeros((C, HW), F32) if 2 <= bi <= 4 else None
        for ai in range(7):
            tap = strips[ai][:, bi:bi + HW]               # (C, HW)
            p7 = p7 + tap * dwcol(ai * 7 + bi)
            if p5 is not None and 1 <= ai <= 5:
                p5 = p5 + tap * dwcol(49 + (ai - 1) * 5 + (bi - 1))
            if p3 is not None and 2 <= ai <= 4:
                p3 = p3 + tap * dwcol(74 + (ai - 2) * 3 + (bi - 2))
        m = maskrow(bi)
        acc7 = acc7 + p7 * m
        if p5 is not None:
            acc5 = acc5 + p5 * m
        if p3 is not None:
            acc3 = acc3 + p3 * m

    h7 = _gelu(acc7 + vcol(V_PT7))
    h5 = _gelu(acc5 + vcol(V_PT5))
    h3 = _gelu(acc3 + vcol(V_PT3))

    # Fused branch 1x1 convs: one (C, 3C) x (3C, HW) bf16 MXU matmul.
    hcat = jnp.concatenate([h7, h5, h3], axis=0).astype(BF16)      # (3C, HW)
    w_pw = wmat_ref[:, pl.ds(0, 3 * C)]                            # (C, 3C) bf16
    x_sum = (jnp.dot(w_pw, hcat, preferred_element_type=F32)
             + vcol(V_SUMT))                                       # (C, HW)

    # DFB tail: x_ap = x_sum - AvgPool3x3(x_sum); sigmoid gate; folded residual.
    fp_ref[:, pl.ds(PADL, HW)] = x_sum          # border strips are still zero

    def sum3x3():                               # 3x3 window sum (zero padding)
        out = jnp.zeros((C, HW), F32)
        for bi in range(3):
            part = jnp.zeros((C, HW), F32)
            for ai in range(3):
                part = part + fp_ref[:, pl.ds(PADL + (ai - 1) * W + (bi - 1), HW)]
            out = out + part * maskrow(bi + 2)
        return out

    x_ap = x_sum - sum3x3() * (1.0 / 9.0)
    w_w = wmat_ref[:, pl.ds(3 * C, C)]                             # (C, C) bf16
    g = (jnp.dot(w_w, x_ap.astype(BF16), preferred_element_type=F32)
         + vcol(V_WT))
    x_ee = x_sum * (_sigmoid(g) + 1.0)                             # (C, HW)

    # ------------------------------- SAB -------------------------------------
    fp_ref[:, pl.ds(PADL, HW)] = x_ee
    avs = sum3x3()                              # 3x3 sum; 1/9 folded into w1a

    # MaxPool3x3: refill only the reachable pad strips with a large negative.
    npad = jnp.full((C, W + 1), NEG, F32)
    fp_ref[:, pl.ds(PADL - (W + 1), W + 1)] = npad
    fp_ref[:, pl.ds(PADL + HW, W + 1)] = npad
    mx = jnp.full((C, HW), NEG, F32)
    for bi in range(3):
        part = jnp.full((C, HW), NEG, F32)
        for ai in range(3):
            part = jnp.maximum(
                part, fp_ref[:, pl.ds(PADL + (ai - 1) * W + (bi - 1), HW)])
        mx = jnp.maximum(mx, jnp.where(maskrow(bi + 2) > 0.0, part, NEG))

    w1a = wmat_ref[:, pl.ds(4 * C, C)]
    w1m = wmat_ref[:, pl.ds(5 * C, C)]
    h_ave = _gelu(jnp.dot(w1a, avs.astype(BF16), preferred_element_type=F32)
                  + vcol(V_T1A))
    h_max = _gelu(jnp.dot(w1m, mx.astype(BF16), preferred_element_type=F32)
                  + vcol(V_T1M))
    # Second 1x1 (C -> 1) as a sublane reduction (avoids width-1 matmuls).
    s_ave = (jnp.sum(h_ave * vcol(V_W2A), axis=0, keepdims=True)
             + scal_ref[pl.ds(0, 1), pl.ds(0, 1)])                 # (1, HW)
    s_max = (jnp.sum(h_max * vcol(V_W2M), axis=0, keepdims=True)
             + scal_ref[pl.ds(0, 1), pl.ds(1, 1)])

    # 7x7 conv over the 2-channel [ave, max] attention map (zero padding).
    fa_ref[pl.ds(0, 1), pl.ds(PADL, HW)] = s_ave
    fa_ref[pl.ds(1, 1), pl.ds(PADL, HW)] = s_max
    astrips = [fa_ref[:, pl.ds(PADL + (ai - 3) * W - 3, HW + 6)]
               for ai in range(7)]                                 # (2, HW + 6)
    att2 = jnp.zeros((2, HW), F32)
    for bi in range(7):
        part = jnp.zeros((2, HW), F32)
        for ai in range(7):
            part = part + (astrips[ai][:, bi:bi + HW]
                           * cw_ref[:, pl.ds(ai * 7 + bi, 1)])
        att2 = att2 + part * maskrow(bi)
    att = (jnp.sum(att2, axis=0, keepdims=True)
           + scal_ref[pl.ds(0, 1), pl.ds(2, 1)])                   # (1, HW)
    z = x_ee * (_sigmoid(att) + 1.0)                               # (C, HW)

    # ------------------------------- CAB -------------------------------------
    score = (jnp.max(z, axis=1, keepdims=True)
             + jnp.sum(z, axis=1, keepdims=True) * (1.0 / HW))     # (C, 1)
    # Tiny C x C "matvecs" done as broadcast-multiply + reduce (no width-1 MXU).
    wc1t = wmat_ref[:, pl.ds(6 * C, C)].astype(F32)    # (Cin, Cout) layout
    wc2 = wmat_ref[:, pl.ds(7 * C, C)].astype(F32)     # (Cout, Cin) layout
    hc_row = _gelu(jnp.sum(wc1t * score, axis=0, keepdims=True)
                   + scal_ref[pl.ds(1, 1), pl.ds(0, C)])           # (1, C)
    sc = _sigmoid(jnp.sum(wc2 * hc_row, axis=1, keepdims=True)
                  + vcol(V_CT2))                                   # (C, 1)

    o_ref[0] = z * (sc + 1.0)                                      # lane-dense store


# --------------------------- parameter folding -------------------------------
def _bn_sc_sh(bn):
    s = bn["gamma"] / jnp.sqrt(bn["var"] + EPS)
    t = bn["beta"] - bn["mean"] * s
    return s.astype(F32), t.astype(F32)


def prepare_inputs(params):
    """Fold BatchNorm affines and conv biases into packed weight tables."""
    dfb, sab, cab = params["dfb"], params["sab"], params["cab"]

    s1, t1 = _bn_sc_sh(dfb["bn1"])
    sB, tB = _bn_sc_sh(dfb["bn2"])
    C = s1.shape[0]

    dw_blocks, pre_t, pw_blocks, post_t = [], {}, {}, {}
    for k in (7, 5, 3):
        br = dfb[f"ap{k}"]
        sa, ta = _bn_sc_sh(br["bn_a"])
        sb, tb = _bn_sc_sh(br["bn_b"])
        # depthwise taps folded with BN_a scale, channels-first: (C, k*k)
        dw_blocks.append((br["dw_w"][:, 0, :] * sa[None, :]).T.astype(F32))
        pre_t[k] = (ta + sa * br["dw_b"]).astype(F32)
        # 1x1 conv folded with BN_b and norm2 scales, stored (Cout, Cin)
        pw_blocks[k] = (br["pw_w"] * (sb * sB)[None, :]).T.astype(F32)
        post_t[k] = (tb + sb * br["pw_b"]).astype(F32)
    dwt = jnp.concatenate(dw_blocks, axis=1)                       # (C, 83)
    w_pw = jnp.concatenate([pw_blocks[7], pw_blocks[5], pw_blocks[3]],
                           axis=1)                                 # (C, 3C)
    sum_t = ((post_t[7] + post_t[5] + post_t[3]) * sB + tB).astype(F32)

    sW, tW = _bn_sc_sh(dfb["w_bn"])
    w_w = (dfb["w_w"] * sW[None, :]).T.astype(F32)                 # (C, C)
    w_t = (tW + sW * dfb["w_b"]).astype(F32)

    sA1, tA1 = _bn_sc_sh(sab["ave_bn1"])
    sA2, tA2 = _bn_sc_sh(sab["ave_bn2"])
    w1a = ((sab["ave_w1"] * sA1[None, :]).T * (1.0 / 9.0)).astype(F32)
    t1a = (tA1 + sA1 * sab["ave_b1"]).astype(F32)
    w2a = (sab["ave_w2"][:, 0] * sA2[0]).astype(F32)
    t2a = (tA2[0] + sA2[0] * sab["ave_b2"][0]).astype(F32)

    sM1, tM1 = _bn_sc_sh(sab["max_bn1"])
    sM2, tM2 = _bn_sc_sh(sab["max_bn2"])
    w1m = (sab["max_w1"] * sM1[None, :]).T.astype(F32)
    t1m = (tM1 + sM1 * sab["max_b1"]).astype(F32)
    w2m = (sab["max_w2"][:, 0] * sM2[0]).astype(F32)
    t2m = (tM2[0] + sM2[0] * sab["max_b2"][0]).astype(F32)

    sC_, tC_ = _bn_sc_sh(sab["c_bn"])
    cwa = (sab["c_wa"][:, 0, 0] * sC_[0]).astype(F32)              # (49,)
    cwm = (sab["c_wm"][:, 0, 0] * sC_[0]).astype(F32)
    cw = jnp.stack([cwa, cwm], axis=0)                             # (2, 49)
    c_shift = (tC_[0] + sC_[0] * sab["c_b"][0]).astype(F32)

    sc1, tc1 = _bn_sc_sh(cab["bn1"])
    sc2, tc2 = _bn_sc_sh(cab["bn2"])
    wc1t = (cab["w1"] * sc1[None, :]).astype(F32)                  # (Cin, Cout)
    t_c1 = (tc1 + sc1 * cab["b1"]).astype(F32)
    wc2 = (cab["w2"] * sc2[None, :]).T.astype(F32)                 # (Cout, Cin)
    t_c2 = (tc2 + sc2 * cab["b2"]).astype(F32)

    vec = jnp.stack([s1, t1, pre_t[7], pre_t[5], pre_t[3], sum_t, w_t,
                     t1a, t1m, w2a, w2m, t_c2], axis=1)            # (C, NVEC)
    wmat = jnp.concatenate([w_pw, w_w, w1a, w1m, wc1t, wc2],
                           axis=1).astype(BF16)                    # (C, 8C)

    scw = max(3, int(C))
    row0 = jnp.zeros((scw,), F32).at[0].set(t2a).at[1].set(t2m).at[2].set(c_shift)
    row1 = jnp.zeros((scw,), F32).at[:C].set(t_c1)
    scal = jnp.stack([row0, row1], axis=0)                         # (2, scw)

    return vec, dwt, wmat, cw, scal


def _col_masks(H, W):
    """0/1 masks (7, H*W) of valid output columns per horizontal offset -3..3."""
    col = np.tile(np.arange(W, dtype=np.float32), H)
    rows = []
    for b in range(-3, 4):
        lo = max(0, -b)
        hi = W - max(0, b)
        rows.append(((col >= lo) & (col < hi)).astype(np.float32))
    return jnp.asarray(np.stack(rows, axis=0))


# ------------------------------ pallas glue ----------------------------------
def _pad_bytes(shape, itemsize=4):
    s = list(shape)
    s[-1] = _round_up(s[-1], 128)
    if len(s) >= 2:
        s[-2] = _round_up(s[-2], 8)
    return itemsize * math.prod(s)


def _vmem_limit_bytes(C, HW, PADL):
    need = 4 * _pad_bytes((1, C, HW))                  # dbl-buffered in + out
    need += 2 * (_pad_bytes((C, NVEC)) + _pad_bytes((C, 83))
                 + _pad_bytes((C, 8 * C), 2) + _pad_bytes((2, 49))
                 + _pad_bytes((2, max(3, C))) + _pad_bytes((7, HW)))
    need += _pad_bytes((C, 2 * PADL + HW)) + _pad_bytes((2, 2 * PADL + HW))
    need += 48 * _pad_bytes((C, HW))                   # live-intermediate headroom
    try:
        cap = int(pltpu.get_tpu_info().vmem_capacity_bytes) - 16 * 2**20
    except Exception:
        cap = 48 * 2**20                               # safe for v7x (64 MiB/TC)
    cap = max(cap, 16 * 2**20)
    return int(min(max(need, 32 * 2**20), cap))


def sfm_forward(x_nchw, params):
    N, C, H, W = x_nchw.shape
    HW = H * W
    PADL = _round_up(3 * W + 3, 128)

    # NCHW in, NCHW out: just a free reshape, no transpose / extra HBM pass.
    x = x_nchw.reshape(N, C, HW).astype(F32)
    vec, dwt, wmat, cw, scal = prepare_inputs(params)
    maskarr = _col_masks(H, W)

    kernel = partial(sfm_kernel, H=H, W=W, PADL=PADL)

    grid_spec = pltpu.PrefetchScalarGridSpec(
        num_scalar_prefetch=0,
        grid=(N,),
        in_specs=[
            pl.BlockSpec((1, C, HW), lambda n: (n, 0, 0)),
            pl.BlockSpec(vec.shape, lambda n: (0, 0)),
            pl.BlockSpec(dwt.shape, lambda n: (0, 0)),
            pl.BlockSpec(wmat.shape, lambda n: (0, 0)),
            pl.BlockSpec(cw.shape, lambda n: (0, 0)),
            pl.BlockSpec(scal.shape, lambda n: (0, 0)),
            pl.BlockSpec(maskarr.shape, lambda n: (0, 0)),
        ],
        out_specs=pl.BlockSpec((1, C, HW), lambda n: (n, 0, 0)),
        scratch_shapes=[
            pltpu.VMEM((C, 2 * PADL + HW), F32),   # flat padded spatial scratch
            pltpu.VMEM((2, 2 * PADL + HW), F32),   # flat [ave, max] attention map
        ],
    )

    out = pl.pallas_call(
        kernel,
        out_shape=jax.ShapeDtypeStruct((N, C, HW), F32),
        grid_spec=grid_spec,
        compiler_params=pltpu.CompilerParams(
            dimension_semantics=("parallel",),
            vmem_limit_bytes=_vmem_limit_bytes(C, HW, PADL)),
    )(x, vec, dwt, wmat, cw, scal, maskarr)

    return out.reshape(N, C, H, W)


# --------------------------- parameter init ----------------------------------
def init_params(key, C):
    keys = iter(jax.random.split(key, 128))

    def nk():
        return next(keys)

    def randn(shape, s=0.15):
        return s * jax.random.normal(nk(), shape, dtype=F32)

    def bn(n):
        return dict(gamma=1.0 + randn((n,)), beta=randn((n,)),
                    mean=randn((n,)),
                    var=jax.random.uniform(nk(), (n,), F32, 0.5, 1.5))

    dfb = dict(bn1=bn(C), bn2=bn(C),
               w_w=randn((C, C)), w_b=randn((C,)), w_bn=bn(C))
    for k in (7, 5, 3):
        dfb[f"ap{k}"] = dict(dw_w=randn((k * k, 1, C)), dw_b=randn((C,)),
                             bn_a=bn(C), pw_w=randn((C, C)),
                             pw_b=randn((C,)), bn_b=bn(C))
    sab = dict(ave_w1=randn((C, C)), ave_b1=randn((C,)), ave_bn1=bn(C),
               ave_w2=randn((C, 1)), ave_b2=randn((1,)), ave_bn2=bn(1),
               max_w1=randn((C, C)), max_b1=randn((C,)), max_bn1=bn(C),
               max_w2=randn((C, 1)), max_b2=randn((1,)), max_bn2=bn(1),
               c_wa=randn((49, 1, 1)), c_wm=randn((49, 1, 1)),
               c_b=randn((1,)), c_bn=bn(1))
    cab = dict(w1=randn((C, C)), b1=randn((C,)), bn1=bn(C),
               w2=randn((C, C)), b2=randn((C,)), bn2=bn(C))
    return dict(dfb=dfb, sab=sab, cab=cab)


# --------------------------------- main ---------------------------------------
if __name__ == "__main__":
    N, C, H, W = 2, 8, 16, 16
    key = jax.random.PRNGKey(0)
    kx, kp = jax.random.split(key)
    x = jax.random.normal(kx, (N, C, H, W), dtype=F32)       # NCHW like PyTorch
    params = init_params(kp, C)

    out = jax.block_until_ready(jax.jit(sfm_forward)(x, params))

    assert out.shape == (N, C, H, W), out.shape
    assert bool(jnp.all(jnp.isfinite(out)))
    print("KERNEL_OK")
</pallas_src>

<mosaic_0001>
module attributes {stable_mosaic.version = 11 : i64} {
  func.func @sfm_kernel(%arg0: i32, %arg1: memref<1x8x256xf32, #tpu.memory_space<vmem>>, %arg2: memref<8x12xf32, #tpu.memory_space<vmem>>, %arg3: memref<8x83xf32, #tpu.memory_space<vmem>>, %arg4: memref<8x64xbf16, #tpu.memory_space<vmem>>, %arg5: memref<2x49xf32, #tpu.memory_space<vmem>>, %arg6: memref<2x8xf32, #tpu.memory_space<vmem>>, %arg7: memref<7x256xf32, #tpu.memory_space<vmem>>, %arg8: memref<1x8x256xf32, #tpu.memory_space<vmem>>, %arg9: memref<8x512xf32, #tpu.memory_space<vmem>>, %arg10: memref<2x512xf32, #tpu.memory_space<vmem>>) attributes {dimension_semantics = [#tpu.dimension_semantics<parallel>], iteration_bounds = array<i64: 2>, scalar_prefetch = 0 : i64, scratch_operands = 2 : i64, tpu.core_type = #tpu.core_type<tc>, window_params = [{transform_indices = @transform_0, window_bounds = array<i64: 1, 8, 256>}, {pipeline_mode = #tpu.pipeline_mode<synchronous>, transform_indices = @transform_1, window_bounds = array<i64: 8, 12>}, {pipeline_mode = #tpu.pipeline_mode<synchronous>, transform_indices = @transform_2, window_bounds = array<i64: 8, 83>}, {pipeline_mode = #tpu.pipeline_mode<synchronous>, transform_indices = @transform_3, window_bounds = array<i64: 8, 64>}, {pipeline_mode = #tpu.pipeline_mode<synchronous>, transform_indices = @transform_4, window_bounds = array<i64: 2, 49>}, {pipeline_mode = #tpu.pipeline_mode<synchronous>, transform_indices = @transform_5, window_bounds = array<i64: 2, 8>}, {pipeline_mode = #tpu.pipeline_mode<synchronous>, transform_indices = @transform_6, window_bounds = array<i64: 7, 256>}, {transform_indices = @transform_7, window_bounds = array<i64: 1, 8, 256>}]} {
    %cst = arith.constant 0.000000e+00 : f32
    %0 = vector.broadcast %cst : f32 to vector<8x128xf32>
    %c0 = arith.constant 0 : index
    %c0_0 = arith.constant 0 : index
    %1 = vector.load %arg9[%c0, %c0_0] : memref<8x512xf32, #tpu.memory_space<vmem>>, vector<8x128xf32>
    tpu.vector_store %arg9[%c0, %c0_0], %0 {strides = array<i32>} : memref<8x512xf32, #tpu.memory_space<vmem>>, vector<8x128xf32>,
    %c0_1 = arith.constant 0 : index
    %c384 = arith.constant 384 : index
    %2 = vector.load %arg9[%c0_1, %c384] : memref<8x512xf32, #tpu.memory_space<vmem>>, vector<8x128xf32>
    tpu.vector_store %arg9[%c0_1, %c384], %0 {strides = array<i32>} : memref<8x512xf32, #tpu.memory_space<vmem>>, vector<8x128xf32>,
    %cst_2 = arith.constant 0.000000e+00 : f32
    %3 = vector.broadcast %cst_2 : f32 to vector<2x128xf32>
    %c0_3 = arith.constant 0 : index
    %c0_4 = arith.constant 0 : index
    %4 = vector.load %arg10[%c0_3, %c0_4] : memref<2x512xf32, #tpu.memory_space<vmem>>, vector<2x128xf32>
    tpu.vector_store %arg10[%c0_3, %c0_4], %3 {strides = array<i32>} : memref<2x512xf32, #tpu.memory_space<vmem>>, vector<2x128xf32>,
    %c0_5 = arith.constant 0 : index
    %c384_6 = arith.constant 384 : index
    %5 = vector.load %arg10[%c0_5, %c384_6] : memref<2x512xf32, #tpu.memory_space<vmem>>, vector<2x128xf32>
    tpu.vector_store %arg10[%c0_5, %c384_6], %3 {strides = array<i32>} : memref<2x512xf32, #tpu.memory_space<vmem>>, vector<2x128xf32>,
    %c0_7 = arith.constant 0 : index
    %c0_8 = arith.constant 0 : index
    %c0_9 = arith.constant 0 : index
    %6 = vector.load %arg1[%c0_7, %c0_8, %c0_9] : memref<1x8x256xf32, #tpu.memory_space<vmem>>, vector<1x8x256xf32>
    %7 = vector.shape_cast %6 : vector<1x8x256xf32> to vector<8x256xf32>
    %c0_10 = arith.constant 0 : index
    %c0_11 = arith.constant 0 : index
    %8 = vector.load %arg2[%c0_10, %c0_11] : memref<8x12xf32, #tpu.memory_space<vmem>>, vector<8x1xf32>
    %9 = vector.broadcast %8 : vector<8x1xf32> to vector<8x256xf32>
    %10 = arith.mulf %7, %9 : vector<8x256xf32>
    %c0_12 = arith.constant 0 : index
    %c1 = arith.constant 1 : index
    %11 = vector.load %arg2[%c0_12, %c1] : memref<8x12xf32, #tpu.memory_space<vmem>>, vector<8x1xf32>
    %12 = vector.broadcast %11 : vector<8x1xf32> to vector<8x256xf32>
    %13 = arith.addf %10, %12 : vector<8x256xf32>
    %c0_13 = arith.constant 0 : index
    %c128 = arith.constant 128 : index
    %14 = vector.load %arg9[%c0_13, %c128] : memref<8x512xf32, #tpu.memory_space<vmem>>, vector<8x256xf32>
    tpu.vector_store %arg9[%c0_13, %c128], %13 {strides = array<i32>} : memref<8x512xf32, #tpu.memory_space<vmem>>, vector<8x256xf32>,
    %c0_14 = arith.constant 0 : index
    %c77 = arith.constant 77 : index
    %15 = vector.load %arg9[%c0_14, %c77] : memref<8x512xf32, #tpu.memory_space<vmem>>, vector<8x262xf32>
    %c0_15 = arith.constant 0 : index
    %c93 = arith.constant 93 : index
    %16 = vector.load %arg9[%c0_15, %c93] : memref<8x512xf32, #tpu.memory_space<vmem>>, vector<8x262xf32>
    %c0_16 = arith.constant 0 : index
    %c109 = arith.constant 109 : index
    %17 = vector.load %arg9[%c0_16, %c109] : memref<8x512xf32, #tpu.memory_space<vmem>>, vector<8x262xf32>
    %c0_17 = arith.constant 0 : index
    %c125 = arith.constant 125 : index
    %18 = vector.load %arg9[%c0_17, %c125] : memref<8x512xf32, #tpu.memory_space<vmem>>, vector<8x262xf32>
    %c0_18 = arith.constant 0 : index
    %c141 = arith.constant 141 : index
    %19 = vector.load %arg9[%c0_18, %c141] : memref<8x512xf32, #tpu.memory_space<vmem>>, vector<8x262xf32>
    %c0_19 = arith.constant 0 : index
    %c157 = arith.constant 157 : index
    %20 = vector.load %arg9[%c0_19, %c157] : memref<8x512xf32, #tpu.memory_space<vmem>>, vector<8x262xf32>
    %c0_20 = arith.constant 0 : index
    %c173 = arith.constant 173 : index
    %21 = vector.load %arg9[%c0_20, %c173] : memref<8x512xf32, #tpu.memory_space<vmem>>, vector<8x262xf32>
    %cst_21 = arith.constant 0.000000e+00 : f32
    %22 = vector.broadcast %cst_21 : f32 to vector<8x256xf32>
    %cst_22 = arith.constant 0.000000e+00 : f32
    %23 = vector.broadcast %cst_22 : f32 to vector<8x256xf32>
    %cst_23 = arith.constant 0.000000e+00 : f32
    %24 = vector.broadcast %cst_23 : f32 to vector<8x256xf32>
    %cst_24 = arith.constant 0.000000e+00 : f32
    %25 = vector.broadcast %cst_24 : f32 to vector<8x256xf32>
    %26 = vector.extract_strided_slice %15 {offsets = [0, 0], sizes = [8, 256], strides = [1, 1]} : vector<8x262xf32> to vector<8x256xf32>
    %c0_25 = arith.constant 0 : index
    %c0_26 = arith.constant 0 : index
    %27 = vector.load %arg3[%c0_25, %c0_26] : memref<8x83xf32, #tpu.memory_space<vmem>>, vector<8x1xf32>
    %28 = vector.broadcast %27 : vector<8x1xf32> to vector<8x256xf32>
    %29 = arith.mulf %26, %28 : vector<8x256xf32>
    %30 = arith.addf %25, %29 : vector<8x256xf32>
    %31 = vector.extract_strided_slice %16 {offsets = [0, 0], sizes = [8, 256], strides = [1, 1]} : vector<8x262xf32> to vector<8x256xf32>
    %c0_27 = arith.constant 0 : index
    %c7 = arith.constant 7 : index
    %32 = vector.load %arg3[%c0_27, %c7] : memref<8x83xf32, #tpu.memory_space<vmem>>, vector<8x1xf32>
    %33 = vector.broadcast %32 : vector<8x1xf32> to vector<8x256xf32>
    %34 = arith.mulf %31, %33 : vector<8x256xf32>
    %35 = arith.addf %30, %34 : vector<8x256xf32>
    %36 = vector.extract_strided_slice %17 {offsets = [0, 0], sizes = [8, 256], strides = [1, 1]} : vector<8x262xf32> to vector<8x256xf32>
    %c0_28 = arith.constant 0 : index
    %c14 = arith.constant 14 : index
    %37 = vector.load %arg3[%c0_28, %c14] : memref<8x83xf32, #tpu.memory_space<vmem>>, vector<8x1xf32>
    %38 = vector.broadcast %37 : vector<8x1xf32> to vector<8x256xf32>
    %39 = arith.mulf %36, %38 : vector<8x256xf32>
    %40 = arith.addf %35, %39 : vector<8x256xf32>
    %41 = vector.extract_strided_slice %18 {offsets = [0, 0], sizes = [8, 256], strides = [1, 1]} : vector<8x262xf32> to vector<8x256xf32>
    %c0_29 = arith.constant 0 : index
    %c21 = arith.constant 21 : index
    %42 = vector.load %arg3[%c0_29, %c21] : memref<8x83xf32, #tpu.memory_space<vmem>>, vector<8x1xf32>
    %43 = vector.broadcast %42 : vector<8x1xf32> to vector<8x256xf32>
    %44 = arith.mulf %41, %43 : vector<8x256xf32>
    %45 = arith.addf %40, %44 : vector<8x256xf32>
    %46 = vector.extract_strided_slice %19 {offsets = [0, 0], sizes = [8, 256], strides = [1, 1]} : vector<8x262xf32> to vector<8x256xf32>
    %c0_30 = arith.constant 0 : index
    %c28 = arith.constant 28 : index
    %47 = vector.load %arg3[%c0_30, %c28] : memref<8x83xf32, #tpu.memory_space<vmem>>, vector<8x1xf32>
    %48 = vector.broadcast %47 : vector<8x1xf32> to vector<8x256xf32>
    %49 = arith.mulf %46, %48 : vector<8x256xf32>
    %50 = arith.addf %45, %49 : vector<8x256xf32>
    %51 = vector.extract_strided_slice %20 {offsets = [0, 0], sizes = [8, 256], strides = [1, 1]} : vector<8x262xf32> to vector<8x256xf32>
    %c0_31 = arith.constant 0 : index
    %c35 = arith.constant 35 : index
    %52 = vector.load %arg3[%c0_31, %c35] : memref<8x83xf32, #tpu.memory_space<vmem>>, vector<8x1xf32>
    %53 = vector.broadcast %52 : vector<8x1xf32> to vector<8x256xf32>
    %54 = arith.mulf %51, %53 : vector<8x256xf32>
    %55 = arith.addf %50, %54 : vector<8x256xf32>
    %56 = vector.extract_strided_slice %21 {offsets = [0, 0], sizes = [8, 256], strides = [1, 1]} : vector<8x262xf32> to vector<8x256xf32>
    %c0_32 = arith.constant 0 : index
    %c42 = arith.constant 42 : index
    %57 = vector.load %arg3[%c0_32, %c42] : memref<8x83xf32, #tpu.memory_space<vmem>>, vector<8x1xf32>
    %58 = vector.broadcast %57 : vector<8x1xf32> to vector<8x256xf32>
    %59 = arith.mulf %56, %58 : vector<8x256xf32>
    %60 = arith.addf %55, %59 : vector<8x256xf32>
    %c0_33 = arith.constant 0 : index
    %c0_34 = arith.constant 0 : index
    %61 = vector.load %arg7[%c0_33, %c0_34] : memref<7x256xf32, #tpu.memory_space<vmem>>, vector<1x256xf32>
    %62 = vector.broadcast %61 : vector<1x256xf32> to vector<8x256xf32>
    %63 = arith.mulf %60, %62 : vector<8x256xf32>
    %64 = arith.addf %22, %63 : vector<8x256xf32>
    %cst_35 = arith.constant 0.000000e+00 : f32
    %65 = vector.broadcast %cst_35 : f32 to vector<8x256xf32>
    %cst_36 = arith.constant 0.000000e+00 : f32
    %66 = vector.broadcast %cst_36 : f32 to vector<8x256xf32>
    %67 = vector.extract_strided_slice %15 {offsets = [0, 1], sizes = [8, 256], strides = [1, 1]} : vector<8x262xf32> to vector<8x256xf32>
    %c0_37 = arith.constant 0 : index
    %c1_38 = arith.constant 1 : index
    %68 = vector.load %arg3[%c0_37, %c1_38] : memref<8x83xf32, #tpu.memory_space<vmem>>, vector<8x1xf32>
    %69 = vector.broadcast %68 : vector<8x1xf32> to vector<8x256xf32>
    %70 = arith.mulf %67, %69 : vector<8x256xf32>
    %71 = arith.addf %65, %70 : vector<8x256xf32>
    %72 = vector.extract_strided_slice %16 {offsets = [0, 1], sizes = [8, 256], strides = [1, 1]} : vector<8x262xf32> to vector<8x256xf32>
    %c0_39 = arith.constant 0 : index
    %c8 = arith.constant 8 : index
    %73 = vector.load %arg3[%c0_39, %c8] : memref<8x83xf32, #tpu.memory_space<vmem>>, vector<8x1xf32>
    %74 = vector.broadcast %73 : vector<8x1xf32> to vector<8x256xf32>
    %75 = arith.mulf %72, %74 : vector<8x256xf32>
    %76 = arith.addf %71, %75 : vector<8x256xf32>
    %c0_40 = arith.constant 0 : index
    %c49 = arith.constant 49 : index
    %77 = vector.load %arg3[%c0_40, %c49] : memref<8x83xf32, #tpu.memory_space<vmem>>, vector<8x1xf32>
    %78 = vector.broadcast %77 : vector<8x1xf32> to vector<8x256xf32>
    %79 = arith.mulf %72, %78 : vector<8x256xf32>
    %80 = arith.addf %66, %79 : vector<8x256xf32>
    %81 = vector.extract_strided_slice %17 {offsets = [0, 1], sizes = [8, 256], strides = [1, 1]} : vector<8x262xf32> to vector<8x256xf32>
    %c0_41 = arith.constant 0 : index
    %c15 = arith.constant 15 : index
    %82 = vector.load %arg3[%c0_41, %c15] : memref<8x83xf32, #tpu.memory_space<vmem>>, vector<8x1xf32>
    %83 = vector.broadcast %82 : vector<8x1xf32> to vector<8x256xf32>
    %84 = arith.mulf %81, %83 : vector<8x256xf32>
    %85 = arith.addf %76, %84 : vector<8x256xf32>
    %c0_42 = arith.constant 0 : index
    %c54 = arith.constant 54 : index
    %86 = vector.load %arg3[%c0_42, %c54] : memref<8x83xf32, #tpu.memory_space<vmem>>, vector<8x1xf32>
    %87 = vector.broadcast %86 : vector<8x1xf32> to vector<8x256xf32>
    %88 = arith.mulf %81, %87 : vector<8x256xf32>
    %89 = arith.addf %80, %88 : vector<8x256xf32>
    %90 = vector.extract_strided_slice %18 {offsets = [0, 1], sizes = [8, 256], strides = [1, 1]} : vector<8x262xf32> to vector<8x256xf32>
    %c0_43 = arith.constant 0 : index
    %c22 = arith.constant 22 : index
    %91 = vector.load %arg3[%c0_43, %c22] : memref<8x83xf32, #tpu.memory_space<vmem>>, vector<8x1xf32>
    %92 = vector.broadcast %91 : vector<8x1xf32> to vector<8x256xf32>
    %93 = arith.mulf %90, %92 : vector<8x256xf32>
    %94 = arith.addf %85, %93 : vector<8x256xf32>
    %c0_44 = arith.constant 0 : index
    %c59 = arith.constant 59 : index
    %95 = vector.load %arg3[%c0_44, %c59] : memref<8x83xf32, #tpu.memory_space<vmem>>, vector<8x1xf32>
    %96 = vector.broadcast %95 : vector<8x1xf32> to vector<8x256xf32>
    %97 = arith.mulf %90, %96 : vector<8x256xf32>
    %98 = arith.addf %89, %97 : vector<8x256xf32>
    %99 = vector.extract_strided_slice %19 {offsets = [0, 1], sizes = [8, 256], strides = [1, 1]} : vector<8x262xf32> to vector<8x256xf32>
    %c0_45 = arith.constant 0 : index
    %c29 = arith.constant 29 : index
    %100 = vector.load %arg3[%c0_45, %c29] : memref<8x83xf32, #tpu.memory_space<vmem>>, vector<8x1xf32>
    %101 = vector.broadcast %100 : vector<8x1xf32> to vector<8x256xf32>
    %102 = arith.mulf %99, %101 : vector<8x256xf32>
    %103 = arith.addf %94, %102 : vector<8x256xf32>
    %c0_46 = arith.constant 0 : index
    %c64 = arith.constant 64 : index
    %104 = vector.load %arg3[%c0_46, %c64] : memref<8x83xf32, #tpu.memory_space<vmem>>, vector<8x1xf32>
    %105 = vector.broadcast %104 : vector<8x1xf32> to vector<8x256xf32>
    %106 = arith.mulf %99, %105 : vector<8x256xf32>
    %107 = arith.addf %98, %106 : vector<8x256xf32>
    %108 = vector.extract_strided_slice %20 {offsets = [0, 1], sizes = [8, 256], strides = [1, 1]} : vector<8x262xf32> to vector<8x256xf32>
    %c0_47 = arith.constant 0 : index
    %c36 = arith.constant 36 : index
    %109 = vector.load %arg3[%c0_47, %c36] : memref<8x83xf32, #tpu.memory_space<vmem>>, vector<8x1xf32>
    %110 = vector.broadcast %109 : vector<8x1xf32> to vector<8x256xf32>
    %111 = arith.mulf %108, %110 : vector<8x256xf32>
    %112 = arith.addf %103, %111 : vector<8x256xf32>
    %c0_48 = arith.constant 0 : index
    %c69 = arith.constant 69 : index
    %113 = vector.load %arg3[%c0_48, %c69] : memref<8x83xf32, #tpu.memory_space<vmem>>, vector<8x1xf32>
    %114 = vector.broadcast %113 : vector<8x1xf32> to vector<8x256xf32>
    %115 = arith.mulf %108, %114 : vector<8x256xf32>
    %116 = arith.addf %107, %115 : vector<8x256xf32>
    %117 = vector.extract_strided_slice %21 {offsets = [0, 1], sizes = [8, 256], strides = [1, 1]} : vector<8x262xf32> to vector<8x256xf32>
    %c0_49 = arith.constant 0 : index
    %c43 = arith.constant 43 : index
    %118 = vector.load %arg3[%c0_49, %c43] : memref<8x83xf32, #tpu.memory_space<vmem>>, vector<8x1xf32>
    %119 = vector.broadcast %118 : vector<8x1xf32> to vector<8x256xf32>
    %120 = arith.mulf %117, %119 : vector<8x256xf32>
    %121 = arith.addf %112, %120 : vector<8x256xf32>
    %c1_50 = arith.constant 1 : index
    %c0_51 = arith.constant 0 : index
    %122 = vector.load %arg7[%c1_50, %c0_51] : memref<7x256xf32, #tpu.memory_space<vmem>>, vector<1x256xf32>
    %123 = vector.broadcast %122 : vector<1x256xf32> to vector<8x256xf32>
    %124 = arith.mulf %121, %123 : vector<8x256xf32>
    %125 = arith.addf %64, %124 : vector<8x256xf32>
    %126 = vector.broadcast %122 : vector<1x256xf32> to vector<8x256xf32>
    %127 = arith.mulf %116, %126 : vector<8x256xf32>
    %128 = arith.addf %23, %127 : vector<8x256xf32>
    %cst_52 = arith.constant 0.000000e+00 : f32
    %129 = vector.broadcast %cst_52 : f32 to vector<8x256xf32>
    %cst_53 = arith.constant 0.000000e+00 : f32
    %130 = vector.broadcast %cst_53 : f32 to vector<8x256xf32>
    %cst_54 = arith.constant 0.000000e+00 : f32
    %131 = vector.broadcast %cst_54 : f32 to vector<8x256xf32>
    %132 = vector.extract_strided_slice %15 {offsets = [0, 2], sizes = [8, 256], strides = [1, 1]} : vector<8x262xf32> to vector<8x256xf32>
    %c0_55 = arith.constant 0 : index
    %c2 = arith.constant 2 : index
    %133 = vector.load %arg3[%c0_55, %c2] : memref<8x83xf32, #tpu.memory_space<vmem>>, vector<8x1xf32>
    %134 = vector.broadcast %133 : vector<8x1xf32> to vector<8x256xf32>
    %135 = arith.mulf %132, %134 : vector<8x256xf32>
    %136 = arith.addf %129, %135 : vector<8x256xf32>
    %137 = vector.extract_strided_slice %16 {offsets = [0, 2], sizes = [8, 256], strides = [1, 1]} : vector<8x262xf32> to vector<8x256xf32>
    %c0_56 = arith.constant 0 : index
    %c9 = arith.constant 9 : index
    %138 = vector.load %arg3[%c0_56, %c9] : memref<8x83xf32, #tpu.memory_space<vmem>>, vector<8x1xf32>
    %139 = vector.broadcast %138 : vector<8x1xf32> to vector<8x256xf32>
    %140 = arith.mulf %137, %139 : vector<8x256xf32>
    %141 = arith.addf %136, %140 : vector<8x256xf32>
    %c0_57 = arith.constant 0 : index
    %c50 = arith.constant 50 : index
    %142 = vector.load %arg3[%c0_57, %c50] : memref<8x83xf32, #tpu.memory_space<vmem>>, vector<8x1xf32>
    %143 = vector.broadcast %142 : vector<8x1xf32> to vector<8x256xf32>
    %144 = arith.mulf %137, %143 : vector<8x256xf32>
    %145 = arith.addf %130, %144 : vector<8x256xf32>
    %146 = vector.extract_strided_slice %17 {offsets = [0, 2], sizes = [8, 256], strides = [1, 1]} : vector<8x262xf32> to vector<8x256xf32>
    %c0_58 = arith.constant 0 : index
    %c16 = arith.constant 16 : index
    %147 = vector.load %arg3[%c0_58, %c16] : memref<8x83xf32, #tpu.memory_space<vmem>>, vector<8x1xf32>
    %148 = vector.broadcast %147 : vector<8x1xf32> to vector<8x256xf32>
    %149 = arith.mulf %146, %148 : vector<8x256xf32>
    %150 = arith.addf %141, %149 : vector<8x256xf32>
    %c0_59 = arith.constant 0 : index
    %c55 = arith.constant 55 : index
    %151 = vector.load %arg3[%c0_59, %c55] : memref<8x83xf32, #tpu.memory_space<vmem>>, vector<8x1xf32>
    %152 = vector.broadcast %151 : vector<8x1xf32> to vector<8x256xf32>
    %153 = arith.mulf %146, %152 : vector<8x256xf32>
    %154 = arith.addf %145, %153 : vector<8x256xf32>
    %c0_60 = arith.constant 0 : index
    %c74 = arith.constant 74 : index
    %155 = vector.load %arg3[%c0_60, %c74] : memref<8x83xf32, #tpu.memory_space<vmem>>, vector<8x1xf32>
    %156 = vector.broadcast %155 : vector<8x1xf32> to vector<8x256xf32>
    %157 = arith.mulf %146, %156 : vector<8x256xf32>
    %158 = arith.addf %131, %157 : vector<8x256xf32>
    %159 = vector.extract_strided_slice %18 {offsets = [0, 2], sizes = [8, 256], strides = [1, 1]} : vector<8x262xf32> to vector<8x256xf32>
    %c0_61 = arith.constant 0 : index
    %c23 = arith.constant 23 : index
    %160 = vector.load %arg3[%c0_61, %c23] : memref<8x83xf32, #tpu.memory_space<vmem>>, vector<8x1xf32>
    %161 = vector.broadcast %160 : vector<8x1xf32> to vector<8x256xf32>
    %162 = arith.mulf %159, %161 : vector<8x256xf32>
    %163 = arith.addf %150, %162 : vector<8x256xf32>
    %c0_62 = arith.constant 0 : index
    %c60 = arith.constant 60 : index
    %164 = vector.load %arg3[%c0_62, %c60] : memref<8x83xf32, #tpu.memory_space<vmem>>, vector<8x1xf32>
    %165 = vector.broadcast %164 : vector<8x1xf32> to vector<8x256xf32>
    %166 = arith.mulf %159, %165 : vector<8x256xf32>
    %167 = arith.addf %154, %166 : vector<8x256xf32>
    %c0_63 = arith.constant 0 : index
    %c77_64 = arith.constant 77 : index
    %168 = vector.load %arg3[%c0_63, %c77_64] : memref<8x83xf32, #tpu.memory_space<vmem>>, vector<8x1xf32>
    %169 = vector.broadcast %168 : vector<8x1xf32> to vector<8x256xf32>
    %170 = arith.mulf %159, %169 : vector<8x256xf32>
    %171 = arith.addf %158, %170 : vector<8x256xf32>
    %172 = vector.extract_strided_slice %19 {offsets = [0, 2], sizes = [8, 256], strides = [1, 1]} : vector<8x262xf32> to vector<8x256xf32>
    %c0_65 = arith.constant 0 : index
    %c30 = arith.constant 30 : index
    %173 = vector.load %arg3[%c0_65, %c30] : memref<8x83xf32, #tpu.memory_space<vmem>>, vector<8x1xf32>
    %174 = vector.broadcast %173 : vector<8x1xf32> to vector<8x256xf32>
    %175 = arith.mulf %172, %174 : vector<8x256xf32>
    %176 = arith.addf %163, %175 : vector<8x256xf32>
    %c0_66 = arith.constant 0 : index
    %c65 = arith.constant 65 : index
    %177 = vector.load %arg3[%c0_66, %c65] : memref<8x83xf32, #tpu.memory_space<vmem>>, vector<8x1xf32>
    %178 = vector.broadcast %177 : vector<8x1xf32> to vector<8x256xf32>
    %179 = arith.mulf %172, %178 : vector<8x256xf32>
    %180 = arith.addf %167, %179 : vector<8x256xf32>
    %c0_67 = arith.constant 0 : index
    %c80 = arith.constant 80 : index
    %181 = vector.load %arg3[%c0_67, %c80] : memref<8x83xf32, #tpu.memory_space<vmem>>, vector<8x1xf32>
    %182 = vector.broadcast %181 : vector<8x1xf32> to vector<8x256xf32>
    %183 = arith.mulf %172, %182 : vector<8x256xf32>
    %184 = arith.addf %171, %183 : vector<8x256xf32>
    %185 = vector.extract_strided_slice %20 {offsets = [0, 2], sizes = [8, 256], strides = [1, 1]} : vector<8x262xf32> to vector<8x256xf32>
    %c0_68 = arith.constant 0 : index
    %c37 = arith.constant 37 : index
    %186 = vector.load %arg3[%c0_68, %c37] : memref<8x83xf32, #tpu.memory_space<vmem>>, vector<8x1xf32>
    %187 = vector.broadcast %186 : vector<8x1xf32> to vector<8x256xf32>
    %188 = arith.mulf %185, %187 : vector<8x256xf32>
    %189 = arith.addf %176, %188 : vector<8x256xf32>
    %c0_69 = arith.constant 0 : index
    %c70 = arith.constant 70 : index
    %190 = vector.load %arg3[%c0_69, %c70] : memref<8x83xf32, #tpu.memory_space<vmem>>, vector<8x1xf32>
    %191 = vector.broadcast %190 : vector<8x1xf32> to vector<8x256xf32>
    %192 = arith.mulf %185, %191 : vector<8x256xf32>
    %193 = arith.addf %180, %192 : vector<8x256xf32>
    %194 = vector.extract_strided_slice %21 {offsets = [0, 2], sizes = [8, 256], strides = [1, 1]} : vector<8x262xf32> to vector<8x256xf32>
    %c0_70 = arith.constant 0 : index
    %c44 = arith.constant 44 : index
    %195 = vector.load %arg3[%c0_70, %c44] : memref<8x83xf32, #tpu.memory_space<vmem>>, vector<8x1xf32>
    %196 = vector.broadcast %195 : vector<8x1xf32> to vector<8x256xf32>
    %197 = arith.mulf %194, %196 : vector<8x256xf32>
    %198 = arith.addf %189, %197 : vector<8x256xf32>
    %c2_71 = arith.constant 2 : index
    %c0_72 = arith.constant 0 : index
    %199 = vector.load %arg7[%c2_71, %c0_72] : memref<7x256xf32, #tpu.memory_space<vmem>>, vector<1x256xf32>
    %200 = vector.broadcast %199 : vector<1x256xf32> to vector<8x256xf32>
    %201 = arith.mulf %198, %200 : vector<8x256xf32>
    %202 = arith.addf %125, %201 : vector<8x256xf32>
    %203 = vector.broadcast %199 : vector<1x256xf32> to vector<8x256xf32>
    %204 = arith.mulf %193, %203 : vector<8x256xf32>
    %205 = arith.addf %128, %204 : vector<8x256xf32>
    %206 = vector.broadcast %199 : vector<1x256xf32> to vector<8x256xf32>
    %207 = arith.mulf %184, %206 : vector<8x256xf32>
    %208 = arith.addf %24, %207 : vector<8x256xf32>
    %cst_73 = arith.constant 0.000000e+00 : f32
    %209 = vector.broadcast %cst_73 : f32 to vector<8x256xf32>
    %cst_74 = arith.constant 0.000000e+00 : f32
    %210 = vector.broadcast %cst_74 : f32 to vector<8x256xf32>
    %cst_75 = arith.constant 0.000000e+00 : f32
    %211 = vector.broadcast %cst_75 : f32 to vector<8x256xf32>
    %212 = vector.extract_strided_slice %15 {offsets = [0, 3], sizes = [8, 256], strides = [1, 1]} : vector<8x262xf32> to vector<8x256xf32>
    %c0_76 = arith.constant 0 : index
    %c3 = arith.constant 3 : index
    %213 = vector.load %arg3[%c0_76, %c3] : memref<8x83xf32, #tpu.memory_space<vmem>>, vector<8x1xf32>
    %214 = vector.broadcast %213 : vector<8x1xf32> to vector<8x256xf32>
    %215 = arith.mulf %212, %214 : vector<8x256xf32>
    %216 = arith.addf %209, %215 : vector<8x256xf32>
    %217 = vector.extract_strided_slice %16 {offsets = [0, 3], sizes = [8, 256], strides = [1, 1]} : vector<8x262xf32> to vector<8x256xf32>
    %c0_77 = arith.constant 0 : index
    %c10 = arith.constant 10 : index
    %218 = vector.load %arg3[%c0_77, %c10] : memref<8x83xf32, #tpu.memory_space<vmem>>, vector<8x1xf32>
    %219 = vector.broadcast %218 : vector<8x1xf32> to vector<8x256xf32>
    %220 = arith.mulf %217, %219 : vector<8x256xf32>
    %221 = arith.addf %216, %220 : vector<8x256xf32>
    %c0_78 = arith.constant 0 : index
    %c51 = arith.constant 51 : index
    %222 = vector.load %arg3[%c0_78, %c51] : memref<8x83xf32, #tpu.memory_space<vmem>>, vector<8x1xf32>
    %223 = vector.broadcast %222 : vector<8x1xf32> to vector<8x256xf32>
    %224 = arith.mulf %217, %223 : vector<8x256xf32>
    %225 = arith.addf %210, %224 : vector<8x256xf32>
    %226 = vector.extract_strided_slice %17 {offsets = [0, 3], sizes = [8, 256], strides = [1, 1]} : vector<8x262xf32> to vector<8x256xf32>
    %c0_79 = arith.constant 0 : index
    %c17 = arith.constant 17 : index
    %227 = vector.load %arg3[%c0_79, %c17] : memref<8x83xf32, #tpu.memory_space<vmem>>, vector<8x1xf32>
    %228 = vector.broadcast %227 : vector<8x1xf32> to vector<8x256xf32>
    %229 = arith.mulf %226, %228 : vector<8x256xf32>
    %230 = arith.addf %221, %229 : vector<8x256xf32>
    %c0_80 = arith.constant 0 : index
    %c56 = arith.constant 56 : index
    %231 = vector.load %arg3[%c0_80, %c56] : memref<8x83xf32, #tpu.memory_space<vmem>>, vector<8x1xf32>
    %232 = vector.broadcast %231 : vector<8x1xf32> to vector<8x256xf32>
    %233 = arith.mulf %226, %232 : vector<8x256xf32>
    %234 = arith.addf %225, %233 : vector<8x256xf32>
    %c0_81 = arith.constant 0 : index
    %c75 = arith.constant 75 : index
    %235 = vector.load %arg3[%c0_81, %c75] : memref<8x83xf32, #tpu.memory_space<vmem>>, vector<8x1xf32>
    %236 = vector.broadcast %235 : vector<8x1xf32> to vector<8x256xf32>
    %237 = arith.mulf %226, %236 : vector<8x256xf32>
    %238 = arith.addf %211, %237 : vector<8x256xf32>
    %239 = vector.extract_strided_slice %18 {offsets = [0, 3], sizes = [8, 256], strides = [1, 1]} : vector<8x262xf32> to vector<8x256xf32>
    %c0_82 = arith.constant 0 : index
    %c24 = arith.constant 24 : index
    %240 = vector.load %arg3[%c0_82, %c24] : memref<8x83xf32, #tpu.memory_space<vmem>>, vector<8x1xf32>
    %241 = vector.broadcast %240 : vector<8x1xf32> to vector<8x256xf32>
    %242 = arith.mulf %239, %241 : vector<8x256xf32>
    %243 = arith.addf %230, %242 : vector<8x256xf32>
    %c0_83 = arith.constant 0 : index
    %c61 = arith.constant 61 : index
    %244 = vector.load %arg3[%c0_83, %c61] : memref<8x83xf32, #tpu.memory_space<vmem>>, vector<8x1xf32>
    %245 = vector.broadcast %244 : vector<8x1xf32> to vector<8x256xf32>
    %246 = arith.mulf %239, %245 : vector<8x256xf32>
    %247 = arith.addf %234, %246 : vector<8x256xf32>
    %c0_84 = arith.constant 0 : index
    %c78 = arith.constant 78 : index
    %248 = vector.load %arg3[%c0_84, %c78] : memref<8x83xf32, #tpu.memory_space<vmem>>, vector<8x1xf32>
    %249 = vector.broadcast %248 : vector<8x1xf32> to vector<8x256xf32>
    %250 = arith.mulf %239, %249 : vector<8x256xf32>
    %251 = arith.addf %238, %250 : vector<8x256xf32>
    %252 = vector.extract_strided_slice %19 {offsets = [0, 3], sizes = [8, 256], strides = [1, 1]} : vector<8x262xf32> to vector<8x256xf32>
    %c0_85 = arith.constant 0 : index
    %c31 = arith.constant 31 : index
    %253 = vector.load %arg3[%c0_85, %c31] : memref<8x83xf32, #tpu.memory_space<vmem>>, vector<8x1xf32>
    %254 = vector.broadcast %253 : vector<8x1xf32> to vector<8x256xf32>
    %255 = arith.mulf %252, %254 : vector<8x256xf32>
    %256 = arith.addf %243, %255 : vector<8x256xf32>
    %c0_86 = arith.constant 0 : index
    %c66 = arith.constant 66 : index
    %257 = vector.load %arg3[%c0_86, %c66] : memref<8x83xf32, #tpu.memory_space<vmem>>, vector<8x1xf32>
    %258 = vector.broadcast %257 : vector<8x1xf32> to vector<8x256xf32>
    %259 = arith.mulf %252, %258 : vector<8x256xf32>
    %260 = arith.addf %247, %259 : vector<8x256xf32>
    %c0_87 = arith.constant 0 : index
    %c81 = arith.constant 81 : index
    %261 = vector.load %arg3[%c0_87, %c81] : memref<8x83xf32, #tpu.memory_space<vmem>>, vector<8x1xf32>
    %262 = vector.broadcast %261 : vector<8x1xf32> to vector<8x256xf32>
    %263 = arith.mulf %252, %262 : vector<8x256xf32>
    %264 = arith.addf %251, %263 : vector<8x256xf32>
    %265 = vector.extract_strided_slice %20 {offsets = [0, 3], sizes = [8, 256], strides = [1, 1]} : vector<8x262xf32> to vector<8x256xf32>
    %c0_88 = arith.constant 0 : index
    %c38 = arith.constant 38 : index
    %266 = vector.load %arg3[%c0_88, %c38] : memref<8x83xf32, #tpu.memory_space<vmem>>, vector<8x1xf32>
    %267 = vector.broadcast %266 : vector<8x1xf32> to vector<8x256xf32>
    %268 = arith.mulf %265, %267 : vector<8x256xf32>
    %269 = arith.addf %256, %268 : vector<8x256xf32>
    %c0_89 = arith.constant 0 : index
    %c71 = arith.constant 71 : index
    %270 = vector.load %arg3[%c0_89, %c71] : memref<8x83xf32, #tpu.memory_space<vmem>>, vector<8x1xf32>
    %271 = vector.broadcast %270 : vector<8x1xf32> to vector<8x256xf32>
    %272 = arith.mulf %265, %271 : vector<8x256xf32>
    %273 = arith.addf %260, %272 : vector<8x256xf32>
    %274 = vector.extract_strided_slice %21 {offsets = [0, 3], sizes = [8, 256], strides = [1, 1]} : vector<8x262xf32> to vector<8x256xf32>
    %c0_90 = arith.constant 0 : index
    %c45 = arith.constant 45 : index
    %275 = vector.load %arg3[%c0_90, %c45] : memref<8x83xf32, #tpu.memory_space<vmem>>, vector<8x1xf32>
    %276 = vector.broadcast %275 : vector<8x1xf32> to vector<8x256xf32>
    %277 = arith.mulf %274, %276 : vector<8x256xf32>
    %278 = arith.addf %269, %277 : vector<8x256xf32>
    %c3_91 = arith.constant 3 : index
    %c0_92 = arith.constant 0 : index
    %279 = vector.load %arg7[%c3_91, %c0_92] : memref<7x256xf32, #tpu.memory_space<vmem>>, vector<1x256xf32>
    %280 = vector.broadcast %279 : vector<1x256xf32> to vector<8x256xf32>
    %281 = arith.mulf %278, %280 : vector<8x256xf32>
    %282 = arith.addf %202, %281 : vector<8x256xf32>
    %283 = vector.broadcast %279 : vector<1x256xf32> to vector<8x256xf32>
    %284 = arith.mulf %273, %283 : vector<8x256xf32>
    %285 = arith.addf %205, %284 : vector<8x256xf32>
    %286 = vector.broadcast %279 : vector<1x256xf32> to vector<8x256xf32>
    %287 = arith.mulf %264, %286 : vector<8x256xf32>
    %288 = arith.addf %208, %287 : vector<8x256xf32>
    %cst_93 = arith.constant 0.000000e+00 : f32
    %289 = vector.broadcast %cst_93 : f32 to vector<8x256xf32>
    %cst_94 = arith.constant 0.000000e+00 : f32
    %290 = vector.broadcast %cst_94 : f32 to vector<8x256xf32>
    %cst_95 = arith.constant 0.000000e+00 : f32
    %291 = vector.broadcast %cst_95 : f32 to vector<8x256xf32>
    %292 = vector.extract_strided_slice %15 {offsets = [0, 4], sizes = [8, 256], strides = [1, 1]} : vector<8x262xf32> to vector<8x256xf32>
    %c0_96 = arith.constant 0 : index
    %c4 = arith.constant 4 : index
    %293 = vector.load %arg3[%c0_96, %c4] : memref<8x83xf32, #tpu.memory_space<vmem>>, vector<8x1xf32>
    %294 = vector.broadcast %293 : vector<8x1xf32> to vector<8x256xf32>
    %295 = arith.mulf %292, %294 : vector<8x256xf32>
    %296 = arith.addf %289, %295 : vector<8x256xf32>
    %297 = vector.extract_strided_slice %16 {offsets = [0, 4], sizes = [8, 256], strides = [1, 1]} : vector<8x262xf32> to vector<8x256xf32>
    %c0_97 = arith.constant 0 : index
    %c11 = arith.constant 11 : index
    %298 = vector.load %arg3[%c0_97, %c11] : memref<8x83xf32, #tpu.memory_space<vmem>>, vector<8x1xf32>
    %299 = vector.broadcast %298 : vector<8x1xf32> to vector<8x256xf32>
    %300 = arith.mulf %297, %299 : vector<8x256xf32>
    %301 = arith.addf %296, %300 : vector<8x256xf32>
    %c0_98 = arith.constant 0 : index
    %c52 = arith.constant 52 : index
    %302 = vector.load %arg3[%c0_98, %c52] : memref<8x83xf32, #tpu.memory_space<vmem>>, vector<8x1xf32>
    %303 = vector.broadcast %302 : vector<8x1xf32> to vector<8x256xf32>
    %304 = arith.mulf %297, %303 : vector<8x256xf32>
    %305 = arith.addf %290, %304 : vector<8x256xf32>
    %306 = vector.extract_strided_slice %17 {offsets = [0, 4], sizes = [8, 256], strides = [1, 1]} : vector<8x262xf32> to vector<8x256xf32>
    %c0_99 = arith.constant 0 : index
    %c18 = arith.constant 18 : index
    %307 = vector.load %arg3[%c0_99, %c18] : memref<8x83xf32, #tpu.memory_space<vmem>>, vector<8x1xf32>
    %308 = vector.broadcast %307 : vector<8x1xf32> to vector<8x256xf32>
    %309 = arith.mulf %306, %308 : vector<8x256xf32>
    %310 = arith.addf %301, %309 : vector<8x256xf32>
    %c0_100 = arith.constant 0 : index
    %c57 = arith.constant 57 : index
    %311 = vector.load %arg3[%c0_100, %c57] : memref<8x83xf32, #tpu.memory_space<vmem>>, vector<8x1xf32>
    %312 = vector.broadcast %311 : vector<8x1xf32> to vector<8x256xf32>
    %313 = arith.mulf %306, %312 : vector<8x256xf32>
    %314 = arith.addf %305, %313 : vector<8x256xf32>
    %c0_101 = arith.constant 0 : index
    %c76 = arith.constant 76 : index
    %315 = vector.load %arg3[%c0_101, %c76] : memref<8x83xf32, #tpu.memory_space<vmem>>, vector<8x1xf32>
    %316 = vector.broadcast %315 : vector<8x1xf32> to vector<8x256xf32>
    %317 = arith.mulf %306, %316 : vector<8x256xf32>
    %318 = arith.addf %291, %317 : vector<8x256xf32>
    %319 = vector.extract_strided_slice %18 {offsets = [0, 4], sizes = [8, 256], strides = [1, 1]} : vector<8x262xf32> to vector<8x256xf32>
    %c0_102 = arith.constant 0 : index
    %c25 = arith.constant 25 : index
    %320 = vector.load %arg3[%c0_102, %c25] : memref<8x83xf32, #tpu.memory_space<vmem>>, vector<8x1xf32>
    %321 = vector.broadcast %320 : vector<8x1xf32> to vector<8x256xf32>
    %322 = arith.mulf %319, %321 : vector<8x256xf32>
    %323 = arith.addf %310, %322 : vector<8x256xf32>
    %c0_103 = arith.constant 0 : index
    %c62 = arith.constant 62 : index
    %324 = vector.load %arg3[%c0_103, %c62] : memref<8x83xf32, #tpu.memory_space<vmem>>, vector<8x1xf32>
    %325 = vector.broadcast %324 : vector<8x1xf32> to vector<8x256xf32>
    %326 = arith.mulf %319, %325 : vector<8x256xf32>
    %327 = arith.addf %314, %326 : vector<8x256xf32>
    %c0_104 = arith.constant 0 : index
    %c79 = arith.constant 79 : index
    %328 = vector.load %arg3[%c0_104, %c79] : memref<8x83xf32, #tpu.memory_space<vmem>>, vector<8x1xf32>
    %329 = vector.broadcast %328 : vector<8x1xf32> to vector<8x256xf32>
    %330 = arith.mulf %319, %329 : vector<8x256xf32>
    %331 = arith.addf %318, %330 : vector<8x256xf32>
    %332 = vector.extract_strided_slice %19 {offsets = [0, 4], sizes = [8, 256], strides = [1, 1]} : vector<8x262xf32> to vector<8x256xf32>
    %c0_105 = arith.constant 0 : index
    %c32 = arith.constant 32 : index
    %333 = vector.load %arg3[%c0_105, %c32] : memref<8x83xf32, #tpu.memory_space<vmem>>, vector<8x1xf32>
    %334 = vector.broadcast %333 : vector<8x1xf32> to vector<8x256xf32>
    %335 = arith.mulf %332, %334 : vector<8x256xf32>
    %336 = arith.addf %323, %335 : vector<8x256xf32>
    %c0_106 = arith.constant 0 : index
    %c67 = arith.constant 67 : index
    %337 = vector.load %arg3[%c0_106, %c67] : memref<8x83xf32, #tpu.memory_space<vmem>>, vector<8x1xf32>
    %338 = vector.broadcast %337 : vector<8x1xf32> to vector<8x256xf32>
    %339 = arith.mulf %332, %338 : vector<8x256xf32>
    %340 = arith.addf %327, %339 : vector<8x256xf32>
    %c0_107 = arith.constant 0 : index
    %c82 = arith.constant 82 : index
    %341 = vector.load %arg3[%c0_107, %c82] : memref<8x83xf32, #tpu.memory_space<vmem>>, vector<8x1xf32>
    %342 = vector.broadcast %341 : vector<8x1xf32> to vector<8x256xf32>
    %343 = arith.mulf %332, %342 : vector<8x256xf32>
    %344 = arith.addf %331, %343 : vector<8x256xf32>
    %345 = vector.extract_strided_slice %20 {offsets = [0, 4], sizes = [8, 256], strides = [1, 1]} : vector<8x262xf32> to vector<8x256xf32>
    %c0_108 = arith.constant 0 : index
    %c39 = arith.constant 39 : index
    %346 = vector.load %arg3[%c0_108, %c39] : memref<8x83xf32, #tpu.memory_space<vmem>>, vector<8x1xf32>
    %347 = vector.broadcast %346 : vector<8x1xf32> to vector<8x256xf32>
    %348 = arith.mulf %345, %347 : vector<8x256xf32>
    %349 = arith.addf %336, %348 : vector<8x256xf32>
    %c0_109 = arith.constant 0 : index
    %c72 = arith.constant 72 : index
    %350 = vector.load %arg3[%c0_109, %c72] : memref<8x83xf32, #tpu.memory_space<vmem>>, vector<8x1xf32>
    %351 = vector.broadcast %350 : vector<8x1xf32> to vector<8x256xf32>
    %352 = arith.mulf %345, %351 : vector<8x256xf32>
    %353 = arith.addf %340, %352 : vector<8x256xf32>
    %354 = vector.extract_strided_slice %21 {offsets = [0, 4], sizes = [8, 256], strides = [1, 1]} : vector<8x262xf32> to vector<8x256xf32>
    %c0_110 = arith.constant 0 : index
    %c46 = arith.constant 46 : index
    %355 = vector.load %arg3[%c0_110, %c46] : memref<8x83xf32, #tpu.memory_space<vmem>>, vector<8x1xf32>
    %356 = vector.broadcast %355 : vector<8x1xf32> to vector<8x256xf32>
    %357 = arith.mulf %354, %356 : vector<8x256xf32>
    %358 = arith.addf %349, %357 : vector<8x256xf32>
    %c4_111 = arith.constant 4 : index
    %c0_112 = arith.constant 0 : index
    %359 = vector.load %arg7[%c4_111, %c0_112] : memref<7x256xf32, #tpu.memory_space<vmem>>, vector<1x256xf32>
    %360 = vector.broadcast %359 : vector<1x256xf32> to vector<8x256xf32>
    %361 = arith.mulf %358, %360 : vector<8x256xf32>
    %362 = arith.addf %282, %361 : vector<8x256xf32>
    %363 = vector.broadcast %359 : vector<1x256xf32> to vector<8x256xf32>
    %364 = arith.mulf %353, %363 : vector<8x256xf32>
    %365 = arith.addf %285, %364 : vector<8x256xf32>
    %366 = vector.broadcast %359 : vector<1x256xf32> to vector<8x256xf32>
    %367 = arith.mulf %344, %366 : vector<8x256xf32>
    %368 = arith.addf %288, %367 : vector<8x256xf32>
    %cst_113 = arith.constant 0.000000e+00 : f32
    %369 = vector.broadcast %cst_113 : f32 to vector<8x256xf32>
    %cst_114 = arith.constant 0.000000e+00 : f32
    %370 = vector.broadcast %cst_114 : f32 to vector<8x256xf32>
    %371 = vector.extract_strided_slice %15 {offsets = [0, 5], sizes = [8, 256], strides = [1, 1]} : vector<8x262xf32> to vector<8x256xf32>
    %c0_115 = arith.constant 0 : index
    %c5 = arith.constant 5 : index
    %372 = vector.load %arg3[%c0_115, %c5] : memref<8x83xf32, #tpu.memory_space<vmem>>, vector<8x1xf32>
    %373 = vector.broadcast %372 : vector<8x1xf32> to vector<8x256xf32>
    %374 = arith.mulf %371, %373 : vector<8x256xf32>
    %375 = arith.addf %369, %374 : vector<8x256xf32>
    %376 = vector.extract_strided_slice %16 {offsets = [0, 5], sizes = [8, 256], strides = [1, 1]} : vector<8x262xf32> to vector<8x256xf32>
    %c0_116 = arith.constant 0 : index
    %c12 = arith.constant 12 : index
    %377 = vector.load %arg3[%c0_116, %c12] : memref<8x83xf32, #tpu.memory_space<vmem>>, vector<8x1xf32>
    %378 = vector.broadcast %377 : vector<8x1xf32> to vector<8x256xf32>
    %379 = arith.mulf %376, %378 : vector<8x256xf32>
    %380 = arith.addf %375, %379 : vector<8x256xf32>
    %c0_117 = arith.constant 0 : index
    %c53 = arith.constant 53 : index
    %381 = vector.load %arg3[%c0_117, %c53] : memref<8x83xf32, #tpu.memory_space<vmem>>, vector<8x1xf32>
    %382 = vector.broadcast %381 : vector<8x1xf32> to vector<8x256xf32>
    %383 = arith.mulf %376, %382 : vector<8x256xf32>
    %384 = arith.addf %370, %383 : vector<8x256xf32>
    %385 = vector.extract_strided_slice %17 {offsets = [0, 5], sizes = [8, 256], strides = [1, 1]} : vector<8x262xf32> to vector<8x256xf32>
    %c0_118 = arith.constant 0 : index
    %c19 = arith.constant 19 : index
    %386 = vector.load %arg3[%c0_118, %c19] : memref<8x83xf32, #tpu.memory_space<vmem>>, vector<8x1xf32>
    %387 = vector.broadcast %386 : vector<8x1xf32> to vector<8x256xf32>
    %388 = arith.mulf %385, %387 : vector<8x256xf32>
    %389 = arith.addf %380, %388 : vector<8x256xf32>
    %c0_119 = arith.constant 0 : index
    %c58 = arith.constant 58 : index
    %390 = vector.load %arg3[%c0_119, %c58] : memref<8x83xf32, #tpu.memory_space<vmem>>, vector<8x1xf32>
    %391 = vector.broadcast %390 : vector<8x1xf32> to vector<8x256xf32>
    %392 = arith.mulf %385, %391 : vector<8x256xf32>
    %393 = arith.addf %384, %392 : vector<8x256xf32>
    %394 = vector.extract_strided_slice %18 {offsets = [0, 5], sizes = [8, 256], strides = [1, 1]} : vector<8x262xf32> to vector<8x256xf32>
    %c0_120 = arith.constant 0 : index
    %c26 = arith.constant 26 : index
    %395 = vector.load %arg3[%c0_120, %c26] : memref<8x83xf32, #tpu.memory_space<vmem>>, vector<8x1xf32>
    %396 = vector.broadcast %395 : vector<8x1xf32> to vector<8x256xf32>
    %397 = arith.mulf %394, %396 : vector<8x256xf32>
    %398 = arith.addf %389, %397 : vector<8x256xf32>
    %c0_121 = arith.constant 0 : index
    %c63 = arith.constant 63 : index
    %399 = vector.load %arg3[%c0_121, %c63] : memref<8x83xf32, #tpu.memory_space<vmem>>, vector<8x1xf32>
    %400 = vector.broadcast %399 : vector<8x1xf32> to vector<8x256xf32>
    %401 = arith.mulf %394, %400 : vector<8x256xf32>
    %402 = arith.addf %393, %401 : vector<8x256xf32>
    %403 = vector.extract_strided_slice %19 {offsets = [0, 5], sizes = [8, 256], strides = [1, 1]} : vector<8x262xf32> to vector<8x256xf32>
    %c0_122 = arith.constant 0 : index
    %c33 = arith.constant 33 : index
    %404 = vector.load %arg3[%c0_122, %c33] : memref<8x83xf32, #tpu.memory_space<vmem>>, vector<8x1xf32>
    %405 = vector.broadcast %404 : vector<8x1xf32> to vector<8x256xf32>
    %406 = arith.mulf %403, %405 : vector<8x256xf32>
    %407 = arith.addf %398, %406 : vector<8x256xf32>
    %c0_123 = arith.constant 0 : index
    %c68 = arith.constant 68 : index
    %408 = vector.load %arg3[%c0_123, %c68] : memref<8x83xf32, #tpu.memory_space<vmem>>, vector<8x1xf32>
    %409 = vector.broadcast %408 : vector<8x1xf32> to vector<8x256xf32>
    %410 = arith.mulf %403, %409 : vector<8x256xf32>
    %411 = arith.addf %402, %410 : vector<8x256xf32>
    %412 = vector.extract_strided_slice %20 {offsets = [0, 5], sizes = [8, 256], strides = [1, 1]} : vector<8x262xf32> to vector<8x256xf32>
    %c0_124 = arith.constant 0 : index
    %c40 = arith.constant 40 : index
    %413 = vector.load %arg3[%c0_124, %c40] : memref<8x83xf32, #tpu.memory_space<vmem>>, vector<8x1xf32>
    %414 = vector.broadcast %413 : vector<8x1xf32> to vector<8x256xf32>
    %415 = arith.mulf %412, %414 : vector<8x256xf32>
    %416 = arith.addf %407, %415 : vector<8x256xf32>
    %c0_125 = arith.constant 0 : index
    %c73 = arith.constant 73 : index
    %417 = vector.load %arg3[%c0_125, %c73] : memref<8x83xf32, #tpu.memory_space<vmem>>, vector<8x1xf32>
    %418 = vector.broadcast %417 : vector<8x1xf32> to vector<8x256xf32>
    %419 = arith.mulf %412, %418 : vector<8x256xf32>
    %420 = arith.addf %411, %419 : vector<8x256xf32>
    %421 = vector.extract_strided_slice %21 {offsets = [0, 5], sizes = [8, 256], strides = [1, 1]} : vector<8x262xf32> to vector<8x256xf32>
    %c0_126 = arith.constant 0 : index
    %c47 = arith.constant 47 : index
    %422 = vector.load %arg3[%c0_126, %c47] : memref<8x83xf32, #tpu.memory_space<vmem>>, vector<8x1xf32>
    %423 = vector.broadcast %422 : vector<8x1xf32> to vector<8x256xf32>
    %424 = arith.mulf %421, %423 : vector<8x256xf32>
    %425 = arith.addf %416, %424 : vector<8x256xf32>
    %c5_127 = arith.constant 5 : index
    %c0_128 = arith.constant 0 : index
    %426 = vector.load %arg7[%c5_127, %c0_128] : memref<7x256xf32, #tpu.memory_space<vmem>>, vector<1x256xf32>
    %427 = vector.broadcast %426 : vector<1x256xf32> to vector<8x256xf32>
    %428 = arith.mulf %425, %427 : vector<8x256xf32>
    %429 = arith.addf %362, %428 : vector<8x256xf32>
    %430 = vector.broadcast %426 : vector<1x256xf32> to vector<8x256xf32>
    %431 = arith.mulf %420, %430 : vector<8x256xf32>
    %432 = arith.addf %365, %431 : vector<8x256xf32>
    %cst_129 = arith.constant 0.000000e+00 : f32
    %433 = vector.broadcast %cst_129 : f32 to vector<8x256xf32>
    %434 = vector.extract_strided_slice %15 {offsets = [0, 6], sizes = [8, 256], strides = [1, 1]} : vector<8x262xf32> to vector<8x256xf32>
    %c0_130 = arith.constant 0 : index
    %c6 = arith.constant 6 : index
    %435 = vector.load %arg3[%c0_130, %c6] : memref<8x83xf32, #tpu.memory_space<vmem>>, vector<8x1xf32>
    %436 = vector.broadcast %435 : vector<8x1xf32> to vector<8x256xf32>
    %437 = arith.mulf %434, %436 : vector<8x256xf32>
    %438 = arith.addf %433, %437 : vector<8x256xf32>
    %439 = vector.extract_strided_slice %16 {offsets = [0, 6], sizes = [8, 256], strides = [1, 1]} : vector<8x262xf32> to vector<8x256xf32>
    %c0_131 = arith.constant 0 : index
    %c13 = arith.constant 13 : index
    %440 = vector.load %arg3[%c0_131, %c13] : memref<8x83xf32, #tpu.memory_space<vmem>>, vector<8x1xf32>
    %441 = vector.broadcast %440 : vector<8x1xf32> to vector<8x256xf32>
    %442 = arith.mulf %439, %441 : vector<8x256xf32>
    %443 = arith.addf %438, %442 : vector<8x256xf32>
    %444 = vector.extract_strided_slice %17 {offsets = [0, 6], sizes = [8, 256], strides = [1, 1]} : vector<8x262xf32> to vector<8x256xf32>
    %c0_132 = arith.constant 0 : index
    %c20 = arith.constant 20 : index
    %445 = vector.load %arg3[%c0_132, %c20] : memref<8x83xf32, #tpu.memory_space<vmem>>, vector<8x1xf32>
    %446 = vector.broadcast %445 : vector<8x1xf32> to vector<8x256xf32>
    %447 = arith.mulf %444, %446 : vector<8x256xf32>
    %448 = arith.addf %443, %447 : vector<8x256xf32>
    %449 = vector.extract_strided_slice %18 {offsets = [0, 6], sizes = [8, 256], strides = [1, 1]} : vector<8x262xf32> to vector<8x256xf32>
    %c0_133 = arith.constant 0 : index
    %c27 = arith.constant 27 : index
    %450 = vector.load %arg3[%c0_133, %c27] : memref<8x83xf32, #tpu.memory_space<vmem>>, vector<8x1xf32>
    %451 = vector.broadcast %450 : vector<8x1xf32> to vector<8x256xf32>
    %452 = arith.mulf %449, %451 : vector<8x256xf32>
    %453 = arith.addf %448, %452 : vector<8x256xf32>
    %454 = vector.extract_strided_slice %19 {offsets = [0, 6], sizes = [8, 256], strides = [1, 1]} : vector<8x262xf32> to vector<8x256xf32>
    %c0_134 = arith.constant 0 : index
    %c34 = arith.constant 34 : index
    %455 = vector.load %arg3[%c0_134, %c34] : memref<8x83xf32, #tpu.memory_space<vmem>>, vector<8x1xf32>
    %456 = vector.broadcast %455 : vector<8x1xf32> to vector<8x256xf32>
    %457 = arith.mulf %454, %456 : vector<8x256xf32>
    %458 = arith.addf %453, %457 : vector<8x256xf32>
    %459 = vector.extract_strided_slice %20 {offsets = [0, 6], sizes = [8, 256], strides = [1, 1]} : vector<8x262xf32> to vector<8x256xf32>
    %c0_135 = arith.constant 0 : index
    %c41 = arith.constant 41 : index
    %460 = vector.load %arg3[%c0_135, %c41] : memref<8x83xf32, #tpu.memory_space<vmem>>, vector<8x1xf32>
    %461 = vector.broadcast %460 : vector<8x1xf32> to vector<8x256xf32>
    %462 = arith.mulf %459, %461 : vector<8x256xf32>
    %463 = arith.addf %458, %462 : vector<8x256xf32>
    %464 = vector.extract_strided_slice %21 {offsets = [0, 6], sizes = [8, 256], strides = [1, 1]} : vector<8x262xf32> to vector<8x256xf32>
    %c0_136 = arith.constant 0 : index
    %c48 = arith.constant 48 : index
    %465 = vector.load %arg3[%c0_136, %c48] : memref<8x83xf32, #tpu.memory_space<vmem>>, vector<8x1xf32>
    %466 = vector.broadcast %465 : vector<8x1xf32> to vector<8x256xf32>
    %467 = arith.mulf %464, %466 : vector<8x256xf32>
    %468 = arith.addf %463, %467 : vector<8x256xf32>
    %c6_137 = arith.constant 6 : index
    %c0_138 = arith.constant 0 : index
    %469 = vector.load %arg7[%c6_137, %c0_138] : memref<7x256xf32, #tpu.memory_space<vmem>>, vector<1x256xf32>
    %470 = vector.broadcast %469 : vector<1x256xf32> to vector<8x256xf32>
    %471 = arith.mulf %468, %470 : vector<8x256xf32>
    %472 = arith.addf %429, %471 : vector<8x256xf32>
    %c0_139 = arith.constant 0 : index
    %c2_140 = arith.constant 2 : index
    %473 = vector.load %arg2[%c0_139, %c2_140] : memref<8x12xf32, #tpu.memory_space<vmem>>, vector<8x1xf32>
    %474 = vector.broadcast %473 : vector<8x1xf32> to vector<8x256xf32>
    %475 = arith.addf %472, %474 : vector<8x256xf32>
    %cst_141 = arith.constant 5.000000e-01 : f32
    %476 = vector.broadcast %cst_141 : f32 to vector<8x256xf32>
    %477 = arith.mulf %476, %475 : vector<8x256xf32>
    %cst_142 = arith.constant 0.707106769 : f32
    %478 = vector.broadcast %cst_142 : f32 to vector<8x256xf32>
    %479 = arith.mulf %475, %478 : vector<8x256xf32>
    %cst_143 = arith.constant 0.000000e+00 : f32
    %480 = vector.broadcast %cst_143 : f32 to vector<8x256xf32>
    %481 = arith.cmpf oge, %479, %480 : vector<8x256xf32>
    %cst_144 = arith.constant 1.000000e+00 : f32
    %cst_145 = arith.constant -1.000000e+00 : f32
    %482 = vector.broadcast %cst_144 : f32 to vector<8x256xf32>
    %483 = vector.broadcast %cst_145 : f32 to vector<8x256xf32>
    %484 = arith.select %481, %482, %483 : vector<8x256xi1>, vector<8x256xf32>
    %485 = math.absf %479 : vector<8x256xf32>
    %cst_146 = arith.constant 0.327591091 : f32
    %486 = vector.broadcast %cst_146 : f32 to vector<8x256xf32>
    %487 = arith.mulf %486, %485 : vector<8x256xf32>
    %cst_147 = arith.constant 1.000000e+00 : f32
    %488 = vector.broadcast %cst_147 : f32 to vector<8x256xf32>
    %489 = arith.addf %488, %487 : vector<8x256xf32>
    %490 = tpu.reciprocal %489 {approx = true} : vector<8x256xf32> -> vector<8x256xf32>
    %cst_148 = arith.constant 1.06140542 : f32
    %491 = vector.broadcast %cst_148 : f32 to vector<8x256xf32>
    %492 = arith.mulf %491, %490 : vector<8x256xf32>
    %cst_149 = arith.constant -1.45315206 : f32
    %493 = vector.broadcast %cst_149 : f32 to vector<8x256xf32>
    %494 = arith.addf %492, %493 : vector<8x256xf32>
    %495 = arith.mulf %494, %490 : vector<8x256xf32>
    %cst_150 = arith.constant 1.42141378 : f32
    %496 = vector.broadcast %cst_150 : f32 to vector<8x256xf32>
    %497 = arith.addf %495, %496 : vector<8x256xf32>
    %498 = arith.mulf %497, %490 : vector<8x256xf32>
    %cst_151 = arith.constant -0.284496725 : f32
    %499 = vector.broadcast %cst_151 : f32 to vector<8x256xf32>
    %500 = arith.addf %498, %499 : vector<8x256xf32>
    %501 = arith.mulf %500, %490 : vector<8x256xf32>
    %cst_152 = arith.constant 0.254829586 : f32
    %502 = vector.broadcast %cst_152 : f32 to vector<8x256xf32>
    %503 = arith.addf %501, %502 : vector<8x256xf32>
    %504 = arith.mulf %503, %490 : vector<8x256xf32>
    %cst_153 = arith.constant 0.000000e+00 : f32
    %505 = vector.broadcast %cst_153 : f32 to vector<8x256xf32>
    %506 = arith.subf %505, %485 : vector<8x256xf32>
    %507 = arith.mulf %506, %485 : vector<8x256xf32>
    %508 = math.exp %507 : vector<8x256xf32>
    %509 = arith.mulf %504, %508 : vector<8x256xf32>
    %cst_154 = arith.constant 1.000000e+00 : f32
    %510 = vector.broadcast %cst_154 : f32 to vector<8x256xf32>
    %511 = arith.subf %510, %509 : vector<8x256xf32>
    %512 = arith.mulf %484, %511 : vector<8x256xf32>
    %cst_155 = arith.constant 1.000000e+00 : f32
    %513 = vector.broadcast %cst_155 : f32 to vector<8x256xf32>
    %514 = arith.addf %513, %512 : vector<8x256xf32>
    %515 = arith.mulf %477, %514 : vector<8x256xf32>
    %c0_156 = arith.constant 0 : index
    %c3_157 = arith.constant 3 : index
    %516 = vector.load %arg2[%c0_156, %c3_157] : memref<8x12xf32, #tpu.memory_space<vmem>>, vector<8x1xf32>
    %517 = vector.broadcast %516 : vector<8x1xf32> to vector<8x256xf32>
    %518 = arith.addf %432, %517 : vector<8x256xf32>
    %cst_158 = arith.constant 5.000000e-01 : f32
    %519 = vector.broadcast %cst_158 : f32 to vector<8x256xf32>
    %520 = arith.mulf %519, %518 : vector<8x256xf32>
    %cst_159 = arith.constant 0.707106769 : f32
    %521 = vector.broadcast %cst_159 : f32 to vector<8x256xf32>
    %522 = arith.mulf %518, %521 : vector<8x256xf32>
    %cst_160 = arith.constant 0.000000e+00 : f32
    %523 = vector.broadcast %cst_160 : f32 to vector<8x256xf32>
    %524 = arith.cmpf oge, %522, %523 : vector<8x256xf32>
    %cst_161 = arith.constant 1.000000e+00 : f32
    %cst_162 = arith.constant -1.000000e+00 : f32
    %525 = vector.broadcast %cst_161 : f32 to vector<8x256xf32>
    %526 = vector.broadcast %cst_162 : f32 to vector<8x256xf32>
    %527 = arith.select %524, %525, %526 : vector<8x256xi1>, vector<8x256xf32>
    %528 = math.absf %522 : vector<8x256xf32>
    %cst_163 = arith.constant 0.327591091 : f32
    %529 = vector.broadcast %cst_163 : f32 to vector<8x256xf32>
    %530 = arith.mulf %529, %528 : vector<8x256xf32>
    %cst_164 = arith.constant 1.000000e+00 : f32
    %531 = vector.broadcast %cst_164 : f32 to vector<8x256xf32>
    %532 = arith.addf %531, %530 : vector<8x256xf32>
    %533 = tpu.reciprocal %532 {approx = true} : vector<8x256xf32> -> vector<8x256xf32>
    %cst_165 = arith.constant 1.06140542 : f32
    %534 = vector.broadcast %cst_165 : f32 to vector<8x256xf32>
    %535 = arith.mulf %534, %533 : vector<8x256xf32>
    %cst_166 = arith.constant -1.45315206 : f32
    %536 = vector.broadcast %cst_166 : f32 to vector<8x256xf32>
    %537 = arith.addf %535, %536 : vector<8x256xf32>
    %538 = arith.mulf %537, %533 : vector<8x256xf32>
    %cst_167 = arith.constant 1.42141378 : f32
    %539 = vector.broadcast %cst_167 : f32 to vector<8x256xf32>
    %540 = arith.addf %538, %539 : vector<8x256xf32>
    %541 = arith.mulf %540, %533 : vector<8x256xf32>
    %cst_168 = arith.constant -0.284496725 : f32
    %542 = vector.broadcast %cst_168 : f32 to vector<8x256xf32>
    %543 = arith.addf %541, %542 : vector<8x256xf32>
    %544 = arith.mulf %543, %533 : vector<8x256xf32>
    %cst_169 = arith.constant 0.254829586 : f32
    %545 = vector.broadcast %cst_169 : f32 to vector<8x256xf32>
    %546 = arith.addf %544, %545 : vector<8x256xf32>
    %547 = arith.mulf %546, %533 : vector<8x256xf32>
    %cst_170 = arith.constant 0.000000e+00 : f32
    %548 = vector.broadcast %cst_170 : f32 to vector<8x256xf32>
    %549 = arith.subf %548, %528 : vector<8x256xf32>
    %550 = arith.mulf %549, %528 : vector<8x256xf32>
    %551 = math.exp %550 : vector<8x256xf32>
    %552 = arith.mulf %547, %551 : vector<8x256xf32>
    %cst_171 = arith.constant 1.000000e+00 : f32
    %553 = vector.broadcast %cst_171 : f32 to vector<8x256xf32>
    %554 = arith.subf %553, %552 : vector<8x256xf32>
    %555 = arith.mulf %527, %554 : vector<8x256xf32>
    %cst_172 = arith.constant 1.000000e+00 : f32
    %556 = vector.broadcast %cst_172 : f32 to vector<8x256xf32>
    %557 = arith.addf %556, %555 : vector<8x256xf32>
    %558 = arith.mulf %520, %557 : vector<8x256xf32>
    %c0_173 = arith.constant 0 : index
    %c4_174 = arith.constant 4 : index
    %559 = vector.load %arg2[%c0_173, %c4_174] : memref<8x12xf32, #tpu.memory_space<vmem>>, vector<8x1xf32>
    %560 = vector.broadcast %559 : vector<8x1xf32> to vector<8x256xf32>
    %561 = arith.addf %368, %560 : vector<8x256xf32>
    %cst_175 = arith.constant 5.000000e-01 : f32
    %562 = vector.broadcast %cst_175 : f32 to vector<8x256xf32>
    %563 = arith.mulf %562, %561 : vector<8x256xf32>
    %cst_176 = arith.constant 0.707106769 : f32
    %564 = vector.broadcast %cst_176 : f32 to vector<8x256xf32>
    %565 = arith.mulf %561, %564 : vector<8x256xf32>
    %cst_177 = arith.constant 0.000000e+00 : f32
    %566 = vector.broadcast %cst_177 : f32 to vector<8x256xf32>
    %567 = arith.cmpf oge, %565, %566 : vector<8x256xf32>
    %cst_178 = arith.constant 1.000000e+00 : f32
    %cst_179 = arith.constant -1.000000e+00 : f32
    %568 = vector.broadcast %cst_178 : f32 to vector<8x256xf32>
    %569 = vector.broadcast %cst_179 : f32 to vector<8x256xf32>
    %570 = arith.select %567, %568, %569 : vector<8x256xi1>, vector<8x256xf32>
    %571 = math.absf %565 : vector<8x256xf32>
    %cst_180 = arith.constant 0.327591091 : f32
    %572 = vector.broadcast %cst_180 : f32 to vector<8x256xf32>
    %573 = arith.mulf %572, %571 : vector<8x256xf32>
    %cst_181 = arith.constant 1.000000e+00 : f32
    %574 = vector.broadcast %cst_181 : f32 to vector<8x256xf32>
    %575 = arith.addf %574, %573 : vector<8x256xf32>
    %576 = tpu.reciprocal %575 {approx = true} : vector<8x256xf32> -> vector<8x256xf32>
    %cst_182 = arith.constant 1.06140542 : f32
    %577 = vector.broadcast %cst_182 : f32 to vector<8x256xf32>
    %578 = arith.mulf %577, %576 : vector<8x256xf32>
    %cst_183 = arith.constant -1.45315206 : f32
    %579 = vector.broadcast %cst_183 : f32 to vector<8x256xf32>
    %580 = arith.addf %578, %579 : vector<8x256xf32>
    %581 = arith.mulf %580, %576 : vector<8x256xf32>
    %cst_184 = arith.constant 1.42141378 : f32
    %582 = vector.broadcast %cst_184 : f32 to vector<8x256xf32>
    %583 = arith.addf %581, %582 : vector<8x256xf32>
    %584 = arith.mulf %583, %576 : vector<8x256xf32>
    %cst_185 = arith.constant -0.284496725 : f32
    %585 = vector.broadcast %cst_185 : f32 to vector<8x256xf32>
    %586 = arith.addf %584, %585 : vector<8x256xf32>
    %587 = arith.mulf %586, %576 : vector<8x256xf32>
    %cst_186 = arith.constant 0.254829586 : f32
    %588 = vector.broadcast %cst_186 : f32 to vector<8x256xf32>
    %589 = arith.addf %587, %588 : vector<8x256xf32>
    %590 = arith.mulf %589, %576 : vector<8x256xf32>
    %cst_187 = arith.constant 0.000000e+00 : f32
    %591 = vector.broadcast %cst_187 : f32 to vector<8x256xf32>
    %592 = arith.subf %591, %571 : vector<8x256xf32>
    %593 = arith.mulf %592, %571 : vector<8x256xf32>
    %594 = math.exp %593 : vector<8x256xf32>
    %595 = arith.mulf %590, %594 : vector<8x256xf32>
    %cst_188 = arith.constant 1.000000e+00 : f32
    %596 = vector.broadcast %cst_188 : f32 to vector<8x256xf32>
    %597 = arith.subf %596, %595 : vector<8x256xf32>
    %598 = arith.mulf %570, %597 : vector<8x256xf32>
    %cst_189 = arith.constant 1.000000e+00 : f32
    %599 = vector.broadcast %cst_189 : f32 to vector<8x256xf32>
    %600 = arith.addf %599, %598 : vector<8x256xf32>
    %601 = arith.mulf %563, %600 : vector<8x256xf32>
    %602 = tpu.concatenate %515, %558, %601 in 0 : vector<8x256xf32>, vector<8x256xf32>, vector<8x256xf32> -> vector<24x256xf32>
    %603 = arith.truncf %602 : vector<24x256xf32> to vector<24x256xbf16>
    %c0_190 = arith.constant 0 : index
    %c0_191 = arith.constant 0 : index
    %604 = vector.load %arg4[%c0_190, %c0_191] : memref<8x64xbf16, #tpu.memory_space<vmem>>, vector<8x24xbf16>
    %cst_192 = arith.constant dense<0.000000e+00> : vector<8x256xf32>
    %605 = tpu.matmul %604, %603, %cst_192 {dimension_numbers = #tpu.dot_dimension_numbers<[1], [0], [0], [1], [0, 0, 1, 1], [], []>} : vector<8x24xbf16>, vector<24x256xbf16>, vector<8x256xf32> -> vector<8x256xf32>
    %c0_193 = arith.constant 0 : index
    %c5_194 = arith.constant 5 : index
    %606 = vector.load %arg2[%c0_193, %c5_194] : memref<8x12xf32, #tpu.memory_space<vmem>>, vector<8x1xf32>
    %607 = vector.broadcast %606 : vector<8x1xf32> to vector<8x256xf32>
    %608 = arith.addf %605, %607 : vector<8x256xf32>
    %c0_195 = arith.constant 0 : index
    %c128_196 = arith.constant 128 : index
    %609 = vector.load %arg9[%c0_195, %c128_196] : memref<8x512xf32, #tpu.memory_space<vmem>>, vector<8x256xf32>
    tpu.vector_store %arg9[%c0_195, %c128_196], %608 {strides = array<i32>} : memref<8x512xf32, #tpu.memory_space<vmem>>, vector<8x256xf32>,
    %cst_197 = arith.constant 0.000000e+00 : f32
    %610 = vector.broadcast %cst_197 : f32 to vector<8x256xf32>
    %cst_198 = arith.constant 0.000000e+00 : f32
    %611 = vector.broadcast %cst_198 : f32 to vector<8x256xf32>
    %c0_199 = arith.constant 0 : index
    %c111 = arith.constant 111 : index
    %612 = vector.load %arg9[%c0_199, %c111] : memref<8x512xf32, #tpu.memory_space<vmem>>, vector<8x256xf32>
    %613 = arith.addf %611, %612 : vector<8x256xf32>
    %c0_200 = arith.constant 0 : index
    %c127 = arith.constant 127 : index
    %614 = vector.load %arg9[%c0_200, %c127] : memref<8x512xf32, #tpu.memory_space<vmem>>, vector<8x256xf32>
    %615 = arith.addf %613, %614 : vector<8x256xf32>
    %c0_201 = arith.constant 0 : index
    %c143 = arith.constant 143 : index
    %616 = vector.load %arg9[%c0_201, %c143] : memref<8x512xf32, #tpu.memory_space<vmem>>, vector<8x256xf32>
    %617 = arith.addf %615, %616 : vector<8x256xf32>
    %c2_202 = arith.constant 2 : index
    %c0_203 = arith.constant 0 : index
    %618 = vector.load %arg7[%c2_202, %c0_203] : memref<7x256xf32, #tpu.memory_space<vmem>>, vector<1x256xf32>
    %619 = vector.broadcast %618 : vector<1x256xf32> to vector<8x256xf32>
    %620 = arith.mulf %617, %619 : vector<8x256xf32>
    %621 = arith.addf %610, %620 : vector<8x256xf32>
    %cst_204 = arith.constant 0.000000e+00 : f32
    %622 = vector.broadcast %cst_204 : f32 to vector<8x256xf32>
    %c0_205 = arith.constant 0 : index
    %c112 = arith.constant 112 : index
    %623 = vector.load %arg9[%c0_205, %c112] : memref<8x512xf32, #tpu.memory_space<vmem>>, vector<8x256xf32>
    %624 = arith.addf %622, %623 : vector<8x256xf32>
    %c0_206 = arith.constant 0 : index
    %c128_207 = arith.constant 128 : index
    %625 = vector.load %arg9[%c0_206, %c128_207] : memref<8x512xf32, #tpu.memory_space<vmem>>, vector<8x256xf32>
    %626 = arith.addf %624, %625 : vector<8x256xf32>
    %c0_208 = arith.constant 0 : index
    %c144 = arith.constant 144 : index
    %627 = vector.load %arg9[%c0_208, %c144] : memref<8x512xf32, #tpu.memory_space<vmem>>, vector<8x256xf32>
    %628 = arith.addf %626, %627 : vector<8x256xf32>
    %c3_209 = arith.constant 3 : index
    %c0_210 = arith.constant 0 : index
    %629 = vector.load %arg7[%c3_209, %c0_210] : memref<7x256xf32, #tpu.memory_space<vmem>>, vector<1x256xf32>
    %630 = vector.broadcast %629 : vector<1x256xf32> to vector<8x256xf32>
    %631 = arith.mulf %628, %630 : vector<8x256xf32>
    %632 = arith.addf %621, %631 : vector<8x256xf32>
    %cst_211 = arith.constant 0.000000e+00 : f32
    %633 = vector.broadcast %cst_211 : f32 to vector<8x256xf32>
    %c0_212 = arith.constant 0 : index
    %c113 = arith.constant 113 : index
    %634 = vector.load %arg9[%c0_212, %c113] : memref<8x512xf32, #tpu.memory_space<vmem>>, vector<8x256xf32>
    %635 = arith.addf %633, %634 : vector<8x256xf32>
    %c0_213 = arith.constant 0 : index
    %c129 = arith.constant 129 : index
    %636 = vector.load %arg9[%c0_213, %c129] : memref<8x512xf32, #tpu.memory_space<vmem>>, vector<8x256xf32>
    %637 = arith.addf %635, %636 : vector<8x256xf32>
    %c0_214 = arith.constant 0 : index
    %c145 = arith.constant 145 : index
    %638 = vector.load %arg9[%c0_214, %c145] : memref<8x512xf32, #tpu.memory_space<vmem>>, vector<8x256xf32>
    %639 = arith.addf %637, %638 : vector<8x256xf32>
    %c4_215 = arith.constant 4 : index
    %c0_216 = arith.constant 0 : index
    %640 = vector.load %arg7[%c4_215, %c0_216] : memref<7x256xf32, #tpu.memory_space<vmem>>, vector<1x256xf32>
    %641 = vector.broadcast %640 : vector<1x256xf32> to vector<8x256xf32>
    %642 = arith.mulf %639, %641 : vector<8x256xf32>
    %643 = arith.addf %632, %642 : vector<8x256xf32>
    %cst_217 = arith.constant 0.111111112 : f32
    %644 = vector.broadcast %cst_217 : f32 to vector<8x256xf32>
    %645 = arith.mulf %643, %644 : vector<8x256xf32>
    %646 = arith.subf %608, %645 : vector<8x256xf32>
    %c0_218 = arith.constant 0 : index
    %c24_219 = arith.constant 24 : index
    %647 = vector.load %arg4[%c0_218, %c24_219] : memref<8x64xbf16, #tpu.memory_space<vmem>>, vector<8x8xbf16>
    %648 = arith.truncf %646 : vector<8x256xf32> to vector<8x256xbf16>
    %cst_220 = arith.constant dense<0.000000e+00> : vector<8x256xf32>
    %649 = tpu.matmul %647, %648, %cst_220 {dimension_numbers = #tpu.dot_dimension_numbers<[1], [0], [0], [1], [0, 0, 1, 1], [], []>} : vector<8x8xbf16>, vector<8x256xbf16>, vector<8x256xf32> -> vector<8x256xf32>
    %c0_221 = arith.constant 0 : index
    %c6_222 = arith.constant 6 : index
    %650 = vector.load %arg2[%c0_221, %c6_222] : memref<8x12xf32, #tpu.memory_space<vmem>>, vector<8x1xf32>
    %651 = vector.broadcast %650 : vector<8x1xf32> to vector<8x256xf32>
    %652 = arith.addf %649, %651 : vector<8x256xf32>
    %cst_223 = arith.constant 0.000000e+00 : f32
    %653 = vector.broadcast %cst_223 : f32 to vector<8x256xf32>
    %654 = arith.subf %653, %652 : vector<8x256xf32>
    %655 = math.exp %654 : vector<8x256xf32>
    %cst_224 = arith.constant 1.000000e+00 : f32
    %656 = vector.broadcast %cst_224 : f32 to vector<8x256xf32>
    %657 = arith.addf %656, %655 : vector<8x256xf32>
    %658 = tpu.reciprocal %657 {approx = true} : vector<8x256xf32> -> vector<8x256xf32>
    %cst_225 = arith.constant 1.000000e+00 : f32
    %659 = vector.broadcast %cst_225 : f32 to vector<8x256xf32>
    %660 = arith.addf %658, %659 : vector<8x256xf32>
    %661 = arith.mulf %608, %660 : vector<8x256xf32>
    %c0_226 = arith.constant 0 : index
    %c128_227 = arith.constant 128 : index
    %662 = vector.load %arg9[%c0_226, %c128_227] : memref<8x512xf32, #tpu.memory_space<vmem>>, vector<8x256xf32>
    tpu.vector_store %arg9[%c0_226, %c128_227], %661 {strides = array<i32>} : memref<8x512xf32, #tpu.memory_space<vmem>>, vector<8x256xf32>,
    %cst_228 = arith.constant 0.000000e+00 : f32
    %663 = vector.broadcast %cst_228 : f32 to vector<8x256xf32>
    %cst_229 = arith.constant 0.000000e+00 : f32
    %664 = vector.broadcast %cst_229 : f32 to vector<8x256xf32>
    %c0_230 = arith.constant 0 : index
    %c111_231 = arith.constant 111 : index
    %665 = vector.load %arg9[%c0_230, %c111_231] : memref<8x512xf32, #tpu.memory_space<vmem>>, vector<8x256xf32>
    %666 = arith.addf %664, %665 : vector<8x256xf32>
    %c0_232 = arith.constant 0 : index
    %c127_233 = arith.constant 127 : index
    %667 = vector.load %arg9[%c0_232, %c127_233] : memref<8x512xf32, #tpu.memory_space<vmem>>, vector<8x256xf32>
    %668 = arith.addf %666, %667 : vector<8x256xf32>
    %c0_234 = arith.constant 0 : index
    %c143_235 = arith.constant 143 : index
    %669 = vector.load %arg9[%c0_234, %c143_235] : memref<8x512xf32, #tpu.memory_space<vmem>>, vector<8x256xf32>
    %670 = arith.addf %668, %669 : vector<8x256xf32>
    %c2_236 = arith.constant 2 : index
    %c0_237 = arith.constant 0 : index
    %671 = vector.load %arg7[%c2_236, %c0_237] : memref<7x256xf32, #tpu.memory_space<vmem>>, vector<1x256xf32>
    %672 = vector.broadcast %671 : vector<1x256xf32> to vector<8x256xf32>
    %673 = arith.mulf %670, %672 : vector<8x256xf32>
    %674 = arith.addf %663, %673 : vector<8x256xf32>
    %cst_238 = arith.constant 0.000000e+00 : f32
    %675 = vector.broadcast %cst_238 : f32 to vector<8x256xf32>
    %c0_239 = arith.constant 0 : index
    %c112_240 = arith.constant 112 : index
    %676 = vector.load %arg9[%c0_239, %c112_240] : memref<8x512xf32, #tpu.memory_space<vmem>>, vector<8x256xf32>
    %677 = arith.addf %675, %676 : vector<8x256xf32>
    %c0_241 = arith.constant 0 : index
    %c128_242 = arith.constant 128 : index
    %678 = vector.load %arg9[%c0_241, %c128_242] : memref<8x512xf32, #tpu.memory_space<vmem>>, vector<8x256xf32>
    %679 = arith.addf %677, %678 : vector<8x256xf32>
    %c0_243 = arith.constant 0 : index
    %c144_244 = arith.constant 144 : index
    %680 = vector.load %arg9[%c0_243, %c144_244] : memref<8x512xf32, #tpu.memory_space<vmem>>, vector<8x256xf32>
    %681 = arith.addf %679, %680 : vector<8x256xf32>
    %c3_245 = arith.constant 3 : index
    %c0_246 = arith.constant 0 : index
    %682 = vector.load %arg7[%c3_245, %c0_246] : memref<7x256xf32, #tpu.memory_space<vmem>>, vector<1x256xf32>
    %683 = vector.broadcast %682 : vector<1x256xf32> to vector<8x256xf32>
    %684 = arith.mulf %681, %683 : vector<8x256xf32>
    %685 = arith.addf %674, %684 : vector<8x256xf32>
    %cst_247 = arith.constant 0.000000e+00 : f32
    %686 = vector.broadcast %cst_247 : f32 to vector<8x256xf32>
    %c0_248 = arith.constant 0 : index
    %c113_249 = arith.constant 113 : index
    %687 = vector.load %arg9[%c0_248, %c113_249] : memref<8x512xf32, #tpu.memory_space<vmem>>, vector<8x256xf32>
    %688 = arith.addf %686, %687 : vector<8x256xf32>
    %c0_250 = arith.constant 0 : index
    %c129_251 = arith.constant 129 : index
    %689 = vector.load %arg9[%c0_250, %c129_251] : memref<8x512xf32, #tpu.memory_space<vmem>>, vector<8x256xf32>
    %690 = arith.addf %688, %689 : vector<8x256xf32>
    %c0_252 = arith.constant 0 : index
    %c145_253 = arith.constant 145 : index
    %691 = vector.load %arg9[%c0_252, %c145_253] : memref<8x512xf32, #tpu.memory_space<vmem>>, vector<8x256xf32>
    %692 = arith.addf %690, %691 : vector<8x256xf32>
    %c4_254 = arith.constant 4 : index
    %c0_255 = arith.constant 0 : index
    %693 = vector.load %arg7[%c4_254, %c0_255] : memref<7x256xf32, #tpu.memory_space<vmem>>, vector<1x256xf32>
    %694 = vector.broadcast %693 : vector<1x256xf32> to vector<8x256xf32>
    %695 = arith.mulf %692, %694 : vector<8x256xf32>
    %696 = arith.addf %685, %695 : vector<8x256xf32>
    %cst_256 = arith.constant -1.000000e+30 : f32
    %697 = vector.broadcast %cst_256 : f32 to vector<8x17xf32>
    %c0_257 = arith.constant 0 : index
    %c111_258 = arith.constant 111 : index
    %698 = vector.load %arg9[%c0_257, %c111_258] : memref<8x512xf32, #tpu.memory_space<vmem>>, vector<8x17xf32>
    tpu.vector_store %arg9[%c0_257, %c111_258], %697 {strides = array<i32>} : memref<8x512xf32, #tpu.memory_space<vmem>>, vector<8x17xf32>,
    %c0_259 = arith.constant 0 : index
    %c384_260 = arith.constant 384 : index
    %699 = vector.load %arg9[%c0_259, %c384_260] : memref<8x512xf32, #tpu.memory_space<vmem>>, vector<8x17xf32>
    tpu.vector_store %arg9[%c0_259, %c384_260], %697 {strides = array<i32>} : memref<8x512xf32, #tpu.memory_space<vmem>>, vector<8x17xf32>,
    %cst_261 = arith.constant -1.000000e+30 : f32
    %700 = vector.broadcast %cst_261 : f32 to vector<8x256xf32>
    %cst_262 = arith.constant -1.000000e+30 : f32
    %701 = vector.broadcast %cst_262 : f32 to vector<8x256xf32>
    %c0_263 = arith.constant 0 : index
    %c111_264 = arith.constant 111 : index
    %702 = vector.load %arg9[%c0_263, %c111_264] : memref<8x512xf32, #tpu.memory_space<vmem>>, vector<8x256xf32>
    %703 = arith.maximumf %701, %702 : vector<8x256xf32>
    %c0_265 = arith.constant 0 : index
    %c127_266 = arith.constant 127 : index
    %704 = vector.load %arg9[%c0_265, %c127_266] : memref<8x512xf32, #tpu.memory_space<vmem>>, vector<8x256xf32>
    %705 = arith.maximumf %703, %704 : vector<8x256xf32>
    %c0_267 = arith.constant 0 : index
    %c143_268 = arith.constant 143 : index
    %706 = vector.load %arg9[%c0_267, %c143_268] : memref<8x512xf32, #tpu.memory_space<vmem>>, vector<8x256xf32>
    %707 = arith.maximumf %705, %706 : vector<8x256xf32>
    %c2_269 = arith.constant 2 : index
    %c0_270 = arith.constant 0 : index
    %708 = vector.load %arg7[%c2_269, %c0_270] : memref<7x256xf32, #tpu.memory_space<vmem>>, vector<1x256xf32>
    %cst_271 = arith.constant 0.000000e+00 : f32
    %709 = vector.broadcast %cst_271 : f32 to vector<1x256xf32>
    %710 = arith.cmpf ogt, %708, %709 : vector<1x256xf32>
    %cst_272 = arith.constant -1.000000e+30 : f32
    %711 = vector.shape_cast %710 : vector<1x256xi1> to vector<1x256xi1>
    %712 = vector.broadcast %711 : vector<1x256xi1> to vector<8x256xi1>
    %713 = vector.broadcast %cst_272 : f32 to vector<8x256xf32>
    %714 = arith.select %712, %707, %713 : vector<8x256xi1>, vector<8x256xf32>
    %715 = arith.maximumf %700, %714 : vector<8x256xf32>
    %cst_273 = arith.constant -1.000000e+30 : f32
    %716 = vector.broadcast %cst_273 : f32 to vector<8x256xf32>
    %c0_274 = arith.constant 0 : index
    %c112_275 = arith.constant 112 : index
    %717 = vector.load %arg9[%c0_274, %c112_275] : memref<8x512xf32, #tpu.memory_space<vmem>>, vector<8x256xf32>
    %718 = arith.maximumf %716, %717 : vector<8x256xf32>
    %c0_276 = arith.constant 0 : index
    %c128_277 = arith.constant 128 : index
    %719 = vector.load %arg9[%c0_276, %c128_277] : memref<8x512xf32, #tpu.memory_space<vmem>>, vector<8x256xf32>
    %720 = arith.maximumf %718, %719 : vector<8x256xf32>
    %c0_278 = arith.constant 0 : index
    %c144_279 = arith.constant 144 : index
    %721 = vector.load %arg9[%c0_278, %c144_279] : memref<8x512xf32, #tpu.memory_space<vmem>>, vector<8x256xf32>
    %722 = arith.maximumf %720, %721 : vector<8x256xf32>
    %c3_280 = arith.constant 3 : index
    %c0_281 = arith.constant 0 : index
    %723 = vector.load %arg7[%c3_280, %c0_281] : memref<7x256xf32, #tpu.memory_space<vmem>>, vector<1x256xf32>
    %cst_282 = arith.constant 0.000000e+00 : f32
    %724 = vector.broadcast %cst_282 : f32 to vector<1x256xf32>
    %725 = arith.cmpf ogt, %723, %724 : vector<1x256xf32>
    %cst_283 = arith.constant -1.000000e+30 : f32
    %726 = vector.shape_cast %725 : vector<1x256xi1> to vector<1x256xi1>
    %727 = vector.broadcast %726 : vector<1x256xi1> to vector<8x256xi1>
    %728 = vector.broadcast %cst_283 : f32 to vector<8x256xf32>
    %729 = arith.select %727, %722, %728 : vector<8x256xi1>, vector<8x256xf32>
    %730 = arith.maximumf %715, %729 : vector<8x256xf32>
    %cst_284 = arith.constant -1.000000e+30 : f32
    %731 = vector.broadcast %cst_284 : f32 to vector<8x256xf32>
    %c0_285 = arith.constant 0 : index
    %c113_286 = arith.constant 113 : index
    %732 = vector.load %arg9[%c0_285, %c113_286] : memref<8x512xf32, #tpu.memory_space<vmem>>, vector<8x256xf32>
    %733 = arith.maximumf %731, %732 : vector<8x256xf32>
    %c0_287 = arith.constant 0 : index
    %c129_288 = arith.constant 129 : index
    %734 = vector.load %arg9[%c0_287, %c129_288] : memref<8x512xf32, #tpu.memory_space<vmem>>, vector<8x256xf32>
    %735 = arith.maximumf %733, %734 : vector<8x256xf32>
    %c0_289 = arith.constant 0 : index
    %c145_290 = arith.constant 145 : index
    %736 = vector.load %arg9[%c0_289, %c145_290] : memref<8x512xf32, #tpu.memory_space<vmem>>, vector<8x256xf32>
    %737 = arith.maximumf %735, %736 : vector<8x256xf32>
    %c4_291 = arith.constant 4 : index
    %c0_292 = arith.constant 0 : index
    %738 = vector.load %arg7[%c4_291, %c0_292] : memref<7x256xf32, #tpu.memory_space<vmem>>, vector<1x256xf32>
    %cst_293 = arith.constant 0.000000e+00 : f32
    %739 = vector.broadcast %cst_293 : f32 to vector<1x256xf32>
    %740 = arith.cmpf ogt, %738, %739 : vector<1x256xf32>
    %cst_294 = arith.constant -1.000000e+30 : f32
    %741 = vector.shape_cast %740 : vector<1x256xi1> to vector<1x256xi1>
    %742 = vector.broadcast %741 : vector<1x256xi1> to vector<8x256xi1>
    %743 = vector.broadcast %cst_294 : f32 to vector<8x256xf32>
    %744 = arith.select %742, %737, %743 : vector<8x256xi1>, vector<8x256xf32>
    %745 = arith.maximumf %730, %744 : vector<8x256xf32>
    %c0_295 = arith.constant 0 : index
    %c32_296 = arith.constant 32 : index
    %746 = vector.load %arg4[%c0_295, %c32_296] : memref<8x64xbf16, #tpu.memory_space<vmem>>, vector<8x8xbf16>
    %c0_297 = arith.constant 0 : index
    %c40_298 = arith.constant 40 : index
    %747 = vector.load %arg4[%c0_297, %c40_298] : memref<8x64xbf16, #tpu.memory_space<vmem>>, vector<8x8xbf16>
    %748 = arith.truncf %696 : vector<8x256xf32> to vector<8x256xbf16>
    %cst_299 = arith.constant dense<0.000000e+00> : vector<8x256xf32>
    %749 = tpu.matmul %746, %748, %cst_299 {dimension_numbers = #tpu.dot_dimension_numbers<[1], [0], [0], [1], [0, 0, 1, 1], [], []>} : vector<8x8xbf16>, vector<8x256xbf16>, vector<8x256xf32> -> vector<8x256xf32>
    %c0_300 = arith.constant 0 : index
    %c7_301 = arith.constant 7 : index
    %750 = vector.load %arg2[%c0_300, %c7_301] : memref<8x12xf32, #tpu.memory_space<vmem>>, vector<8x1xf32>
    %751 = vector.broadcast %750 : vector<8x1xf32> to vector<8x256xf32>
    %752 = arith.addf %749, %751 : vector<8x256xf32>
    %cst_302 = arith.constant 5.000000e-01 : f32
    %753 = vector.broadcast %cst_302 : f32 to vector<8x256xf32>
    %754 = arith.mulf %753, %752 : vector<8x256xf32>
    %cst_303 = arith.constant 0.707106769 : f32
    %755 = vector.broadcast %cst_303 : f32 to vector<8x256xf32>
    %756 = arith.mulf %752, %755 : vector<8x256xf32>
    %cst_304 = arith.constant 0.000000e+00 : f32
    %757 = vector.broadcast %cst_304 : f32 to vector<8x256xf32>
    %758 = arith.cmpf oge, %756, %757 : vector<8x256xf32>
    %cst_305 = arith.constant 1.000000e+00 : f32
    %cst_306 = arith.constant -1.000000e+00 : f32
    %759 = vector.broadcast %cst_305 : f32 to vector<8x256xf32>
    %760 = vector.broadcast %cst_306 : f32 to vector<8x256xf32>
    %761 = arith.select %758, %759, %760 : vector<8x256xi1>, vector<8x256xf32>
    %762 = math.absf %756 : vector<8x256xf32>
    %cst_307 = arith.constant 0.327591091 : f32
    %763 = vector.broadcast %cst_307 : f32 to vector<8x256xf32>
    %764 = arith.mulf %763, %762 : vector<8x256xf32>
    %cst_308 = arith.constant 1.000000e+00 : f32
    %765 = vector.broadcast %cst_308 : f32 to vector<8x256xf32>
    %766 = arith.addf %765, %764 : vector<8x256xf32>
    %767 = tpu.reciprocal %766 {approx = true} : vector<8x256xf32> -> vector<8x256xf32>
    %cst_309 = arith.constant 1.06140542 : f32
    %768 = vector.broadcast %cst_309 : f32 to vector<8x256xf32>
    %769 = arith.mulf %768, %767 : vector<8x256xf32>
    %cst_310 = arith.constant -1.45315206 : f32
    %770 = vector.broadcast %cst_310 : f32 to vector<8x256xf32>
    %771 = arith.addf %769, %770 : vector<8x256xf32>
    %772 = arith.mulf %771, %767 : vector<8x256xf32>
    %cst_311 = arith.constant 1.42141378 : f32
    %773 = vector.broadcast %cst_311 : f32 to vector<8x256xf32>
    %774 = arith.addf %772, %773 : vector<8x256xf32>
    %775 = arith.mulf %774, %767 : vector<8x256xf32>
    %cst_312 = arith.constant -0.284496725 : f32
    %776 = vector.broadcast %cst_312 : f32 to vector<8x256xf32>
    %777 = arith.addf %775, %776 : vector<8x256xf32>
    %778 = arith.mulf %777, %767 : vector<8x256xf32>
    %cst_313 = arith.constant 0.254829586 : f32
    %779 = vector.broadcast %cst_313 : f32 to vector<8x256xf32>
    %780 = arith.addf %778, %779 : vector<8x256xf32>
    %781 = arith.mulf %780, %767 : vector<8x256xf32>
    %cst_314 = arith.constant 0.000000e+00 : f32
    %782 = vector.broadcast %cst_314 : f32 to vector<8x256xf32>
    %783 = arith.subf %782, %762 : vector<8x256xf32>
    %784 = arith.mulf %783, %762 : vector<8x256xf32>
    %785 = math.exp %784 : vector<8x256xf32>
    %786 = arith.mulf %781, %785 : vector<8x256xf32>
    %cst_315 = arith.constant 1.000000e+00 : f32
    %787 = vector.broadcast %cst_315 : f32 to vector<8x256xf32>
    %788 = arith.subf %787, %786 : vector<8x256xf32>
    %789 = arith.mulf %761, %788 : vector<8x256xf32>
    %cst_316 = arith.constant 1.000000e+00 : f32
    %790 = vector.broadcast %cst_316 : f32 to vector<8x256xf32>
    %791 = arith.addf %790, %789 : vector<8x256xf32>
    %792 = arith.mulf %754, %791 : vector<8x256xf32>
    %793 = arith.truncf %745 : vector<8x256xf32> to vector<8x256xbf16>
    %cst_317 = arith.constant dense<0.000000e+00> : vector<8x256xf32>
    %794 = tpu.matmul %747, %793, %cst_317 {dimension_numbers = #tpu.dot_dimension_numbers<[1], [0], [0], [1], [0, 0, 1, 1], [], []>} : vector<8x8xbf16>, vector<8x256xbf16>, vector<8x256xf32> -> vector<8x256xf32>
    %c0_318 = arith.constant 0 : index
    %c8_319 = arith.constant 8 : index
    %795 = vector.load %arg2[%c0_318, %c8_319] : memref<8x12xf32, #tpu.memory_space<vmem>>, vector<8x1xf32>
    %796 = vector.broadcast %795 : vector<8x1xf32> to vector<8x256xf32>
    %797 = arith.addf %794, %796 : vector<8x256xf32>
    %cst_320 = arith.constant 5.000000e-01 : f32
    %798 = vector.broadcast %cst_320 : f32 to vector<8x256xf32>
    %799 = arith.mulf %798, %797 : vector<8x256xf32>
    %cst_321 = arith.constant 0.707106769 : f32
    %800 = vector.broadcast %cst_321 : f32 to vector<8x256xf32>
    %801 = arith.mulf %797, %800 : vector<8x256xf32>
    %cst_322 = arith.constant 0.000000e+00 : f32
    %802 = vector.broadcast %cst_322 : f32 to vector<8x256xf32>
    %803 = arith.cmpf oge, %801, %802 : vector<8x256xf32>
    %cst_323 = arith.constant 1.000000e+00 : f32
    %cst_324 = arith.constant -1.000000e+00 : f32
    %804 = vector.broadcast %cst_323 : f32 to vector<8x256xf32>
    %805 = vector.broadcast %cst_324 : f32 to vector<8x256xf32>
    %806 = arith.select %803, %804, %805 : vector<8x256xi1>, vector<8x256xf32>
    %807 = math.absf %801 : vector<8x256xf32>
    %cst_325 = arith.constant 0.327591091 : f32
    %808 = vector.broadcast %cst_325 : f32 to vector<8x256xf32>
    %809 = arith.mulf %808, %807 : vector<8x256xf32>
    %cst_326 = arith.constant 1.000000e+00 : f32
    %810 = vector.broadcast %cst_326 : f32 to vector<8x256xf32>
    %811 = arith.addf %810, %809 : vector<8x256xf32>
    %812 = tpu.reciprocal %811 {approx = true} : vector<8x256xf32> -> vector<8x256xf32>
    %cst_327 = arith.constant 1.06140542 : f32
    %813 = vector.broadcast %cst_327 : f32 to vector<8x256xf32>
    %814 = arith.mulf %813, %812 : vector<8x256xf32>
    %cst_328 = arith.constant -1.45315206 : f32
    %815 = vector.broadcast %cst_328 : f32 to vector<8x256xf32>
    %816 = arith.addf %814, %815 : vector<8x256xf32>
    %817 = arith.mulf %816, %812 : vector<8x256xf32>
    %cst_329 = arith.constant 1.42141378 : f32
    %818 = vector.broadcast %cst_329 : f32 to vector<8x256xf32>
    %819 = arith.addf %817, %818 : vector<8x256xf32>
    %820 = arith.mulf %819, %812 : vector<8x256xf32>
    %cst_330 = arith.constant -0.284496725 : f32
    %821 = vector.broadcast %cst_330 : f32 to vector<8x256xf32>
    %822 = arith.addf %820, %821 : vector<8x256xf32>
    %823 = arith.mulf %822, %812 : vector<8x256xf32>
    %cst_331 = arith.constant 0.254829586 : f32
    %824 = vector.broadcast %cst_331 : f32 to vector<8x256xf32>
    %825 = arith.addf %823, %824 : vector<8x256xf32>
    %826 = arith.mulf %825, %812 : vector<8x256xf32>
    %cst_332 = arith.constant 0.000000e+00 : f32
    %827 = vector.broadcast %cst_332 : f32 to vector<8x256xf32>
    %828 = arith.subf %827, %807 : vector<8x256xf32>
    %829 = arith.mulf %828, %807 : vector<8x256xf32>
    %830 = math.exp %829 : vector<8x256xf32>
    %831 = arith.mulf %826, %830 : vector<8x256xf32>
    %cst_333 = arith.constant 1.000000e+00 : f32
    %832 = vector.broadcast %cst_333 : f32 to vector<8x256xf32>
    %833 = arith.subf %832, %831 : vector<8x256xf32>
    %834 = arith.mulf %806, %833 : vector<8x256xf32>
    %cst_334 = arith.constant 1.000000e+00 : f32
    %835 = vector.broadcast %cst_334 : f32 to vector<8x256xf32>
    %836 = arith.addf %835, %834 : vector<8x256xf32>
    %837 = arith.mulf %799, %836 : vector<8x256xf32>
    %c0_335 = arith.constant 0 : index
    %c9_336 = arith.constant 9 : index
    %838 = vector.load %arg2[%c0_335, %c9_336] : memref<8x12xf32, #tpu.memory_space<vmem>>, vector<8x1xf32>
    %839 = vector.broadcast %838 : vector<8x1xf32> to vector<8x256xf32>
    %840 = arith.mulf %792, %839 : vector<8x256xf32>
    %cst_337 = arith.constant dense<0.000000e+00> : vector<256xf32>
    %841 = vector.multi_reduction <add>, %840, %cst_337 [0] : vector<8x256xf32> to vector<256xf32>
    %842 = vector.shape_cast %841 : vector<256xf32> to vector<1x256xf32>
    %c0_338 = arith.constant 0 : index
    %c0_339 = arith.constant 0 : index
    %843 = vector.load %arg6[%c0_338, %c0_339] : memref<2x8xf32, #tpu.memory_space<vmem>>, vector<1x1xf32>
    %844 = vector.broadcast %843 : vector<1x1xf32> to vector<1x256xf32>
    %845 = arith.addf %842, %844 : vector<1x256xf32>
    %c0_340 = arith.constant 0 : index
    %c10_341 = arith.constant 10 : index
    %846 = vector.load %arg2[%c0_340, %c10_341] : memref<8x12xf32, #tpu.memory_space<vmem>>, vector<8x1xf32>
    %847 = vector.broadcast %846 : vector<8x1xf32> to vector<8x256xf32>
    %848 = arith.mulf %837, %847 : vector<8x256xf32>
    %cst_342 = arith.constant dense<0.000000e+00> : vector<256xf32>
    %849 = vector.multi_reduction <add>, %848, %cst_342 [0] : vector<8x256xf32> to vector<256xf32>
    %850 = vector.shape_cast %849 : vector<256xf32> to vector<1x256xf32>
    %c0_343 = arith.constant 0 : index
    %c1_344 = arith.constant 1 : index
    %851 = vector.load %arg6[%c0_343, %c1_344] : memref<2x8xf32, #tpu.memory_space<vmem>>, vector<1x1xf32>
    %852 = vector.broadcast %851 : vector<1x1xf32> to vector<1x256xf32>
    %853 = arith.addf %850, %852 : vector<1x256xf32>
    %c0_345 = arith.constant 0 : index
    %c128_346 = arith.constant 128 : index
    %854 = vector.load %arg10[%c0_345, %c128_346] : memref<2x512xf32, #tpu.memory_space<vmem>>, vector<1x256xf32>
    tpu.vector_store %arg10[%c0_345, %c128_346], %845 {strides = array<i32>} : memref<2x512xf32, #tpu.memory_space<vmem>>, vector<1x256xf32>,
    %c1_347 = arith.constant 1 : index
    %c128_348 = arith.constant 128 : index
    %855 = vector.load %arg10[%c1_347, %c128_348] : memref<2x512xf32, #tpu.memory_space<vmem>>, vector<1x256xf32>
    tpu.vector_store %arg10[%c1_347, %c128_348], %853 {strides = array<i32>} : memref<2x512xf32, #tpu.memory_space<vmem>>, vector<1x256xf32>,
    %c0_349 = arith.constant 0 : index
    %c77_350 = arith.constant 77 : index
    %856 = vector.load %arg10[%c0_349, %c77_350] : memref<2x512xf32, #tpu.memory_space<vmem>>, vector<2x262xf32>
    %c0_351 = arith.constant 0 : index
    %c93_352 = arith.constant 93 : index
    %857 = vector.load %arg10[%c0_351, %c93_352] : memref<2x512xf32, #tpu.memory_space<vmem>>, vector<2x262xf32>
    %c0_353 = arith.constant 0 : index
    %c109_354 = arith.constant 109 : index
    %858 = vector.load %arg10[%c0_353, %c109_354] : memref<2x512xf32, #tpu.memory_space<vmem>>, vector<2x262xf32>
    %c0_355 = arith.constant 0 : index
    %c125_356 = arith.constant 125 : index
    %859 = vector.load %arg10[%c0_355, %c125_356] : memref<2x512xf32, #tpu.memory_space<vmem>>, vector<2x262xf32>
    %c0_357 = arith.constant 0 : index
    %c141_358 = arith.constant 141 : index
    %860 = vector.load %arg10[%c0_357, %c141_358] : memref<2x512xf32, #tpu.memory_space<vmem>>, vector<2x262xf32>
    %c0_359 = arith.constant 0 : index
    %c157_360 = arith.constant 157 : index
    %861 = vector.load %arg10[%c0_359, %c157_360] : memref<2x512xf32, #tpu.memory_space<vmem>>, vector<2x262xf32>
    %c0_361 = arith.constant 0 : index
    %c173_362 = arith.constant 173 : index
    %862 = vector.load %arg10[%c0_361, %c173_362] : memref<2x512xf32, #tpu.memory_space<vmem>>, vector<2x262xf32>
    %cst_363 = arith.constant 0.000000e+00 : f32
    %863 = vector.broadcast %cst_363 : f32 to vector<2x256xf32>
    %cst_364 = arith.constant 0.000000e+00 : f32
    %864 = vector.broadcast %cst_364 : f32 to vector<2x256xf32>
    %865 = vector.extract_strided_slice %856 {offsets = [0, 0], sizes = [2, 256], strides = [1, 1]} : vector<2x262xf32> to vector<2x256xf32>
    %c0_365 = arith.constant 0 : index
    %c0_366 = arith.constant 0 : index
    %866 = vector.load %arg5[%c0_365, %c0_366] : memref<2x49xf32, #tpu.memory_space<vmem>>, vector<2x1xf32>
    %867 = vector.broadcast %866 : vector<2x1xf32> to vector<2x256xf32>
    %868 = arith.mulf %865, %867 : vector<2x256xf32>
    %869 = arith.addf %864, %868 : vector<2x256xf32>
    %870 = vector.extract_strided_slice %857 {offsets = [0, 0], sizes = [2, 256], strides = [1, 1]} : vector<2x262xf32> to vector<2x256xf32>
    %c0_367 = arith.constant 0 : index
    %c7_368 = arith.constant 7 : index
    %871 = vector.load %arg5[%c0_367, %c7_368] : memref<2x49xf32, #tpu.memory_space<vmem>>, vector<2x1xf32>
    %872 = vector.broadcast %871 : vector<2x1xf32> to vector<2x256xf32>
    %873 = arith.mulf %870, %872 : vector<2x256xf32>
    %874 = arith.addf %869, %873 : vector<2x256xf32>
    %875 = vector.extract_strided_slice %858 {offsets = [0, 0], sizes = [2, 256], strides = [1, 1]} : vector<2x262xf32> to vector<2x256xf32>
    %c0_369 = arith.constant 0 : index
    %c14_370 = arith.constant 14 : index
    %876 = vector.load %arg5[%c0_369, %c14_370] : memref<2x49xf32, #tpu.memory_space<vmem>>, vector<2x1xf32>
    %877 = vector.broadcast %876 : vector<2x1xf32> to vector<2x256xf32>
    %878 = arith.mulf %875, %877 : vector<2x256xf32>
    %879 = arith.addf %874, %878 : vector<2x256xf32>
    %880 = vector.extract_strided_slice %859 {offsets = [0, 0], sizes = [2, 256], strides = [1, 1]} : vector<2x262xf32> to vector<2x256xf32>
    %c0_371 = arith.constant 0 : index
    %c21_372 = arith.constant 21 : index
    %881 = vector.load %arg5[%c0_371, %c21_372] : memref<2x49xf32, #tpu.memory_space<vmem>>, vector<2x1xf32>
    %882 = vector.broadcast %881 : vector<2x1xf32> to vector<2x256xf32>
    %883 = arith.mulf %880, %882 : vector<2x256xf32>
    %884 = arith.addf %879, %883 : vector<2x256xf32>
    %885 = vector.extract_strided_slice %860 {offsets = [0, 0], sizes = [2, 256], strides = [1, 1]} : vector<2x262xf32> to vector<2x256xf32>
    %c0_373 = arith.constant 0 : index
    %c28_374 = arith.constant 28 : index
    %886 = vector.load %arg5[%c0_373, %c28_374] : memref<2x49xf32, #tpu.memory_space<vmem>>, vector<2x1xf32>
    %887 = vector.broadcast %886 : vector<2x1xf32> to vector<2x256xf32>
    %888 = arith.mulf %885, %887 : vector<2x256xf32>
    %889 = arith.addf %884, %888 : vector<2x256xf32>
    %890 = vector.extract_strided_slice %861 {offsets = [0, 0], sizes = [2, 256], strides = [1, 1]} : vector<2x262xf32> to vector<2x256xf32>
    %c0_375 = arith.constant 0 : index
    %c35_376 = arith.constant 35 : index
    %891 = vector.load %arg5[%c0_375, %c35_376] : memref<2x49xf32, #tpu.memory_space<vmem>>, vector<2x1xf32>
    %892 = vector.broadcast %891 : vector<2x1xf32> to vector<2x256xf32>
    %893 = arith.mulf %890, %892 : vector<2x256xf32>
    %894 = arith.addf %889, %893 : vector<2x256xf32>
    %895 = vector.extract_strided_slice %862 {offsets = [0, 0], sizes = [2, 256], strides = [1, 1]} : vector<2x262xf32> to vector<2x256xf32>
    %c0_377 = arith.constant 0 : index
    %c42_378 = arith.constant 42 : index
    %896 = vector.load %arg5[%c0_377, %c42_378] : memref<2x49xf32, #tpu.memory_space<vmem>>, vector<2x1xf32>
    %897 = vector.broadcast %896 : vector<2x1xf32> to vector<2x256xf32>
    %898 = arith.mulf %895, %897 : vector<2x256xf32>
    %899 = arith.addf %894, %898 : vector<2x256xf32>
    %c0_379 = arith.constant 0 : index
    %c0_380 = arith.constant 0 : index
    %900 = vector.load %arg7[%c0_379, %c0_380] : memref<7x256xf32, #tpu.memory_space<vmem>>, vector<1x256xf32>
    %901 = vector.broadcast %900 : vector<1x256xf32> to vector<2x256xf32>
    %902 = arith.mulf %899, %901 : vector<2x256xf32>
    %903 = arith.addf %863, %902 : vector<2x256xf32>
    %cst_381 = arith.constant 0.000000e+00 : f32
    %904 = vector.broadcast %cst_381 : f32 to vector<2x256xf32>
    %905 = vector.extract_strided_slice %856 {offsets = [0, 1], sizes = [2, 256], strides = [1, 1]} : vector<2x262xf32> to vector<2x256xf32>
    %c0_382 = arith.constant 0 : index
    %c1_383 = arith.constant 1 : index
    %906 = vector.load %arg5[%c0_382, %c1_383] : memref<2x49xf32, #tpu.memory_space<vmem>>, vector<2x1xf32>
    %907 = vector.broadcast %906 : vector<2x1xf32> to vector<2x256xf32>
    %908 = arith.mulf %905, %907 : vector<2x256xf32>
    %909 = arith.addf %904, %908 : vector<2x256xf32>
    %910 = vector.extract_strided_slice %857 {offsets = [0, 1], sizes = [2, 256], strides = [1, 1]} : vector<2x262xf32> to vector<2x256xf32>
    %c0_384 = arith.constant 0 : index
    %c8_385 = arith.constant 8 : index
    %911 = vector.load %arg5[%c0_384, %c8_385] : memref<2x49xf32, #tpu.memory_space<vmem>>, vector<2x1xf32>
    %912 = vector.broadcast %911 : vector<2x1xf32> to vector<2x256xf32>
    %913 = arith.mulf %910, %912 : vector<2x256xf32>
    %914 = arith.addf %909, %913 : vector<2x256xf32>
    %915 = vector.extract_strided_slice %858 {offsets = [0, 1], sizes = [2, 256], strides = [1, 1]} : vector<2x262xf32> to vector<2x256xf32>
    %c0_386 = arith.constant 0 : index
    %c15_387 = arith.constant 15 : index
    %916 = vector.load %arg5[%c0_386, %c15_387] : memref<2x49xf32, #tpu.memory_space<vmem>>, vector<2x1xf32>
    %917 = vector.broadcast %916 : vector<2x1xf32> to vector<2x256xf32>
    %918 = arith.mulf %915, %917 : vector<2x256xf32>
    %919 = arith.addf %914, %918 : vector<2x256xf32>
    %920 = vector.extract_strided_slice %859 {offsets = [0, 1], sizes = [2, 256], strides = [1, 1]} : vector<2x262xf32> to vector<2x256xf32>
    %c0_388 = arith.constant 0 : index
    %c22_389 = arith.constant 22 : index
    %921 = vector.load %arg5[%c0_388, %c22_389] : memref<2x49xf32, #tpu.memory_space<vmem>>, vector<2x1xf32>
    %922 = vector.broadcast %921 : vector<2x1xf32> to vector<2x256xf32>
    %923 = arith.mulf %920, %922 : vector<2x256xf32>
    %924 = arith.addf %919, %923 : vector<2x256xf32>
    %925 = vector.extract_strided_slice %860 {offsets = [0, 1], sizes = [2, 256], strides = [1, 1]} : vector<2x262xf32> to vector<2x256xf32>
    %c0_390 = arith.constant 0 : index
    %c29_391 = arith.constant 29 : index
    %926 = vector.load %arg5[%c0_390, %c29_391] : memref<2x49xf32, #tpu.memory_space<vmem>>, vector<2x1xf32>
    %927 = vector.broadcast %926 : vector<2x1xf32> to vector<2x256xf32>
    %928 = arith.mulf %925, %927 : vector<2x256xf32>
    %929 = arith.addf %924, %928 : vector<2x256xf32>
    %930 = vector.extract_strided_slice %861 {offsets = [0, 1], sizes = [2, 256], strides = [1, 1]} : vector<2x262xf32> to vector<2x256xf32>
    %c0_392 = arith.constant 0 : index
    %c36_393 = arith.constant 36 : index
    %931 = vector.load %arg5[%c0_392, %c36_393] : memref<2x49xf32, #tpu.memory_space<vmem>>, vector<2x1xf32>
    %932 = vector.broadcast %931 : vector<2x1xf32> to vector<2x256xf32>
    %933 = arith.mulf %930, %932 : vector<2x256xf32>
    %934 = arith.addf %929, %933 : vector<2x256xf32>
    %935 = vector.extract_strided_slice %862 {offsets = [0, 1], sizes = [2, 256], strides = [1, 1]} : vector<2x262xf32> to vector<2x256xf32>
    %c0_394 = arith.constant 0 : index
    %c43_395 = arith.constant 43 : index
    %936 = vector.load %arg5[%c0_394, %c43_395] : memref<2x49xf32, #tpu.memory_space<vmem>>, vector<2x1xf32>
    %937 = vector.broadcast %936 : vector<2x1xf32> to vector<2x256xf32>
    %938 = arith.mulf %935, %937 : vector<2x256xf32>
    %939 = arith.addf %934, %938 : vector<2x256xf32>
    %c1_396 = arith.constant 1 : index
    %c0_397 = arith.constant 0 : index
    %940 = vector.load %arg7[%c1_396, %c0_397] : memref<7x256xf32, #tpu.memory_space<vmem>>, vector<1x256xf32>
    %941 = vector.broadcast %940 : vector<1x256xf32> to vector<2x256xf32>
    %942 = arith.mulf %939, %941 : vector<2x256xf32>
    %943 = arith.addf %903, %942 : vector<2x256xf32>
    %cst_398 = arith.constant 0.000000e+00 : f32
    %944 = vector.broadcast %cst_398 : f32 to vector<2x256xf32>
    %945 = vector.extract_strided_slice %856 {offsets = [0, 2], sizes = [2, 256], strides = [1, 1]} : vector<2x262xf32> to vector<2x256xf32>
    %c0_399 = arith.constant 0 : index
    %c2_400 = arith.constant 2 : index
    %946 = vector.load %arg5[%c0_399, %c2_400] : memref<2x49xf32, #tpu.memory_space<vmem>>, vector<2x1xf32>
    %947 = vector.broadcast %946 : vector<2x1xf32> to vector<2x256xf32>
    %948 = arith.mulf %945, %947 : vector<2x256xf32>
    %949 = arith.addf %944, %948 : vector<2x256xf32>
    %950 = vector.extract_strided_slice %857 {offsets = [0, 2], sizes = [2, 256], strides = [1, 1]} : vector<2x262xf32> to vector<2x256xf32>
    %c0_401 = arith.constant 0 : index
    %c9_402 = arith.constant 9 : index
    %951 = vector.load %arg5[%c0_401, %c9_402] : memref<2x49xf32, #tpu.memory_space<vmem>>, vector<2x1xf32>
    %952 = vector.broadcast %951 : vector<2x1xf32> to vector<2x256xf32>
    %953 = arith.mulf %950, %952 : vector<2x256xf32>
    %954 = arith.addf %949, %953 : vector<2x256xf32>
    %955 = vector.extract_strided_slice %858 {offsets = [0, 2], sizes = [2, 256], strides = [1, 1]} : vector<2x262xf32> to vector<2x256xf32>
    %c0_403 = arith.constant 0 : index
    %c16_404 = arith.constant 16 : index
    %956 = vector.load %arg5[%c0_403, %c16_404] : memref<2x49xf32, #tpu.memory_space<vmem>>, vector<2x1xf32>
    %957 = vector.broadcast %956 : vector<2x1xf32> to vector<2x256xf32>
    %958 = arith.mulf %955, %957 : vector<2x256xf32>
    %959 = arith.addf %954, %958 : vector<2x256xf32>
    %960 = vector.extract_strided_slice %859 {offsets = [0, 2], sizes = [2, 256], strides = [1, 1]} : vector<2x262xf32> to vector<2x256xf32>
    %c0_405 = arith.constant 0 : index
    %c23_406 = arith.constant 23 : index
    %961 = vector.load %arg5[%c0_405, %c23_406] : memref<2x49xf32, #tpu.memory_space<vmem>>, vector<2x1xf32>
    %962 = vector.broadcast %961 : vector<2x1xf32> to vector<2x256xf32>
    %963 = arith.mulf %960, %962 : vector<2x256xf32>
    %964 = arith.addf %959, %963 : vector<2x256xf32>
    %965 = vector.extract_strided_slice %860 {offsets = [0, 2], sizes = [2, 256], strides = [1, 1]} : vector<2x262xf32> to vector<2x256xf32>
    %c0_407 = arith.constant 0 : index
    %c30_408 = arith.constant 30 : index
    %966 = vector.load %arg5[%c0_407, %c30_408] : memref<2x49xf32, #tpu.memory_space<vmem>>, vector<2x1xf32>
    %967 = vector.broadcast %966 : vector<2x1xf32> to vector<2x256xf32>
    %968 = arith.mulf %965, %967 : vector<2x256xf32>
    %969 = arith.addf %964, %968 : vector<2x256xf32>
    %970 = vector.extract_strided_slice %861 {offsets = [0, 2], sizes = [2, 256], strides = [1, 1]} : vector<2x262xf32> to vector<2x256xf32>
    %c0_409 = arith.constant 0 : index
    %c37_410 = arith.constant 37 : index
    %971 = vector.load %arg5[%c0_409, %c37_410] : memref<2x49xf32, #tpu.memory_space<vmem>>, vector<2x1xf32>
    %972 = vector.broadcast %971 : vector<2x1xf32> to vector<2x256xf32>
    %973 = arith.mulf %970, %972 : vector<2x256xf32>
    %974 = arith.addf %969, %973 : vector<2x256xf32>
    %975 = vector.extract_strided_slice %862 {offsets = [0, 2], sizes = [2, 256], strides = [1, 1]} : vector<2x262xf32> to vector<2x256xf32>
    %c0_411 = arith.constant 0 : index
    %c44_412 = arith.constant 44 : index
    %976 = vector.load %arg5[%c0_411, %c44_412] : memref<2x49xf32, #tpu.memory_space<vmem>>, vector<2x1xf32>
    %977 = vector.broadcast %976 : vector<2x1xf32> to vector<2x256xf32>
    %978 = arith.mulf %975, %977 : vector<2x256xf32>
    %979 = arith.addf %974, %978 : vector<2x256xf32>
    %c2_413 = arith.constant 2 : index
    %c0_414 = arith.constant 0 : index
    %980 = vector.load %arg7[%c2_413, %c0_414] : memref<7x256xf32, #tpu.memory_space<vmem>>, vector<1x256xf32>
    %981 = vector.broadcast %980 : vector<1x256xf32> to vector<2x256xf32>
    %982 = arith.mulf %979, %981 : vector<2x256xf32>
    %983 = arith.addf %943, %982 : vector<2x256xf32>
    %cst_415 = arith.constant 0.000000e+00 : f32
    %984 = vector.broadcast %cst_415 : f32 to vector<2x256xf32>
    %985 = vector.extract_strided_slice %856 {offsets = [0, 3], sizes = [2, 256], strides = [1, 1]} : vector<2x262xf32> to vector<2x256xf32>
    %c0_416 = arith.constant 0 : index
    %c3_417 = arith.constant 3 : index
    %986 = vector.load %arg5[%c0_416, %c3_417] : memref<2x49xf32, #tpu.memory_space<vmem>>, vector<2x1xf32>
    %987 = vector.broadcast %986 : vector<2x1xf32> to vector<2x256xf32>
    %988 = arith.mulf %985, %987 : vector<2x256xf32>
    %989 = arith.addf %984, %988 : vector<2x256xf32>
    %990 = vector.extract_strided_slice %857 {offsets = [0, 3], sizes = [2, 256], strides = [1, 1]} : vector<2x262xf32> to vector<2x256xf32>
    %c0_418 = arith.constant 0 : index
    %c10_419 = arith.constant 10 : index
    %991 = vector.load %arg5[%c0_418, %c10_419] : memref<2x49xf32, #tpu.memory_space<vmem>>, vector<2x1xf32>
    %992 = vector.broadcast %991 : vector<2x1xf32> to vector<2x256xf32>
    %993 = arith.mulf %990, %992 : vector<2x256xf32>
    %994 = arith.addf %989, %993 : vector<2x256xf32>
    %995 = vector.extract_strided_slice %858 {offsets = [0, 3], sizes = [2, 256], strides = [1, 1]} : vector<2x262xf32> to vector<2x256xf32>
    %c0_420 = arith.constant 0 : index
    %c17_421 = arith.constant 17 : index
    %996 = vector.load %arg5[%c0_420, %c17_421] : memref<2x49xf32, #tpu.memory_space<vmem>>, vector<2x1xf32>
    %997 = vector.broadcast %996 : vector<2x1xf32> to vector<2x256xf32>
    %998 = arith.mulf %995, %997 : vector<2x256xf32>
    %999 = arith.addf %994, %998 : vector<2x256xf32>
    %1000 = vector.extract_strided_slice %859 {offsets = [0, 3], sizes = [2, 256], strides = [1, 1]} : vector<2x262xf32> to vector<2x256xf32>
    %c0_422 = arith.constant 0 : index
    %c24_423 = arith.constant 24 : index
    %1001 = vector.load %arg5[%c0_422, %c24_423] : memref<2x49xf32, #tpu.memory_space<vmem>>, vector<2x1xf32>
    %1002 = vector.broadcast %1001 : vector<2x1xf32> to vector<2x256xf32>
    %1003 = arith.mulf %1000, %1002 : vector<2x256xf32>
    %1004 = arith.addf %999, %1003 : vector<2x256xf32>
    %1005 = vector.extract_strided_slice %860 {offsets = [0, 3], sizes = [2, 256], strides = [1, 1]} : vector<2x262xf32> to vector<2x256xf32>
    %c0_424 = arith.constant 0 : index
    %c31_425 = arith.constant 31 : index
    %1006 = vector.load %arg5[%c0_424, %c31_425] : memref<2x49xf32, #tpu.memory_space<vmem>>, vector<2x1xf32>
    %1007 = vector.broadcast %1006 : vector<2x1xf32> to vector<2x256xf32>
    %1008 = arith.mulf %1005, %1007 : vector<2x256xf32>
    %1009 = arith.addf %1004, %1008 : vector<2x256xf32>
    %1010 = vector.extract_strided_slice %861 {offsets = [0, 3], sizes = [2, 256], strides = [1, 1]} : vector<2x262xf32> to vector<2x256xf32>
    %c0_426 = arith.constant 0 : index
    %c38_427 = arith.constant 38 : index
    %1011 = vector.load %arg5[%c0_426, %c38_427] : memref<2x49xf32, #tpu.memory_space<vmem>>, vector<2x1xf32>
    %1012 = vector.broadcast %1011 : vector<2x1xf32> to vector<2x256xf32>
    %1013 = arith.mulf %1010, %1012 : vector<2x256xf32>
    %1014 = arith.addf %1009, %1013 : vector<2x256xf32>
    %1015 = vector.extract_strided_slice %862 {offsets = [0, 3], sizes = [2, 256], strides = [1, 1]} : vector<2x262xf32> to vector<2x256xf32>
    %c0_428 = arith.constant 0 : index
    %c45_429 = arith.constant 45 : index
    %1016 = vector.load %arg5[%c0_428, %c45_429] : memref<2x49xf32, #tpu.memory_space<vmem>>, vector<2x1xf32>
    %1017 = vector.broadcast %1016 : vector<2x1xf32> to vector<2x256xf32>
    %1018 = arith.mulf %1015, %1017 : vector<2x256xf32>
    %1019 = arith.addf %1014, %1018 : vector<2x256xf32>
    %c3_430 = arith.constant 3 : index
    %c0_431 = arith.constant 0 : index
    %1020 = vector.load %arg7[%c3_430, %c0_431] : memref<7x256xf32, #tpu.memory_space<vmem>>, vector<1x256xf32>
    %1021 = vector.broadcast %1020 : vector<1x256xf32> to vector<2x256xf32>
    %1022 = arith.mulf %1019, %1021 : vector<2x256xf32>
    %1023 = arith.addf %983, %1022 : vector<2x256xf32>
    %cst_432 = arith.constant 0.000000e+00 : f32
    %1024 = vector.broadcast %cst_432 : f32 to vector<2x256xf32>
    %1025 = vector.extract_strided_slice %856 {offsets = [0, 4], sizes = [2, 256], strides = [1, 1]} : vector<2x262xf32> to vector<2x256xf32>
    %c0_433 = arith.constant 0 : index
    %c4_434 = arith.constant 4 : index
    %1026 = vector.load %arg5[%c0_433, %c4_434] : memref<2x49xf32, #tpu.memory_space<vmem>>, vector<2x1xf32>
    %1027 = vector.broadcast %1026 : vector<2x1xf32> to vector<2x256xf32>
    %1028 = arith.mulf %1025, %1027 : vector<2x256xf32>
    %1029 = arith.addf %1024, %1028 : vector<2x256xf32>
    %1030 = vector.extract_strided_slice %857 {offsets = [0, 4], sizes = [2, 256], strides = [1, 1]} : vector<2x262xf32> to vector<2x256xf32>
    %c0_435 = arith.constant 0 : index
    %c11_436 = arith.constant 11 : index
    %1031 = vector.load %arg5[%c0_435, %c11_436] : memref<2x49xf32, #tpu.memory_space<vmem>>, vector<2x1xf32>
    %1032 = vector.broadcast %1031 : vector<2x1xf32> to vector<2x256xf32>
    %1033 = arith.mulf %1030, %1032 : vector<2x256xf32>
    %1034 = arith.addf %1029, %1033 : vector<2x256xf32>
    %1035 = vector.extract_strided_slice %858 {offsets = [0, 4], sizes = [2, 256], strides = [1, 1]} : vector<2x262xf32> to vector<2x256xf32>
    %c0_437 = arith.constant 0 : index
    %c18_438 = arith.constant 18 : index
    %1036 = vector.load %arg5[%c0_437, %c18_438] : memref<2x49xf32, #tpu.memory_space<vmem>>, vector<2x1xf32>
    %1037 = vector.broadcast %1036 : vector<2x1xf32> to vector<2x256xf32>
    %1038 = arith.mulf %1035, %1037 : vector<2x256xf32>
    %1039 = arith.addf %1034, %1038 : vector<2x256xf32>
    %1040 = vector.extract_strided_slice %859 {offsets = [0, 4], sizes = [2, 256], strides = [1, 1]} : vector<2x262xf32> to vector<2x256xf32>
    %c0_439 = arith.constant 0 : index
    %c25_440 = arith.constant 25 : index
    %1041 = vector.load %arg5[%c0_439, %c25_440] : memref<2x49xf32, #tpu.memory_space<vmem>>, vector<2x1xf32>
    %1042 = vector.broadcast %1041 : vector<2x1xf32> to vector<2x256xf32>
    %1043 = arith.mulf %1040, %1042 : vector<2x256xf32>
    %1044 = arith.addf %1039, %1043 : vector<2x256xf32>
    %1045 = vector.extract_strided_slice %860 {offsets = [0, 4], sizes = [2, 256], strides = [1, 1]} : vector<2x262xf32> to vector<2x256xf32>
    %c0_441 = arith.constant 0 : index
    %c32_442 = arith.constant 32 : index
    %1046 = vector.load %arg5[%c0_441, %c32_442] : memref<2x49xf32, #tpu.memory_space<vmem>>, vector<2x1xf32>
    %1047 = vector.broadcast %1046 : vector<2x1xf32> to vector<2x256xf32>
    %1048 = arith.mulf %1045, %1047 : vector<2x256xf32>
    %1049 = arith.addf %1044, %1048 : vector<2x256xf32>
    %1050 = vector.extract_strided_slice %861 {offsets = [0, 4], sizes = [2, 256], strides = [1, 1]} : vector<2x262xf32> to vector<2x256xf32>
    %c0_443 = arith.constant 0 : index
    %c39_444 = arith.constant 39 : index
    %1051 = vector.load %arg5[%c0_443, %c39_444] : memref<2x49xf32, #tpu.memory_space<vmem>>, vector<2x1xf32>
    %1052 = vector.broadcast %1051 : vector<2x1xf32> to vector<2x256xf32>
    %1053 = arith.mulf %1050, %1052 : vector<2x256xf32>
    %1054 = arith.addf %1049, %1053 : vector<2x256xf32>
    %1055 = vector.extract_strided_slice %862 {offsets = [0, 4], sizes = [2, 256], strides = [1, 1]} : vector<2x262xf32> to vector<2x256xf32>
    %c0_445 = arith.constant 0 : index
    %c46_446 = arith.constant 46 : index
    %1056 = vector.load %arg5[%c0_445, %c46_446] : memref<2x49xf32, #tpu.memory_space<vmem>>, vector<2x1xf32>
    %1057 = vector.broadcast %1056 : vector<2x1xf32> to vector<2x256xf32>
    %1058 = arith.mulf %1055, %1057 : vector<2x256xf32>
    %1059 = arith.addf %1054, %1058 : vector<2x256xf32>
    %c4_447 = arith.constant 4 : index
    %c0_448 = arith.constant 0 : index
    %1060 = vector.load %arg7[%c4_447, %c0_448] : memref<7x256xf32, #tpu.memory_space<vmem>>, vector<1x256xf32>
    %1061 = vector.broadcast %1060 : vector<1x256xf32> to vector<2x256xf32>
    %1062 = arith.mulf %1059, %1061 : vector<2x256xf32>
    %1063 = arith.addf %1023, %1062 : vector<2x256xf32>
    %cst_449 = arith.constant 0.000000e+00 : f32
    %1064 = vector.broadcast %cst_449 : f32 to vector<2x256xf32>
    %1065 = vector.extract_strided_slice %856 {offsets = [0, 5], sizes = [2, 256], strides = [1, 1]} : vector<2x262xf32> to vector<2x256xf32>
    %c0_450 = arith.constant 0 : index
    %c5_451 = arith.constant 5 : index
    %1066 = vector.load %arg5[%c0_450, %c5_451] : memref<2x49xf32, #tpu.memory_space<vmem>>, vector<2x1xf32>
    %1067 = vector.broadcast %1066 : vector<2x1xf32> to vector<2x256xf32>
    %1068 = arith.mulf %1065, %1067 : vector<2x256xf32>
    %1069 = arith.addf %1064, %1068 : vector<2x256xf32>
    %1070 = vector.extract_strided_slice %857 {offsets = [0, 5], sizes = [2, 256], strides = [1, 1]} : vector<2x262xf32> to vector<2x256xf32>
    %c0_452 = arith.constant 0 : index
    %c12_453 = arith.constant 12 : index
    %1071 = vector.load %arg5[%c0_452, %c12_453] : memref<2x49xf32, #tpu.memory_space<vmem>>, vector<2x1xf32>
    %1072 = vector.broadcast %1071 : vector<2x1xf32> to vector<2x256xf32>
    %1073 = arith.mulf %1070, %1072 : vector<2x256xf32>
    %1074 = arith.addf %1069, %1073 : vector<2x256xf32>
    %1075 = vector.extract_strided_slice %858 {offsets = [0, 5], sizes = [2, 256], strides = [1, 1]} : vector<2x262xf32> to vector<2x256xf32>
    %c0_454 = arith.constant 0 : index
    %c19_455 = arith.constant 19 : index
    %1076 = vector.load %arg5[%c0_454, %c19_455] : memref<2x49xf32, #tpu.memory_space<vmem>>, vector<2x1xf32>
    %1077 = vector.broadcast %1076 : vector<2x1xf32> to vector<2x256xf32>
    %1078 = arith.mulf %1075, %1077 : vector<2x256xf32>
    %1079 = arith.addf %1074, %1078 : vector<2x256xf32>
    %1080 = vector.extract_strided_slice %859 {offsets = [0, 5], sizes = [2, 256], strides = [1, 1]} : vector<2x262xf32> to vector<2x256xf32>
    %c0_456 = arith.constant 0 : index
    %c26_457 = arith.constant 26 : index
    %1081 = vector.load %arg5[%c0_456, %c26_457] : memref<2x49xf32, #tpu.memory_space<vmem>>, vector<2x1xf32>
    %1082 = vector.broadcast %1081 : vector<2x1xf32> to vector<2x256xf32>
    %1083 = arith.mulf %1080, %1082 : vector<2x256xf32>
    %1084 = arith.addf %1079, %1083 : vector<2x256xf32>
    %1085 = vector.extract_strided_slice %860 {offsets = [0, 5], sizes = [2, 256], strides = [1, 1]} : vector<2x262xf32> to vector<2x256xf32>
    %c0_458 = arith.constant 0 : index
    %c33_459 = arith.constant 33 : index
    %1086 = vector.load %arg5[%c0_458, %c33_459] : memref<2x49xf32, #tpu.memory_space<vmem>>, vector<2x1xf32>
    %1087 = vector.broadcast %1086 : vector<2x1xf32> to vector<2x256xf32>
    %1088 = arith.mulf %1085, %1087 : vector<2x256xf32>
    %1089 = arith.addf %1084, %1088 : vector<2x256xf32>
    %1090 = vector.extract_strided_slice %861 {offsets = [0, 5], sizes = [2, 256], strides = [1, 1]} : vector<2x262xf32> to vector<2x256xf32>
    %c0_460 = arith.constant 0 : index
    %c40_461 = arith.constant 40 : index
    %1091 = vector.load %arg5[%c0_460, %c40_461] : memref<2x49xf32, #tpu.memory_space<vmem>>, vector<2x1xf32>
    %1092 = vector.broadcast %1091 : vector<2x1xf32> to vector<2x256xf32>
    %1093 = arith.mulf %1090, %1092 : vector<2x256xf32>
    %1094 = arith.addf %1089, %1093 : vector<2x256xf32>
    %1095 = vector.extract_strided_slice %862 {offsets = [0, 5], sizes = [2, 256], strides = [1, 1]} : vector<2x262xf32> to vector<2x256xf32>
    %c0_462 = arith.constant 0 : index
    %c47_463 = arith.constant 47 : index
    %1096 = vector.load %arg5[%c0_462, %c47_463] : memref<2x49xf32, #tpu.memory_space<vmem>>, vector<2x1xf32>
    %1097 = vector.broadcast %1096 : vector<2x1xf32> to vector<2x256xf32>
    %1098 = arith.mulf %1095, %1097 : vector<2x256xf32>
    %1099 = arith.addf %1094, %1098 : vector<2x256xf32>
    %c5_464 = arith.constant 5 : index
    %c0_465 = arith.constant 0 : index
    %1100 = vector.load %arg7[%c5_464, %c0_465] : memref<7x256xf32, #tpu.memory_space<vmem>>, vector<1x256xf32>
    %1101 = vector.broadcast %1100 : vector<1x256xf32> to vector<2x256xf32>
    %1102 = arith.mulf %1099, %1101 : vector<2x256xf32>
    %1103 = arith.addf %1063, %1102 : vector<2x256xf32>
    %cst_466 = arith.constant 0.000000e+00 : f32
    %1104 = vector.broadcast %cst_466 : f32 to vector<2x256xf32>
    %1105 = vector.extract_strided_slice %856 {offsets = [0, 6], sizes = [2, 256], strides = [1, 1]} : vector<2x262xf32> to vector<2x256xf32>
    %c0_467 = arith.constant 0 : index
    %c6_468 = arith.constant 6 : index
    %1106 = vector.load %arg5[%c0_467, %c6_468] : memref<2x49xf32, #tpu.memory_space<vmem>>, vector<2x1xf32>
    %1107 = vector.broadcast %1106 : vector<2x1xf32> to vector<2x256xf32>
    %1108 = arith.mulf %1105, %1107 : vector<2x256xf32>
    %1109 = arith.addf %1104, %1108 : vector<2x256xf32>
    %1110 = vector.extract_strided_slice %857 {offsets = [0, 6], sizes = [2, 256], strides = [1, 1]} : vector<2x262xf32> to vector<2x256xf32>
    %c0_469 = arith.constant 0 : index
    %c13_470 = arith.constant 13 : index
    %1111 = vector.load %arg5[%c0_469, %c13_470] : memref<2x49xf32, #tpu.memory_space<vmem>>, vector<2x1xf32>
    %1112 = vector.broadcast %1111 : vector<2x1xf32> to vector<2x256xf32>
    %1113 = arith.mulf %1110, %1112 : vector<2x256xf32>
    %1114 = arith.addf %1109, %1113 : vector<2x256xf32>
    %1115 = vector.extract_strided_slice %858 {offsets = [0, 6], sizes = [2, 256], strides = [1, 1]} : vector<2x262xf32> to vector<2x256xf32>
    %c0_471 = arith.constant 0 : index
    %c20_472 = arith.constant 20 : index
    %1116 = vector.load %arg5[%c0_471, %c20_472] : memref<2x49xf32, #tpu.memory_space<vmem>>, vector<2x1xf32>
    %1117 = vector.broadcast %1116 : vector<2x1xf32> to vector<2x256xf32>
    %1118 = arith.mulf %1115, %1117 : vector<2x256xf32>
    %1119 = arith.addf %1114, %1118 : vector<2x256xf32>
    %1120 = vector.extract_strided_slice %859 {offsets = [0, 6], sizes = [2, 256], strides = [1, 1]} : vector<2x262xf32> to vector<2x256xf32>
    %c0_473 = arith.constant 0 : index
    %c27_474 = arith.constant 27 : index
    %1121 = vector.load %arg5[%c0_473, %c27_474] : memref<2x49xf32, #tpu.memory_space<vmem>>, vector<2x1xf32>
    %1122 = vector.broadcast %1121 : vector<2x1xf32> to vector<2x256xf32>
    %1123 = arith.mulf %1120, %1122 : vector<2x256xf32>
    %1124 = arith.addf %1119, %1123 : vector<2x256xf32>
    %1125 = vector.extract_strided_slice %860 {offsets = [0, 6], sizes = [2, 256], strides = [1, 1]} : vector<2x262xf32> to vector<2x256xf32>
    %c0_475 = arith.constant 0 : index
    %c34_476 = arith.constant 34 : index
    %1126 = vector.load %arg5[%c0_475, %c34_476] : memref<2x49xf32, #tpu.memory_space<vmem>>, vector<2x1xf32>
    %1127 = vector.broadcast %1126 : vector<2x1xf32> to vector<2x256xf32>
    %1128 = arith.mulf %1125, %1127 : vector<2x256xf32>
    %1129 = arith.addf %1124, %1128 : vector<2x256xf32>
    %1130 = vector.extract_strided_slice %861 {offsets = [0, 6], sizes = [2, 256], strides = [1, 1]} : vector<2x262xf32> to vector<2x256xf32>
    %c0_477 = arith.constant 0 : index
    %c41_478 = arith.constant 41 : index
    %1131 = vector.load %arg5[%c0_477, %c41_478] : memref<2x49xf32, #tpu.memory_space<vmem>>, vector<2x1xf32>
    %1132 = vector.broadcast %1131 : vector<2x1xf32> to vector<2x256xf32>
    %1133 = arith.mulf %1130, %1132 : vector<2x256xf32>
    %1134 = arith.addf %1129, %1133 : vector<2x256xf32>
    %1135 = vector.extract_strided_slice %862 {offsets = [0, 6], sizes = [2, 256], strides = [1, 1]} : vector<2x262xf32> to vector<2x256xf32>
    %c0_479 = arith.constant 0 : index
    %c48_480 = arith.constant 48 : index
    %1136 = vector.load %arg5[%c0_479, %c48_480] : memref<2x49xf32, #tpu.memory_space<vmem>>, vector<2x1xf32>
    %1137 = vector.broadcast %1136 : vector<2x1xf32> to vector<2x256xf32>
    %1138 = arith.mulf %1135, %1137 : vector<2x256xf32>
    %1139 = arith.addf %1134, %1138 : vector<2x256xf32>
    %c6_481 = arith.constant 6 : index
    %c0_482 = arith.constant 0 : index
    %1140 = vector.load %arg7[%c6_481, %c0_482] : memref<7x256xf32, #tpu.memory_space<vmem>>, vector<1x256xf32>
    %1141 = vector.broadcast %1140 : vector<1x256xf32> to vector<2x256xf32>
    %1142 = arith.mulf %1139, %1141 : vector<2x256xf32>
    %1143 = arith.addf %1103, %1142 : vector<2x256xf32>
    %cst_483 = arith.constant dense<0.000000e+00> : vector<256xf32>
    %1144 = vector.multi_reduction <add>, %1143, %cst_483 [0] : vector<2x256xf32> to vector<256xf32>
    %1145 = vector.shape_cast %1144 : vector<256xf32> to vector<1x256xf32>
    %c0_484 = arith.constant 0 : index
    %c2_485 = arith.constant 2 : index
    %1146 = vector.load %arg6[%c0_484, %c2_485] : memref<2x8xf32, #tpu.memory_space<vmem>>, vector<1x1xf32>
    %1147 = vector.broadcast %1146 : vector<1x1xf32> to vector<1x256xf32>
    %1148 = arith.addf %1145, %1147 : vector<1x256xf32>
    %cst_486 = arith.constant 0.000000e+00 : f32
    %1149 = vector.broadcast %cst_486 : f32 to vector<1x256xf32>
    %1150 = arith.subf %1149, %1148 : vector<1x256xf32>
    %1151 = math.exp %1150 : vector<1x256xf32>
    %cst_487 = arith.constant 1.000000e+00 : f32
    %1152 = vector.broadcast %cst_487 : f32 to vector<1x256xf32>
    %1153 = arith.addf %1152, %1151 : vector<1x256xf32>
    %1154 = tpu.reciprocal %1153 {approx = true} : vector<1x256xf32> -> vector<1x256xf32>
    %cst_488 = arith.constant 1.000000e+00 : f32
    %1155 = vector.broadcast %cst_488 : f32 to vector<1x256xf32>
    %1156 = arith.addf %1154, %1155 : vector<1x256xf32>
    %1157 = vector.broadcast %1156 : vector<1x256xf32> to vector<8x256xf32>
    %1158 = arith.mulf %661, %1157 : vector<8x256xf32>
    %cst_489 = arith.constant dense<0xFF800000> : vector<8xf32>
    %1159 = vector.multi_reduction <maximumf>, %1158, %cst_489 [1] : vector<8x256xf32> to vector<8xf32>
    %1160 = vector.shape_cast %1159 : vector<8xf32> to vector<8x1xf32>
    %cst_490 = arith.constant dense<0.000000e+00> : vector<8xf32>
    %1161 = vector.multi_reduction <add>, %1158, %cst_490 [1] : vector<8x256xf32> to vector<8xf32>
    %1162 = vector.shape_cast %1161 : vector<8xf32> to vector<8x1xf32>
    %cst_491 = arith.constant 3.906250e-03 : f32
    %1163 = vector.broadcast %cst_491 : f32 to vector<8x1xf32>
    %1164 = arith.mulf %1162, %1163 : vector<8x1xf32>
    %1165 = arith.addf %1160, %1164 : vector<8x1xf32>
    %c0_492 = arith.constant 0 : index
    %c48_493 = arith.constant 48 : index
    %1166 = vector.load %arg4[%c0_492, %c48_493] : memref<8x64xbf16, #tpu.memory_space<vmem>>, vector<8x8xbf16>
    %1167 = arith.extf %1166 : vector<8x8xbf16> to vector<8x8xf32>
    %c0_494 = arith.constant 0 : index
    %c56_495 = arith.constant 56 : index
    %1168 = vector.load %arg4[%c0_494, %c56_495] : memref<8x64xbf16, #tpu.memory_space<vmem>>, vector<8x8xbf16>
    %1169 = arith.extf %1168 : vector<8x8xbf16> to vector<8x8xf32>
    %1170 = vector.broadcast %1165 : vector<8x1xf32> to vector<8x8xf32>
    %1171 = arith.mulf %1167, %1170 : vector<8x8xf32>
    %cst_496 = arith.constant dense<0.000000e+00> : vector<8xf32>
    %1172 = vector.multi_reduction <add>, %1171, %cst_496 [0] : vector<8x8xf32> to vector<8xf32>
    %1173 = vector.shape_cast %1172 : vector<8xf32> to vector<1x8xf32>
    %c1_497 = arith.constant 1 : index
    %c0_498 = arith.constant 0 : index
    %1174 = vector.load %arg6[%c1_497, %c0_498] : memref<2x8xf32, #tpu.memory_space<vmem>>, vector<1x8xf32>
    %1175 = arith.addf %1173, %1174 : vector<1x8xf32>
    %cst_499 = arith.constant 5.000000e-01 : f32
    %1176 = vector.broadcast %cst_499 : f32 to vector<1x8xf32>
    %1177 = arith.mulf %1176, %1175 : vector<1x8xf32>
    %cst_500 = arith.constant 0.707106769 : f32
    %1178 = vector.broadcast %cst_500 : f32 to vector<1x8xf32>
    %1179 = arith.mulf %1175, %1178 : vector<1x8xf32>
    %cst_501 = arith.constant 0.000000e+00 : f32
    %1180 = vector.broadcast %cst_501 : f32 to vector<1x8xf32>
    %1181 = arith.cmpf oge, %1179, %1180 : vector<1x8xf32>
    %cst_502 = arith.constant 1.000000e+00 : f32
    %cst_503 = arith.constant -1.000000e+00 : f32
    %1182 = vector.broadcast %cst_502 : f32 to vector<1x8xf32>
    %1183 = vector.broadcast %cst_503 : f32 to vector<1x8xf32>
    %1184 = arith.select %1181, %1182, %1183 : vector<1x8xi1>, vector<1x8xf32>
    %1185 = math.absf %1179 : vector<1x8xf32>
    %cst_504 = arith.constant 0.327591091 : f32
    %1186 = vector.broadcast %cst_504 : f32 to vector<1x8xf32>
    %1187 = arith.mulf %1186, %1185 : vector<1x8xf32>
    %cst_505 = arith.constant 1.000000e+00 : f32
    %1188 = vector.broadcast %cst_505 : f32 to vector<1x8xf32>
    %1189 = arith.addf %1188, %1187 : vector<1x8xf32>
    %1190 = tpu.reciprocal %1189 {approx = true} : vector<1x8xf32> -> vector<1x8xf32>
    %cst_506 = arith.constant 1.06140542 : f32
    %1191 = vector.broadcast %cst_506 : f32 to vector<1x8xf32>
    %1192 = arith.mulf %1191, %1190 : vector<1x8xf32>
    %cst_507 = arith.constant -1.45315206 : f32
    %1193 = vector.broadcast %cst_507 : f32 to vector<1x8xf32>
    %1194 = arith.addf %1192, %1193 : vector<1x8xf32>
    %1195 = arith.mulf %1194, %1190 : vector<1x8xf32>
    %cst_508 = arith.constant 1.42141378 : f32
    %1196 = vector.broadcast %cst_508 : f32 to vector<1x8xf32>
    %1197 = arith.addf %1195, %1196 : vector<1x8xf32>
    %1198 = arith.mulf %1197, %1190 : vector<1x8xf32>
    %cst_509 = arith.constant -0.284496725 : f32
    %1199 = vector.broadcast %cst_509 : f32 to vector<1x8xf32>
    %1200 = arith.addf %1198, %1199 : vector<1x8xf32>
    %1201 = arith.mulf %1200, %1190 : vector<1x8xf32>
    %cst_510 = arith.constant 0.254829586 : f32
    %1202 = vector.broadcast %cst_510 : f32 to vector<1x8xf32>
    %1203 = arith.addf %1201, %1202 : vector<1x8xf32>
    %1204 = arith.mulf %1203, %1190 : vector<1x8xf32>
    %cst_511 = arith.constant 0.000000e+00 : f32
    %1205 = vector.broadcast %cst_511 : f32 to vector<1x8xf32>
    %1206 = arith.subf %1205, %1185 : vector<1x8xf32>
    %1207 = arith.mulf %1206, %1185 : vector<1x8xf32>
    %1208 = math.exp %1207 : vector<1x8xf32>
    %1209 = arith.mulf %1204, %1208 : vector<1x8xf32>
    %cst_512 = arith.constant 1.000000e+00 : f32
    %1210 = vector.broadcast %cst_512 : f32 to vector<1x8xf32>
    %1211 = arith.subf %1210, %1209 : vector<1x8xf32>
    %1212 = arith.mulf %1184, %1211 : vector<1x8xf32>
    %cst_513 = arith.constant 1.000000e+00 : f32
    %1213 = vector.broadcast %cst_513 : f32 to vector<1x8xf32>
    %1214 = arith.addf %1213, %1212 : vector<1x8xf32>
    %1215 = arith.mulf %1177, %1214 : vector<1x8xf32>
    %1216 = vector.broadcast %1215 : vector<1x8xf32> to vector<8x8xf32>
    %1217 = arith.mulf %1169, %1216 : vector<8x8xf32>
    %cst_514 = arith.constant dense<0.000000e+00> : vector<8xf32>
    %1218 = vector.multi_reduction <add>, %1217, %cst_514 [1] : vector<8x8xf32> to vector<8xf32>
    %1219 = vector.shape_cast %1218 : vector<8xf32> to vector<8x1xf32>
    %c0_515 = arith.constant 0 : index
    %c11_516 = arith.constant 11 : index
    %1220 = vector.load %arg2[%c0_515, %c11_516] : memref<8x12xf32, #tpu.memory_space<vmem>>, vector<8x1xf32>
    %1221 = arith.addf %1219, %1220 : vector<8x1xf32>
    %cst_517 = arith.constant 0.000000e+00 : f32
    %1222 = vector.broadcast %cst_517 : f32 to vector<8x1xf32>
    %1223 = arith.subf %1222, %1221 : vector<8x1xf32>
    %1224 = math.exp %1223 : vector<8x1xf32>
    %cst_518 = arith.constant 1.000000e+00 : f32
    %1225 = vector.broadcast %cst_518 : f32 to vector<8x1xf32>
    %1226 = arith.addf %1225, %1224 : vector<8x1xf32>
    %1227 = tpu.reciprocal %1226 {approx = true} : vector<8x1xf32> -> vector<8x1xf32>
    %cst_519 = arith.constant 1.000000e+00 : f32
    %1228 = vector.broadcast %cst_519 : f32 to vector<8x1xf32>
    %1229 = arith.addf %1227, %1228 : vector<8x1xf32>
    %1230 = vector.broadcast %1229 : vector<8x1xf32> to vector<8x256xf32>
    %1231 = arith.mulf %1158, %1230 : vector<8x256xf32>
    %c0_520 = arith.constant 0 : index
    %c0_521 = arith.constant 0 : index
    %c0_522 = arith.constant 0 : index
    %1232 = vector.load %arg8[%c0_520, %c0_521, %c0_522] : memref<1x8x256xf32, #tpu.memory_space<vmem>>, vector<1x8x256xf32>
    %1233 = vector.shape_cast %1232 : vector<1x8x256xf32> to vector<8x256xf32>
    %1234 = vector.shape_cast %1231 : vector<8x256xf32> to vector<1x8x256xf32>
    tpu.vector_store %arg8[%c0_520, %c0_521, %c0_522], %1234 {strides = array<i32>} : memref<1x8x256xf32, #tpu.memory_space<vmem>>, vector<1x8x256xf32>,
    return
  }
  func.func @transform_0(%arg0: i32) -> (i32, i32, i32) {
    %c0_i32 = arith.constant 0 : i32
    %c0_i32_0 = arith.constant 0 : i32
    %c0_i32_1 = arith.constant 0 : i32
    return %arg0, %c0_i32, %c0_i32_0 : i32, i32, i32
  }
  func.func @transform_1(%arg0: i32) -> (i32, i32) {
    %c0_i32 = arith.constant 0 : i32
    %c0_i32_0 = arith.constant 0 : i32
    %c0_i32_1 = arith.constant 0 : i32
    return %c0_i32, %c0_i32_0 : i32, i32
  }
  func.func @transform_2(%arg0: i32) -> (i32, i32) {
    %c0_i32 = arith.constant 0 : i32
    %c0_i32_0 = arith.constant 0 : i32
    %c0_i32_1 = arith.constant 0 : i32
    return %c0_i32, %c0_i32_0 : i32, i32
  }
  func.func @transform_3(%arg0: i32) -> (i32, i32) {
    %c0_i32 = arith.constant 0 : i32
    %c0_i32_0 = arith.constant 0 : i32
    %c0_i32_1 = arith.constant 0 : i32
    return %c0_i32, %c0_i32_0 : i32, i32
  }
  func.func @transform_4(%arg0: i32) -> (i32, i32) {
    %c0_i32 = arith.constant 0 : i32
    %c0_i32_0 = arith.constant 0 : i32
    %c0_i32_1 = arith.constant 0 : i32
    return %c0_i32, %c0_i32_0 : i32, i32
  }
  func.func @transform_5(%arg0: i32) -> (i32, i32) {
    %c0_i32 = arith.constant 0 : i32
    %c0_i32_0 = arith.constant 0 : i32
    %c0_i32_1 = arith.constant 0 : i32
    return %c0_i32, %c0_i32_0 : i32, i32
  }
  func.func @transform_6(%arg0: i32) -> (i32, i32) {
    %c0_i32 = arith.constant 0 : i32
    %c0_i32_0 = arith.constant 0 : i32
    %c0_i32_1 = arith.constant 0 : i32
    return %c0_i32, %c0_i32_0 : i32, i32
  }
  func.func @transform_7(%arg0: i32) -> (i32, i32, i32) {
    %c0_i32 = arith.constant 0 : i32
    %c0_i32_0 = arith.constant 0 : i32
    %c0_i32_1 = arith.constant 0 : i32
    return %arg0, %c0_i32, %c0_i32_0 : i32, i32, i32
  }
}

</mosaic_0001>

<llo_original>
// kernel: sfm_forward.1
$region0: #{sfm_forward.1}
  #allocation0 [shape = 'u32[]', space=smem, size = 0x4, offset = 0x4, fixed_abs, tag = 'smem constant byte address 0x4 - core index']
  #allocation1 [shape = 'u32[72,128]{1,0:T(1,128)}', space=vmem, size = 0x9000, scoped, tag = 'internal scratch']
  #allocation2 [shape = 'f32[8,512]{1,0:T(8,128)}', space=vmem, size = 0x4000, scoped, tag = 'scratch operand']
  #allocation3 [shape = 'f32[2,512]{1,0:T(2,128)}', space=vmem, size = 0x1000, scoped, tag = 'scratch operand']
  %s0 = inlined_call_operand.vmem [shape: f32[2,8,256], index: 0, kind: input, shape index: {}]
  %s1 = inlined_call_operand.vmem [shape: f32[8,12], index: 1, kind: input, shape index: {}]
  %s2 = inlined_call_operand.vmem [shape: f32[8,83], index: 2, kind: input, shape index: {}]
  %s3 = inlined_call_operand.vmem [shape: bf16[8,64], index: 3, kind: input, shape index: {}]
  %s4 = inlined_call_operand.vmem [shape: f32[2,49], index: 4, kind: input, shape index: {}]
  %s5 = inlined_call_operand.vmem [shape: f32[2,8], index: 5, kind: input, shape index: {}]
  %s6 = inlined_call_operand.vmem [shape: f32[7,256], index: 6, kind: input, shape index: {}]
  %s7 = inlined_call_operand.vmem [shape: f32[2,8,256], index: 7, kind: output, shape index: {}]
  %s8 = sld [smem:[#allocation0]]
  $region61: #{sfm_forward.1} parent=0
    _
  %s10 = ssub.s32 1, %s8
  %s11 = scalar_select 0, %s10, %s8
  loop: start=0, step=1, limit=4
  $region2: #{sfm_forward.1} parent=0 // loop_pre_header
    _
  $region3: #{sfm_forward.1} parent=0 // loop_header
    %s13 = sphi 0, %s17
    %p14 = scmp.ge.s32.totalorder %s13, 4
    %s23 = sphi 0, %s25
    %s26 = sphi 0, %s23
    %s27 = sphi 0, %s26
    %s43 = sphi 0, %s27
    %s47 = sphi 0, %s47
    %s49 = sphi 0, %s47
    %s50 = sphi 0, %s49
    %s64 = sphi 0, %s50
    %s68 = sphi 0, %s68
    %s70 = sphi 0, %s68
    %s71 = sphi 0, %s70
    %s85 = sphi 0, %s71
    %s89 = sphi 0, %s89
    %s91 = sphi 0, %s89
    %s92 = sphi 0, %s91
    %s106 = sphi 0, %s92
    %s110 = sphi 0, %s110
    %s112 = sphi 0, %s110
    %s113 = sphi 0, %s112
    %s127 = sphi 0, %s113
    %s131 = sphi 0, %s131
    %s133 = sphi 0, %s131
    %s134 = sphi 0, %s133
    %s148 = sphi 0, %s134
    %s152 = sphi 0, %s152
    %s154 = sphi 0, %s152
    %s155 = sphi 0, %s154
    %s169 = sphi 0, %s155
    %s175 = sphi 0, %s177
    %s178 = sphi 0, %s175
    %s179 = sphi 0, %s178
    %s195 = sphi 0, %s179
  $region4: #{sfm_forward.1} parent=0 // loop_header_branch
    %16 = sbr.rel (%p14) target = $region8
  $region5: #{sfm_forward.1} parent=0 // loop_body
    %s18 = ssub.s32 %s13, 1
    %s19 = ssub.s32 %s13, 2
    %s20 = sadd.s32 %s13, 1
    %s21 = ssub.s32 %s13, %s20
    %p22 = scmp.eq.s32.totalorder %s21, 0
    %s24 = sadd.s32 %s23, 1
    %s25 = scalar_select %p22, %s23, %s24
    %p28 = pneg %p22
    %p29 = scmp.eq.s32.totalorder %s13, 1
    %p30 = por %p28, %p29
    %p31 = scmp.ne.s32.totalorder %s23, %s26
    %p32 = scmp.eq.s32.totalorder %s13, 0
    %p33 = por %p31, %p32
    %p34 = scmp.ne.s32.totalorder %s23, %s26
    %p35 = scmp.eq.s32.totalorder %s18, 1
    %p36 = por %p34, %p35
    %p37 = scmp.ne.s32.totalorder %s26, %s27
    %p38 = scmp.eq.s32.totalorder %s18, 0
    %p39 = por %p37, %p38
    %p40 = scmp.ne.s32.totalorder %s26, %s27
    %p41 = scmp.eq.s32.totalorder %s19, 1
    %p42 = por %p40, %p41
    %p44 = scmp.ne.s32.totalorder %s27, %s43
    %p45 = scmp.eq.s32.totalorder %s19, 0
    %p46 = por %p44, %p45
    %s48 = sadd.s32 %s47, 1
    %p51 = scmp.eq.s32.totalorder %s13, 1
    %p52 = scmp.ne.s32.totalorder %s47, %s49
    %p53 = scmp.eq.s32.totalorder %s13, 0
    %p54 = por %p52, %p53
    %p55 = scmp.ne.s32.totalorder %s47, %s49
    %p56 = scmp.eq.s32.totalorder %s18, 1
    %p57 = por %p55, %p56
    %p58 = scmp.ne.s32.totalorder %s49, %s50
    %p59 = scmp.eq.s32.totalorder %s18, 0
    %p60 = por %p58, %p59
    %p61 = scmp.ne.s32.totalorder %s49, %s50
    %p62 = scmp.eq.s32.totalorder %s19, 1
    %p63 = por %p61, %p62
    %p65 = scmp.ne.s32.totalorder %s50, %s64
    %p66 = scmp.eq.s32.totalorder %s19, 0
    %p67 = por %p65, %p66
    %s69 = sadd.s32 %s68, 1
    %p72 = scmp.eq.s32.totalorder %s13, 1
    %p73 = scmp.ne.s32.totalorder %s68, %s70
    %p74 = scmp.eq.s32.totalorder %s13, 0
    %p75 = por %p73, %p74
    %p76 = scmp.ne.s32.totalorder %s68, %s70
    %p77 = scmp.eq.s32.totalorder %s18, 1
    %p78 = por %p76, %p77
    %p79 = scmp.ne.s32.totalorder %s70, %s71
    %p80 = scmp.eq.s32.totalorder %s18, 0
    %p81 = por %p79, %p80
    %p82 = scmp.ne.s32.totalorder %s70, %s71
    %p83 = scmp.eq.s32.totalorder %s19, 1
    %p84 = por %p82, %p83
    %p86 = scmp.ne.s32.totalorder %s71, %s85
    %p87 = scmp.eq.s32.totalorder %s19, 0
    %p88 = por %p86, %p87
    %s90 = sadd.s32 %s89, 1
    %p93 = scmp.eq.s32.totalorder %s13, 1
    %p94 = scmp.ne.s32.totalorder %s89, %s91
    %p95 = scmp.eq.s32.totalorder %s13, 0
    %p96 = por %p94, %p95
    %p97 = scmp.ne.s32.totalorder %s89, %s91
    %p98 = scmp.eq.s32.totalorder %s18, 1
    %p99 = por %p97, %p98
    %p100 = scmp.ne.s32.totalorder %s91, %s92
    %p101 = scmp.eq.s32.totalorder %s18, 0
    %p102 = por %p100, %p101
    %p103 = scmp.ne.s32.totalorder %s91, %s92
    %p104 = scmp.eq.s32.totalorder %s19, 1
    %p105 = por %p103, %p104
    %p107 = scmp.ne.s32.totalorder %s92, %s106
    %p108 = scmp.eq.s32.totalorder %s19, 0
    %p109 = por %p107, %p108
    %s111 = sadd.s32 %s110, 1
    %p114 = scmp.eq.s32.totalorder %s13, 1
    %p115 = scmp.ne.s32.totalorder %s110, %s112
    %p116 = scmp.eq.s32.totalorder %s13, 0
    %p117 = por %p115, %p116
    %p118 = scmp.ne.s32.totalorder %s110, %s112
    %p119 = scmp.eq.s32.totalorder %s18, 1
    %p120 = por %p118, %p119
    %p121 = scmp.ne.s32.totalorder %s112, %s113
    %p122 = scmp.eq.s32.totalorder %s18, 0
    %p123 = por %p121, %p122
    %p124 = scmp.ne.s32.totalorder %s112, %s113
    %p125 = scmp.eq.s32.totalorder %s19, 1
    %p126 = por %p124, %p125
    %p128 = scmp.ne.s32.totalorder %s113, %s127
    %p129 = scmp.eq.s32.totalorder %s19, 0
    %p130 = por %p128, %p129
    %s132 = sadd.s32 %s131, 1
    %p135 = scmp.eq.s32.totalorder %s13, 1
    %p136 = scmp.ne.s32.totalorder %s131, %s133
    %p137 = scmp.eq.s32.totalorder %s13, 0
    %p138 = por %p136, %p137
    %p139 = scmp.ne.s32.totalorder %s131, %s133
    %p140 = scmp.eq.s32.totalorder %s18, 1
    %p141 = por %p139, %p140
    %p142 = scmp.ne.s32.totalorder %s133, %s134
    %p143 = scmp.eq.s32.totalorder %s18, 0
    %p144 = por %p142, %p143
    %p145 = scmp.ne.s32.totalorder %s133, %s134
    %p146 = scmp.eq.s32.totalorder %s19, 1
    %p147 = por %p145, %p146
    %p149 = scmp.ne.s32.totalorder %s134, %s148
    %p150 = scmp.eq.s32.totalorder %s19, 0
    %p151 = por %p149, %p150
    %s153 = sadd.s32 %s152, 1
    %p156 = scmp.eq.s32.totalorder %s13, 1
    %p157 = scmp.ne.s32.totalorder %s152, %s154
    %p158 = scmp.eq.s32.totalorder %s13, 0
    %p159 = por %p157, %p158
    %p160 = scmp.ne.s32.totalorder %s152, %s154
    %p161 = scmp.eq.s32.totalorder %s18, 1
    %p162 = por %p160, %p161
    %p163 = scmp.ne.s32.totalorder %s154, %s155
    %p164 = scmp.eq.s32.totalorder %s18, 0
    %p165 = por %p163, %p164
    %p166 = scmp.ne.s32.totalorder %s154, %s155
    %p167 = scmp.eq.s32.totalorder %s19, 1
    %p168 = por %p166, %p167
    %p170 = scmp.ne.s32.totalorder %s155, %s169
    %p171 = scmp.eq.s32.totalorder %s19, 0
    %p172 = por %p170, %p171
    %s173 = ssub.s32 %s13, %s20
    %p174 = scmp.eq.s32.totalorder %s173, 0
    %s176 = sadd.s32 %s175, 1
    %s177 = scalar_select %p174, %s175, %s176
    %p180 = pneg %p174
    %p181 = scmp.eq.s32.totalorder %s13, 1
    %p182 = por %p180, %p181
    %p183 = scmp.ne.s32.totalorder %s175, %s178
    %p184 = scmp.eq.s32.totalorder %s13, 0
    %p185 = por %p183, %p184
    %p186 = scmp.ne.s32.totalorder %s175, %s178
    %p187 = scmp.eq.s32.totalorder %s18, 1
    %p188 = por %p186, %p187
    %p189 = scmp.ne.s32.totalorder %s178, %s179
    %p190 = scmp.eq.s32.totalorder %s18, 0
    %p191 = por %p189, %p190
    %p192 = scmp.ne.s32.totalorder %s178, %s179
    %p193 = scmp.eq.s32.totalorder %s19, 1
    %p194 = por %p192, %p193
    %p196 = scmp.ne.s32.totalorder %s179, %s195
    %p197 = scmp.eq.s32.totalorder %s19, 0
    %p198 = por %p196, %p197
    %p199 = scmp.le.s32.totalorder 1, %s13
    %p200 = scmp.lt.s32.totalorder %s13, 3
    %p201 = pnand %p199, %p200
    %p202 = pneg %p201
    // Predicated region
    $region9: #{sfm_forward.1} parent=5 // pred_check
      _
    $region10: #{sfm_forward.1} parent=5 // pred_check_branch
      %204 = sbr.rel (%p201) target = $region12
    $region11: #{sfm_forward.1} parent=5 // pred_region
      %s205 = ssub.s32 %s13, 1
      // Predicated region
      $region13: #{sfm_forward.1} parent=11 // pred_check
        %p206 = pneg %p60
      $region14: #{sfm_forward.1} parent=11 // pred_check_branch
        %208 = sbr.rel (%p206) target = $region16
      $region15: #{sfm_forward.1} parent=11 // pred_region
        _
      $region16: #{sfm_forward.1} parent=11 // pred_fallthru
        _
      // Predicated region
      $region17: #{sfm_forward.1} parent=11 // pred_check
        %p209 = pneg %p81
      $region18: #{sfm_forward.1} parent=11 // pred_check_branch
        %211 = sbr.rel (%p209) target = $region20
      $region19: #{sfm_forward.1} parent=11 // pred_region
        _
      $region20: #{sfm_forward.1} parent=11 // pred_fallthru
        _
      // Predicated region
      $region21: #{sfm_forward.1} parent=11 // pred_check
        %p212 = pneg %p102
      $region22: #{sfm_forward.1} parent=11 // pred_check_branch
        %214 = sbr.rel (%p212) target = $region24
      $region23: #{sfm_forward.1} parent=11 // pred_region
        _
      $region24: #{sfm_forward.1} parent=11 // pred_fallthru
        _
      // Predicated region
      $region25: #{sfm_forward.1} parent=11 // pred_check
        %p215 = pneg %p123
      $region26: #{sfm_forward.1} parent=11 // pred_check_branch
        %217 = sbr.rel (%p215) target = $region28
      $region27: #{sfm_forward.1} parent=11 // pred_region
        _
      $region28: #{sfm_forward.1} parent=11 // pred_fallthru
        _
      // Predicated region
      $region29: #{sfm_forward.1} parent=11 // pred_check
        %p218 = pneg %p144
      $region30: #{sfm_forward.1} parent=11 // pred_check_branch
        %220 = sbr.rel (%p218) target = $region32
      $region31: #{sfm_forward.1} parent=11 // pred_region
        _
      $region32: #{sfm_forward.1} parent=11 // pred_fallthru
        _
      // Predicated region
      $region33: #{sfm_forward.1} parent=11 // pred_check
        %p221 = pneg %p165
      $region34: #{sfm_forward.1} parent=11 // pred_check_branch
        %223 = sbr.rel (%p221) target = $region36
      $region35: #{sfm_forward.1} parent=11 // pred_region
        _
      $region36: #{sfm_forward.1} parent=11 // pred_fallthru
        _
    $region12: #{sfm_forward.1} parent=5 // pred_fallthru
      _
    %p224 = scmp.lt.s32.totalorder %s13, 2
    // Predicated region
    $region37: #{sfm_forward.1} parent=5 // pred_check
      %p225 = pneg %p224
    $region38: #{sfm_forward.1} parent=5 // pred_check_branch
      %227 = sbr.rel (%p225) target = $region40
    $region39: #{sfm_forward.1} parent=5 // pred_region
      // Predicated region
      $region41: #{sfm_forward.1} parent=39 // pred_check
        %p228 = pneg %p33
      $region42: #{sfm_forward.1} parent=39 // pred_check_branch
        %230 = sbr.rel (%p228) target = $region44
      $region43: #{sfm_forward.1} parent=39 // pred_region
        %p231 = scmp.lt.s32.totalorder %s13, 1
        %s232 = scalar_select %p231, %s13, 1
        %s233 = smul.addr %s232, 2
        %s234 = smul.addr %s233, 8
        %s235 = scalar_lea.vmem %s0, %s234
      $region44: #{sfm_forward.1} parent=39 // pred_fallthru
        _
    $region40: #{sfm_forward.1} parent=5 // pred_fallthru
      _
    %p236 = scmp.le.s32.totalorder 1, %s13
    %p237 = scmp.lt.s32.totalorder %s13, 3
    %p238 = pnand %p236, %p237
    %p239 = pneg %p238
    // Predicated region
    $region45: #{sfm_forward.1} parent=5 // pred_check
      _
    $region46: #{sfm_forward.1} parent=5 // pred_check_branch
      %241 = sbr.rel (%p238) target = $region48
    $region47: #{sfm_forward.1} parent=5 // pred_region
      %s242 = ssub.s32 %s13, 1
      %p243 = scmp.lt.s32.totalorder %s18, 1
      %s244 = scalar_select %p243, %s18, 1
      %s245 = smul.addr %s244, 2
      %s246 = smul.addr %s245, 8
      %s247 = scalar_lea.vmem %s0, %s246
      %p248 = pneg %p39
      %p249 = pneg %p36
      %p250 = pneg %p60
      %p251 = pneg %p57
      %p252 = pneg %p81
      %p253 = pneg %p78
      %p254 = pneg %p102
      %p255 = pneg %p99
      %p256 = pneg %p123
      %p257 = pneg %p120
      %p258 = pneg %p144
      %p259 = pneg %p141
      %p260 = pneg %p165
      %p261 = pneg %p162
      %p262 = pneg %p191
      %p263 = pneg %p188
      %p264 = scmp.lt.s32.totalorder %s18, 1
      %s265 = scalar_select %p264, %s18, 1
      %s266 = smul.addr %s265, 2
      %s267 = smul.addr %s266, 8
      %s268 = scalar_lea.vmem %s7, %s267
      %p269 = scmp.lt.s32.totalorder %s18, 1
      %s270 = scalar_select %p269, %s18, 1
      %s271 = smul.addr %s270, 2
      %s272 = smul.addr %s271, 8
      %s273 = scalar_lea.vmem %s0, %s272
      %p274 = scmp.lt.s32.totalorder %s18, 1
      %s275 = scalar_select %p274, %s18, 1
      %s276 = smul.addr %s275, 2
      %s277 = smul.addr %s276, 8
      %s278 = scalar_lea.vmem %s7, %s277
      %280 = vst [vmem:[#allocation2] sm:$0xff] 0.0
      %281 = vst [vmem:[#allocation2 + $0x18] sm:$0xff] 0.0
      %282 = vst [vmem:[#allocation3] sm:$0x3] 0.0
      %283 = vst [vmem:[#allocation3 + $0x6] sm:$0x3] 0.0
      %v284 = vld [vmem:[%s273] sm:$0xff]
      %v285 = vld [vmem:[%s273 + $0x8] sm:$0xff]
      %v286 = vld [vmem:[%s1] sm:$0xff]
      %288 = vset.pattern.permute.xlu0 0
      %289 = vperm.xlu0 %288, %v286
      %v290 = vpop.permute.xlu0 %289
      %v292 = vmul.f32 %v284, %v290
      %v293 = vmul.f32 %v285, %v290
      %294 = vset.pattern.permute.xlu0 1
      %295 = vperm.xlu0 %294, %v286
      %v296 = vpop.permute.xlu0 %295
      %v298 = vadd.f32 %v292, %v296
      %v299 = vadd.f32 %v293, %v296
      %300 = vst [vmem:[#allocation2 + $0x8] sm:$0xff] %v298
      %301 = vst [vmem:[#allocation2 + $0x10] sm:$0xff] %v299
      %v302 = vld [vmem:[#allocation2] sm:$0xff]
      %v303 = vld [vmem:[#allocation2 + $0x8] sm:$0xff]
      %v304 = vld [vmem:[#allocation2 + $0x10] sm:$0xff]
      %v305 = vld [vmem:[#allocation2] sm:$0xff]
      %v306 = vld [vmem:[#allocation2 + $0x8] sm:$0xff]
      %v307 = vld [vmem:[#allocation2 + $0x10] sm:$0xff]
      %v308 = vld [vmem:[#allocation2 + $0x18] sm:$0xff]
      %v309 = vld [vmem:[%s2] sm:$0xff]
      %311 = vset.pattern.permute.xlu0 0
      %312 = vperm.xlu0 %311, %v309
      %v313 = vpop.permute.xlu0 %312
      %v315 = vmul.f32 %v302, %v313
      %v316 = vmul.f32 %v303, %v313
      %v317 = vmul.f32 %v304, %v313
      %v318 = vadd.f32 %v315, 0.0
      %v319 = vadd.f32 %v316, 0.0
      %v320 = vadd.f32 %v317, 0.0
      %321 = vset.pattern.permute.xlu0 7
      %322 = vperm.xlu0 %321, %v309
      %v323 = vpop.permute.xlu0 %322
      %v325 = vmul.f32 %v302, %v323
      %v326 = vmul.f32 %v303, %v323
      %v327 = vmul.f32 %v304, %v323
      %331 = vrot.lane.b32.xlu0 %v325, 112
      %v332 = vpop.permute.xlu0 %331
      %333 = vrot.lane.b32.xlu0 %v326, 112
      %v334 = vpop.permute.xlu0 %333
      %335 = vrot.lane.b32.xlu0 %v327, 112
      %v336 = vpop.permute.xlu0 %335
      %vm337 = vcmask 916480
      %v338 = vsel %vm337, %v332, %v334
      %v339 = vsel %vm337, %v334, %v336
      %v343 = vadd.f32 %v318, %v338
      %v344 = vadd.f32 %v319, %v339
      %v345 = vadd.f32 %v320, %v336
      %346 = vset.pattern.permute.xlu0 14
      %347 = vperm.xlu0 %346, %v309
      %v348 = vpop.permute.xlu0 %347
      %v350 = vmul.f32 %v302, %v348
      %v351 = vmul.f32 %v303, %v348
      %v352 = vmul.f32 %v304, %v348
      %356 = vrot.lane.b32.xlu0 %v350, 96
      %v357 = vpop.permute.xlu0 %356
      %358 = vrot.lane.b32.xlu0 %v351, 96
      %v359 = vpop.permute.xlu0 %358
      %360 = vrot.lane.b32.xlu0 %v352, 96
      %v361 = vpop.permute.xlu0 %360
      %vm362 = vcmask 785408
      %v363 = vsel %vm362, %v357, %v359
      %v364 = vsel %vm362, %v359, %v361
      %v368 = vadd.f32 %v343, %v363
      %v369 = vadd.f32 %v344, %v364
      %v370 = vadd.f32 %v345, %v361
      %371 = vset.pattern.permute.xlu0 21
      %372 = vperm.xlu0 %371, %v309
      %v373 = vpop.permute.xlu0 %372
      %v375 = vmul.f32 %v305, %v373
      %v376 = vmul.f32 %v306, %v373
      %v377 = vmul.f32 %v307, %v373
      %381 = vrot.lane.b32.xlu0 %v375, 80
      %v382 = vpop.permute.xlu0 %381
      %383 = vrot.lane.b32.xlu0 %v376, 80
      %v384 = vpop.permute.xlu0 %383
      %385 = vrot.lane.b32.xlu0 %v377, 80
      %v386 = vpop.permute.xlu0 %385
      %vm387 = vcmask 654336
      %v388 = vsel %vm387, %v382, %v384
      %v389 = vsel %vm387, %v384, %v386
      %v393 = vadd.f32 %v368, %v388
      %v394 = vadd.f32 %v369, %v389
      %v395 = vadd.f32 %v370, %v386
      %396 = vset.pattern.permute.xlu0 28
      %397 = vperm.xlu0 %396, %v309
      %v398 = vpop.permute.xlu0 %397
      %v400 = vmul.f32 %v306, %v398
      %v401 = vmul.f32 %v307, %v398
      %v402 = vmul.f32 %v308, %v398
      %406 = vrot.lane.b32.xlu0 %v400, 64
      %v407 = vpop.permute.xlu0 %406
      %408 = vrot.lane.b32.xlu0 %v401, 64
      %v409 = vpop.permute.xlu0 %408
      %410 = vrot.lane.b32.xlu0 %v402, 64
      %v411 = vpop.permute.xlu0 %410
      %vm412 = vcmask 523264
      %v413 = vsel %vm412, %v407, %v409
      %v414 = vsel %vm412, %v409, %v411
      %v418 = vadd.f32 %v393, %v407
      %v419 = vadd.f32 %v394, %v413
      %v420 = vadd.f32 %v395, %v414
      %421 = vset.pattern.permute.xlu0 35
      %422 = vperm.xlu0 %421, %v309
      %v423 = vpop.permute.xlu0 %422
      %v425 = vmul.f32 %v306, %v423
      %v426 = vmul.f32 %v307, %v423
      %v427 = vmul.f32 %v308, %v423
      %431 = vrot.lane.b32.xlu0 %v425, 48
      %v432 = vpop.permute.xlu0 %431
      %433 = vrot.lane.b32.xlu0 %v426, 48
      %v434 = vpop.permute.xlu0 %433
      %435 = vrot.lane.b32.xlu0 %v427, 48
      %v436 = vpop.permute.xlu0 %435
      %vm437 = vcmask 392192
      %v438 = vsel %vm437, %v432, %v434
      %v439 = vsel %vm437, %v434, %v436
      %v443 = vadd.f32 %v418, %v432
      %v444 = vadd.f32 %v419, %v438
      %v445 = vadd.f32 %v420, %v439
      %446 = vset.pattern.permute.xlu0 42
      %447 = vperm.xlu0 %446, %v309
      %v448 = vpop.permute.xlu0 %447
      %v450 = vmul.f32 %v306, %v448
      %v451 = vmul.f32 %v307, %v448
      %v452 = vmul.f32 %v308, %v448
      %456 = vrot.lane.b32.xlu0 %v450, 32
      %v457 = vpop.permute.xlu0 %456
      %458 = vrot.lane.b32.xlu0 %v451, 32
      %v459 = vpop.permute.xlu0 %458
      %460 = vrot.lane.b32.xlu0 %v452, 32
      %v461 = vpop.permute.xlu0 %460
      %vm462 = vcmask 261120
      %v463 = vsel %vm462, %v457, %v459
      %v464 = vsel %vm462, %v459, %v461
      %v468 = vadd.f32 %v443, %v457
      %v469 = vadd.f32 %v444, %v463
      %v470 = vadd.f32 %v445, %v464
      %v471 = vld [vmem:[%s6] ss:$8 sm:$0x3]
      %v473 = vperm.slane %v471, 0
      %v474 = vperm.slane %v471, 1
      %475 = vrot.lane.b32.xlu0 %v473, 77
      %v476 = vpop.permute.xlu0 %475
      %477 = vrot.lane.b32.xlu0 %v474, 77
      %v478 = vpop.permute.xlu0 %477
      %vm479 = vcmask 629760
      %v480 = vsel %vm479, %v476, %v478
      %v484 = vmul.f32 %v468, %v476
      %v485 = vmul.f32 %v469, %v480
      %v486 = vmul.f32 %v470, %v478
      %v487 = vadd.f32 %v484, 0.0
      %v488 = vadd.f32 %v485, 0.0
      %v489 = vadd.f32 %v486, 0.0
      %490 = vset.pattern.permute.xlu0 1
      %491 = vperm.xlu0 %490, %v309
      %v492 = vpop.permute.xlu0 %491
      %v494 = vmul.f32 %v302, %v492
      %v495 = vmul.f32 %v303, %v492
      %v496 = vmul.f32 %v304, %v492
      %v497 = vadd.f32 %v494, 0.0
      %v498 = vadd.f32 %v495, 0.0
      %v499 = vadd.f32 %v496, 0.0
      %500 = vset.pattern.permute.xlu0 8
      %501 = vperm.xlu0 %500, %v309
      %v502 = vpop.permute.xlu0 %501
      %v504 = vmul.f32 %v302, %v502
      %v505 = vmul.f32 %v303, %v502
      %v506 = vmul.f32 %v304, %v502
      %510 = vrot.lane.b32.xlu0 %v504, 112
      %v511 = vpop.permute.xlu0 %510
      %512 = vrot.lane.b32.xlu0 %v505, 112
      %v513 = vpop.permute.xlu0 %512
      %514 = vrot.lane.b32.xlu0 %v506, 112
      %v515 = vpop.permute.xlu0 %514
      %v516 = vsel %vm337, %v511, %v513
      %v517 = vsel %vm337, %v513, %v515
      %v521 = vadd.f32 %v497, %v516
      %v522 = vadd.f32 %v498, %v517
      %v523 = vadd.f32 %v499, %v515
      %524 = vset.pattern.permute.xlu0 49
      %525 = vperm.xlu0 %524, %v309
      %v526 = vpop.permute.xlu0 %525
      %v528 = vmul.f32 %v302, %v526
      %v529 = vmul.f32 %v303, %v526
      %v530 = vmul.f32 %v304, %v526
      %v531 = vadd.f32 %v528, 0.0
      %v532 = vadd.f32 %v529, 0.0
      %v533 = vadd.f32 %v530, 0.0
      %534 = vset.pattern.permute.xlu0 15
      %535 = vperm.xlu0 %534, %v309
      %v536 = vpop.permute.xlu0 %535
      %v538 = vmul.f32 %v302, %v536
      %v539 = vmul.f32 %v303, %v536
      %v540 = vmul.f32 %v304, %v536
      %544 = vrot.lane.b32.xlu0 %v538, 96
      %v545 = vpop.permute.xlu0 %544
      %546 = vrot.lane.b32.xlu0 %v539, 96
      %v547 = vpop.permute.xlu0 %546
      %548 = vrot.lane.b32.xlu0 %v540, 96
      %v549 = vpop.permute.xlu0 %548
      %v550 = vsel %vm362, %v545, %v547
      %v551 = vsel %vm362, %v547, %v549
      %v555 = vadd.f32 %v521, %v550
      %v556 = vadd.f32 %v522, %v551
      %v557 = vadd.f32 %v523, %v549
      %558 = vset.pattern.permute.xlu0 54
      %559 = vperm.xlu0 %558, %v309
      %v560 = vpop.permute.xlu0 %559
      %v562 = vmul.f32 %v302, %v560
      %v563 = vmul.f32 %v303, %v560
      %v564 = vmul.f32 %v304, %v560
      %568 = vrot.lane.b32.xlu0 %v562, 112
      %v569 = vpop.permute.xlu0 %568
      %570 = vrot.lane.b32.xlu0 %v563, 112
      %v571 = vpop.permute.xlu0 %570
      %572 = vrot.lane.b32.xlu0 %v564, 112
      %v573 = vpop.permute.xlu0 %572
      %v574 = vsel %vm337, %v569, %v571
      %v575 = vsel %vm337, %v571, %v573
      %v579 = vadd.f32 %v531, %v574
      %v580 = vadd.f32 %v532, %v575
      %v581 = vadd.f32 %v533, %v573
      %582 = vset.pattern.permute.xlu0 22
      %583 = vperm.xlu0 %582, %v309
      %v584 = vpop.permute.xlu0 %583
      %v586 = vmul.f32 %v305, %v584
      %v587 = vmul.f32 %v306, %v584
      %v588 = vmul.f32 %v307, %v584
      %592 = vrot.lane.b32.xlu0 %v586, 80
      %v593 = vpop.permute.xlu0 %592
      %594 = vrot.lane.b32.xlu0 %v587, 80
      %v595 = vpop.permute.xlu0 %594
      %596 = vrot.lane.b32.xlu0 %v588, 80
      %v597 = vpop.permute.xlu0 %596
      %v598 = vsel %vm387, %v593, %v595
      %v599 = vsel %vm387, %v595, %v597
      %v603 = vadd.f32 %v555, %v598
      %v604 = vadd.f32 %v556, %v599
      %v605 = vadd.f32 %v557, %v597
      %606 = vset.pattern.permute.xlu0 59
      %607 = vperm.xlu0 %606, %v309
      %v608 = vpop.permute.xlu0 %607
      %v610 = vmul.f32 %v305, %v608
      %v611 = vmul.f32 %v306, %v608
      %v612 = vmul.f32 %v307, %v608
      %616 = vrot.lane.b32.xlu0 %v610, 96
      %v617 = vpop.permute.xlu0 %616
      %618 = vrot.lane.b32.xlu0 %v611, 96
      %v619 = vpop.permute.xlu0 %618
      %620 = vrot.lane.b32.xlu0 %v612, 96
      %v621 = vpop.permute.xlu0 %620
      %v622 = vsel %vm362, %v617, %v619
      %v623 = vsel %vm362, %v619, %v621
      %v627 = vadd.f32 %v579, %v622
      %v628 = vadd.f32 %v580, %v623
      %v629 = vadd.f32 %v581, %v621
      %630 = vset.pattern.permute.xlu0 29
      %631 = vperm.xlu0 %630, %v309
      %v632 = vpop.permute.xlu0 %631
      %v634 = vmul.f32 %v306, %v632
      %v635 = vmul.f32 %v307, %v632
      %v636 = vmul.f32 %v308, %v632
      %640 = vrot.lane.b32.xlu0 %v634, 64
      %v641 = vpop.permute.xlu0 %640
      %642 = vrot.lane.b32.xlu0 %v635, 64
      %v643 = vpop.permute.xlu0 %642
      %644 = vrot.lane.b32.xlu0 %v636, 64
      %v645 = vpop.permute.xlu0 %644
      %v646 = vsel %vm412, %v641, %v643
      %v647 = vsel %vm412, %v643, %v645
      %v651 = vadd.f32 %v603, %v641
      %v652 = vadd.f32 %v604, %v646
      %v653 = vadd.f32 %v605, %v647
      %654 = vset.pattern.permute.xlu0 64
      %655 = vperm.xlu0 %654, %v309
      %v656 = vpop.permute.xlu0 %655
      %v658 = vmul.f32 %v306, %v656
      %v659 = vmul.f32 %v307, %v656
      %v660 = vmul.f32 %v308, %v656
      %664 = vrot.lane.b32.xlu0 %v658, 80
      %v665 = vpop.permute.xlu0 %664
      %666 = vrot.lane.b32.xlu0 %v659, 80
      %v667 = vpop.permute.xlu0 %666
      %668 = vrot.lane.b32.xlu0 %v660, 80
      %v669 = vpop.permute.xlu0 %668
      %v670 = vsel %vm387, %v665, %v667
      %v671 = vsel %vm387, %v667, %v669
      %v675 = vadd.f32 %v627, %v665
      %v676 = vadd.f32 %v628, %v670
      %v677 = vadd.f32 %v629, %v671
      %678 = vset.pattern.permute.xlu0 36
      %679 = vperm.xlu0 %678, %v309
      %v680 = vpop.permute.xlu0 %679
      %v682 = vmul.f32 %v306, %v680
      %v683 = vmul.f32 %v307, %v680
      %v684 = vmul.f32 %v308, %v680
      %688 = vrot.lane.b32.xlu0 %v682, 48
      %v689 = vpop.permute.xlu0 %688
      %690 = vrot.lane.b32.xlu0 %v683, 48
      %v691 = vpop.permute.xlu0 %690
      %692 = vrot.lane.b32.xlu0 %v684, 48
      %v693 = vpop.permute.xlu0 %692
      %v694 = vsel %vm437, %v689, %v691
      %v695 = vsel %vm437, %v691, %v693
      %v699 = vadd.f32 %v651, %v689
      %v700 = vadd.f32 %v652, %v694
      %v701 = vadd.f32 %v653, %v695
      %702 = vset.pattern.permute.xlu0 69
      %703 = vperm.xlu0 %702, %v309
      %v704 = vpop.permute.xlu0 %703
      %v706 = vmul.f32 %v306, %v704
      %v707 = vmul.f32 %v307, %v704
      %v708 = vmul.f32 %v308, %v704
      %712 = vrot.lane.b32.xlu0 %v706, 64
      %v713 = vpop.permute.xlu0 %712
      %714 = vrot.lane.b32.xlu0 %v707, 64
      %v715 = vpop.permute.xlu0 %714
      %716 = vrot.lane.b32.xlu0 %v708, 64
      %v717 = vpop.permute.xlu0 %716
      %v718 = vsel %vm412, %v713, %v715
      %v719 = vsel %vm412, %v715, %v717
      %v723 = vadd.f32 %v675, %v713
      %v724 = vadd.f32 %v676, %v718
      %v725 = vadd.f32 %v677, %v719
      %726 = vset.pattern.permute.xlu0 43
      %727 = vperm.xlu0 %726, %v309
      %v728 = vpop.permute.xlu0 %727
      %v730 = vmul.f32 %v306, %v728
      %v731 = vmul.f32 %v307, %v728
      %v732 = vmul.f32 %v308, %v728
      %736 = vrot.lane.b32.xlu0 %v730, 32
      %v737 = vpop.permute.xlu0 %736
      %738 = vrot.lane.b32.xlu0 %v731, 32
      %v739 = vpop.permute.xlu0 %738
      %740 = vrot.lane.b32.xlu0 %v732, 32
      %v741 = vpop.permute.xlu0 %740
      %v742 = vsel %vm462, %v737, %v739
      %v743 = vsel %vm462, %v739, %v741
      %v747 = vadd.f32 %v699, %v737
      %v748 = vadd.f32 %v700, %v742
      %v749 = vadd.f32 %v701, %v743
      %s750 = scalar_lea.vmem %s6, 1
      %v751 = vld [vmem:[%s750] ss:$8 sm:$0x3]
      %v753 = vperm.slane %v751, 0
      %v754 = vperm.slane %v751, 1
      %755 = vrot.lane.b32.xlu0 %v753, 78
      %v756 = vpop.permute.xlu0 %755
      %757 = vrot.lane.b32.xlu0 %v754, 78
      %v758 = vpop.permute.xlu0 %757
      %vm759 = vcmask 637952
      %v760 = vsel %vm759, %v756, %v758
      %v764 = vmul.f32 %v747, %v756
      %v765 = vmul.f32 %v748, %v760
      %v766 = vmul.f32 %v749, %v758
      %770 = vrot.lane.b32.xlu0 %v764, 127
      %v771 = vpop.permute.xlu0 %770
      %772 = vrot.lane.b32.xlu0 %v765, 127
      %v773 = vpop.permute.xlu0 %772
      %774 = vrot.lane.b32.xlu0 %v766, 127
      %v775 = vpop.permute.xlu0 %774
      %vm776 = vcmask 1039360
      %v777 = vsel %vm776, %v771, %v773
      %v778 = vsel %vm776, %v773, %v775
      %v782 = vadd.f32 %v487, %v777
      %v783 = vadd.f32 %v488, %v778
      %v784 = vadd.f32 %v489, %v775
      %785 = vrot.lane.b32.xlu0 %v753, 94
      %v786 = vpop.permute.xlu0 %785
      %787 = vrot.lane.b32.xlu0 %v754, 94
      %v788 = vpop.permute.xlu0 %787
      %vm789 = vcmask 769024
      %v790 = vsel %vm789, %v786, %v788
      %v794 = vmul.f32 %v723, %v786
      %v795 = vmul.f32 %v724, %v790
      %v796 = vmul.f32 %v725, %v788
      %v797 = vadd.f32 %v794, 0.0
      %v798 = vadd.f32 %v795, 0.0
      %v799 = vadd.f32 %v796, 0.0
      %800 = vset.pattern.permute.xlu0 2
      %801 = vperm.xlu0 %800, %v309
      %v802 = vpop.permute.xlu0 %801
      %v804 = vmul.f32 %v302, %v802
      %v805 = vmul.f32 %v303, %v802
      %v806 = vmul.f32 %v304, %v802
      %v807 = vadd.f32 %v804, 0.0
      %v808 = vadd.f32 %v805, 0.0
      %v809 = vadd.f32 %v806, 0.0
      %810 = vset.pattern.permute.xlu0 9
      %811 = vperm.xlu0 %810, %v309
      %v812 = vpop.permute.xlu0 %811
      %v814 = vmul.f32 %v302, %v812
      %v815 = vmul.f32 %v303, %v812
      %v816 = vmul.f32 %v304, %v812
      %820 = vrot.lane.b32.xlu0 %v814, 112
      %v821 = vpop.permute.xlu0 %820
      %822 = vrot.lane.b32.xlu0 %v815, 112
      %v823 = vpop.permute.xlu0 %822
      %824 = vrot.lane.b32.xlu0 %v816, 112
      %v825 = vpop.permute.xlu0 %824
      %v826 = vsel %vm337, %v821, %v823
      %v827 = vsel %vm337, %v823, %v825
      %v831 = vadd.f32 %v807, %v826
      %v832 = vadd.f32 %v808, %v827
      %v833 = vadd.f32 %v809, %v825
      %834 = vset.pattern.permute.xlu0 50
      %835 = vperm.xlu0 %834, %v309
      %v836 = vpop.permute.xlu0 %835
      %v838 = vmul.f32 %v302, %v836
      %v839 = vmul.f32 %v303, %v836
      %v840 = vmul.f32 %v304, %v836
      %v841 = vadd.f32 %v838, 0.0
      %v842 = vadd.f32 %v839, 0.0
      %v843 = vadd.f32 %v840, 0.0
      %844 = vset.pattern.permute.xlu0 16
      %845 = vperm.xlu0 %844, %v309
      %v846 = vpop.permute.xlu0 %845
      %v848 = vmul.f32 %v302, %v846
      %v849 = vmul.f32 %v303, %v846
      %v850 = vmul.f32 %v304, %v846
      %854 = vrot.lane.b32.xlu0 %v848, 96
      %v855 = vpop.permute.xlu0 %854
      %856 = vrot.lane.b32.xlu0 %v849, 96
      %v857 = vpop.permute.xlu0 %856
      %858 = vrot.lane.b32.xlu0 %v850, 96
      %v859 = vpop.permute.xlu0 %858
      %v860 = vsel %vm362, %v855, %v857
      %v861 = vsel %vm362, %v857, %v859
      %v865 = vadd.f32 %v831, %v860
      %v866 = vadd.f32 %v832, %v861
      %v867 = vadd.f32 %v833, %v859
      %868 = vset.pattern.permute.xlu0 55
      %869 = vperm.xlu0 %868, %v309
      %v870 = vpop.permute.xlu0 %869
      %v872 = vmul.f32 %v302, %v870
      %v873 = vmul.f32 %v303, %v870
      %v874 = vmul.f32 %v304, %v870
      %878 = vrot.lane.b32.xlu0 %v872, 112
      %v879 = vpop.permute.xlu0 %878
      %880 = vrot.lane.b32.xlu0 %v873, 112
      %v881 = vpop.permute.xlu0 %880
      %882 = vrot.lane.b32.xlu0 %v874, 112
      %v883 = vpop.permute.xlu0 %882
      %v884 = vsel %vm337, %v879, %v881
      %v885 = vsel %vm337, %v881, %v883
      %v889 = vadd.f32 %v841, %v884
      %v890 = vadd.f32 %v842, %v885
      %v891 = vadd.f32 %v843, %v883
      %892 = vset.pattern.permute.xlu0 74
      %893 = vperm.xlu0 %892, %v309
      %v894 = vpop.permute.xlu0 %893
      %v896 = vmul.f32 %v302, %v894
      %v897 = vmul.f32 %v303, %v894
      %v898 = vmul.f32 %v304, %v894
      %v899 = vadd.f32 %v896, 0.0
      %v900 = vadd.f32 %v897, 0.0
      %v901 = vadd.f32 %v898, 0.0
      %902 = vset.pattern.permute.xlu0 23
      %903 = vperm.xlu0 %902, %v309
      %v904 = vpop.permute.xlu0 %903
      %v906 = vmul.f32 %v305, %v904
      %v907 = vmul.f32 %v306, %v904
      %v908 = vmul.f32 %v307, %v904
      %912 = vrot.lane.b32.xlu0 %v906, 80
      %v913 = vpop.permute.xlu0 %912
      %914 = vrot.lane.b32.xlu0 %v907, 80
      %v915 = vpop.permute.xlu0 %914
      %916 = vrot.lane.b32.xlu0 %v908, 80
      %v917 = vpop.permute.xlu0 %916
      %v918 = vsel %vm387, %v913, %v915
      %v919 = vsel %vm387, %v915, %v917
      %v923 = vadd.f32 %v865, %v918
      %v924 = vadd.f32 %v866, %v919
      %v925 = vadd.f32 %v867, %v917
      %926 = vset.pattern.permute.xlu0 60
      %927 = vperm.xlu0 %926, %v309
      %v928 = vpop.permute.xlu0 %927
      %v930 = vmul.f32 %v305, %v928
      %v931 = vmul.f32 %v306, %v928
      %v932 = vmul.f32 %v307, %v928
      %936 = vrot.lane.b32.xlu0 %v930, 96
      %v937 = vpop.permute.xlu0 %936
      %938 = vrot.lane.b32.xlu0 %v931, 96
      %v939 = vpop.permute.xlu0 %938
      %940 = vrot.lane.b32.xlu0 %v932, 96
      %v941 = vpop.permute.xlu0 %940
      %v942 = vsel %vm362, %v937, %v939
      %v943 = vsel %vm362, %v939, %v941
      %v947 = vadd.f32 %v889, %v942
      %v948 = vadd.f32 %v890, %v943
      %v949 = vadd.f32 %v891, %v941
      %950 = vset.pattern.permute.xlu0 77
      %951 = vperm.xlu0 %950, %v309
      %v952 = vpop.permute.xlu0 %951
      %v954 = vmul.f32 %v305, %v952
      %v955 = vmul.f32 %v306, %v952
      %v956 = vmul.f32 %v307, %v952
      %960 = vrot.lane.b32.xlu0 %v954, 112
      %v961 = vpop.permute.xlu0 %960
      %962 = vrot.lane.b32.xlu0 %v955, 112
      %v963 = vpop.permute.xlu0 %962
      %964 = vrot.lane.b32.xlu0 %v956, 112
      %v965 = vpop.permute.xlu0 %964
      %v966 = vsel %vm337, %v961, %v963
      %v967 = vsel %vm337, %v963, %v965
      %v971 = vadd.f32 %v899, %v966
      %v972 = vadd.f32 %v900, %v967
      %v973 = vadd.f32 %v901, %v965
      %974 = vset.pattern.permute.xlu0 30
      %975 = vperm.xlu0 %974, %v309
      %v976 = vpop.permute.xlu0 %975
      %v978 = vmul.f32 %v306, %v976
      %v979 = vmul.f32 %v307, %v976
      %v980 = vmul.f32 %v308, %v976
      %984 = vrot.lane.b32.xlu0 %v978, 64
      %v985 = vpop.permute.xlu0 %984
      %986 = vrot.lane.b32.xlu0 %v979, 64
      %v987 = vpop.permute.xlu0 %986
      %988 = vrot.lane.b32.xlu0 %v980, 64
      %v989 = vpop.permute.xlu0 %988
      %v990 = vsel %vm412, %v985, %v987
      %v991 = vsel %vm412, %v987, %v989
      %v995 = vadd.f32 %v923, %v985
      %v996 = vadd.f32 %v924, %v990
      %v997 = vadd.f32 %v925, %v991
      %998 = vset.pattern.permute.xlu0 65
      %999 = vperm.xlu0 %998, %v309
      %v1000 = vpop.permute.xlu0 %999
      %v1002 = vmul.f32 %v306, %v1000
      %v1003 = vmul.f32 %v307, %v1000
      %v1004 = vmul.f32 %v308, %v1000
      %1008 = vrot.lane.b32.xlu0 %v1002, 80
      %v1009 = vpop.permute.xlu0 %1008
      %1010 = vrot.lane.b32.xlu0 %v1003, 80
      %v1011 = vpop.permute.xlu0 %1010
      %1012 = vrot.lane.b32.xlu0 %v1004, 80
      %v1013 = vpop.permute.xlu0 %1012
      %v1014 = vsel %vm387, %v1009, %v1011
      %v1015 = vsel %vm387, %v1011, %v1013
      %v1019 = vadd.f32 %v947, %v1009
      %v1020 = vadd.f32 %v948, %v1014
      %v1021 = vadd.f32 %v949, %v1015
      %1022 = vset.pattern.permute.xlu0 80
      %1023 = vperm.xlu0 %1022, %v309
      %v1024 = vpop.permute.xlu0 %1023
      %v1026 = vmul.f32 %v306, %v1024
      %v1027 = vmul.f32 %v307, %v1024
      %v1028 = vmul.f32 %v308, %v1024
      %1032 = vrot.lane.b32.xlu0 %v1026, 96
      %v1033 = vpop.permute.xlu0 %1032
      %1034 = vrot.lane.b32.xlu0 %v1027, 96
      %v1035 = vpop.permute.xlu0 %1034
      %1036 = vrot.lane.b32.xlu0 %v1028, 96
      %v1037 = vpop.permute.xlu0 %1036
      %v1038 = vsel %vm362, %v1033, %v1035
      %v1039 = vsel %vm362, %v1035, %v1037
      %v1043 = vadd.f32 %v971, %v1033
      %v1044 = vadd.f32 %v972, %v1038
      %v1045 = vadd.f32 %v973, %v1039
      %1046 = vset.pattern.permute.xlu0 37
      %1047 = vperm.xlu0 %1046, %v309
      %v1048 = vpop.permute.xlu0 %1047
      %v1050 = vmul.f32 %v306, %v1048
      %v1051 = vmul.f32 %v307, %v1048
      %v1052 = vmul.f32 %v308, %v1048
      %1056 = vrot.lane.b32.xlu0 %v1050, 48
      %v1057 = vpop.permute.xlu0 %1056
      %1058 = vrot.lane.b32.xlu0 %v1051, 48
      %v1059 = vpop.permute.xlu0 %1058
      %1060 = vrot.lane.b32.xlu0 %v1052, 48
      %v1061 = vpop.permute.xlu0 %1060
      %v1062 = vsel %vm437, %v1057, %v1059
      %v1063 = vsel %vm437, %v1059, %v1061
      %v1067 = vadd.f32 %v995, %v1057
      %v1068 = vadd.f32 %v996, %v1062
      %v1069 = vadd.f32 %v997, %v1063
      %1070 = vset.pattern.permute.xlu0 70
      %1071 = vperm.xlu0 %1070, %v309
      %v1072 = vpop.permute.xlu0 %1071
      %v1074 = vmul.f32 %v306, %v1072
      %v1075 = vmul.f32 %v307, %v1072
      %v1076 = vmul.f32 %v308, %v1072
      %1080 = vrot.lane.b32.xlu0 %v1074, 64
      %v1081 = vpop.permute.xlu0 %1080
      %1082 = vrot.lane.b32.xlu0 %v1075, 64
      %v1083 = vpop.permute.xlu0 %1082
      %1084 = vrot.lane.b32.xlu0 %v1076, 64
      %v1085 = vpop.permute.xlu0 %1084
      %v1086 = vsel %vm412, %v1081, %v1083
      %v1087 = vsel %vm412, %v1083, %v1085
      %v1091 = vadd.f32 %v1019, %v1081
      %v1092 = vadd.f32 %v1020, %v1086
      %v1093 = vadd.f32 %v1021, %v1087
      %1094 = vset.pattern.permute.xlu0 44
      %1095 = vperm.xlu0 %1094, %v309
      %v1096 = vpop.permute.xlu0 %1095
      %v1098 = vmul.f32 %v306, %v1096
      %v1099 = vmul.f32 %v307, %v1096
      %v1100 = vmul.f32 %v308, %v1096
      %1104 = vrot.lane.b32.xlu0 %v1098, 32
      %v1105 = vpop.permute.xlu0 %1104
      %1106 = vrot.lane.b32.xlu0 %v1099, 32
      %v1107 = vpop.permute.xlu0 %1106
      %1108 = vrot.lane.b32.xlu0 %v1100, 32
      %v1109 = vpop.permute.xlu0 %1108
      %v1110 = vsel %vm462, %v1105, %v1107
      %v1111 = vsel %vm462, %v1107, %v1109
      %v1115 = vadd.f32 %v1067, %v1105
      %v1116 = vadd.f32 %v1068, %v1110
      %v1117 = vadd.f32 %v1069, %v1111
      %s1118 = scalar_lea.vmem %s6, 2
      %v1119 = vld [vmem:[%s1118] ss:$8 sm:$0x3]
      %v1121 = vperm.slane %v1119, 0
      %v1122 = vperm.slane %v1119, 1
      %1123 = vrot.lane.b32.xlu0 %v1121, 79
      %v1124 = vpop.permute.xlu0 %1123
      %1125 = vrot.lane.b32.xlu0 %v1122, 79
      %v1126 = vpop.permute.xlu0 %1125
      %vm1127 = vcmask 646144
      %v1128 = vsel %vm1127, %v1124, %v1126
      %v1132 = vmul.f32 %v1115, %v1124
      %v1133 = vmul.f32 %v1116, %v1128
      %v1134 = vmul.f32 %v1117, %v1126
      %1138 = vrot.lane.b32.xlu0 %v1132, 126
      %v1139 = vpop.permute.xlu0 %1138
      %1140 = vrot.lane.b32.xlu0 %v1133, 126
      %v1141 = vpop.permute.xlu0 %1140
      %1142 = vrot.lane.b32.xlu0 %v1134, 126
      %v1143 = vpop.permute.xlu0 %1142
      %vm1144 = vcmask 1031168
      %v1145 = vsel %vm1144, %v1139, %v1141
      %v1146 = vsel %vm1144, %v1141, %v1143
      %v1150 = vadd.f32 %v782, %v1145
      %v1151 = vadd.f32 %v783, %v1146
      %v1152 = vadd.f32 %v784, %v1143
      %1153 = vrot.lane.b32.xlu0 %v1121, 95
      %v1154 = vpop.permute.xlu0 %1153
      %1155 = vrot.lane.b32.xlu0 %v1122, 95
      %v1156 = vpop.permute.xlu0 %1155
      %vm1157 = vcmask 777216
      %v1158 = vsel %vm1157, %v1154, %v1156
      %v1162 = vmul.f32 %v1091, %v1154
      %v1163 = vmul.f32 %v1092, %v1158
      %v1164 = vmul.f32 %v1093, %v1156
      %1168 = vrot.lane.b32.xlu0 %v1162, 127
      %v1169 = vpop.permute.xlu0 %1168
      %1170 = vrot.lane.b32.xlu0 %v1163, 127
      %v1171 = vpop.permute.xlu0 %1170
      %1172 = vrot.lane.b32.xlu0 %v1164, 127
      %v1173 = vpop.permute.xlu0 %1172
      %v1174 = vsel %vm776, %v1169, %v1171
      %v1175 = vsel %vm776, %v1171, %v1173
      %v1179 = vadd.f32 %v797, %v1174
      %v1180 = vadd.f32 %v798, %v1175
      %v1181 = vadd.f32 %v799, %v1173
      %1182 = vrot.lane.b32.xlu0 %v1121, 111
      %v1183 = vpop.permute.xlu0 %1182
      %1184 = vrot.lane.b32.xlu0 %v1122, 111
      %v1185 = vpop.permute.xlu0 %1184
      %vm1186 = vcmask 908288
      %v1187 = vsel %vm1186, %v1183, %v1185
      %v1191 = vmul.f32 %v1043, %v1183
      %v1192 = vmul.f32 %v1044, %v1187
      %v1193 = vmul.f32 %v1045, %v1185
      %v1194 = vadd.f32 %v1191, 0.0
      %v1195 = vadd.f32 %v1192, 0.0
      %v1196 = vadd.f32 %v1193, 0.0
      %1197 = vset.pattern.permute.xlu0 3
      %1198 = vperm.xlu0 %1197, %v309
      %v1199 = vpop.permute.xlu0 %1198
      %v1201 = vmul.f32 %v302, %v1199
      %v1202 = vmul.f32 %v303, %v1199
      %v1203 = vmul.f32 %v304, %v1199
      %v1204 = vadd.f32 %v1201, 0.0
      %v1205 = vadd.f32 %v1202, 0.0
      %v1206 = vadd.f32 %v1203, 0.0
      %1207 = vset.pattern.permute.xlu0 10
      %1208 = vperm.xlu0 %1207, %v309
      %v1209 = vpop.permute.xlu0 %1208
      %v1211 = vmul.f32 %v302, %v1209
      %v1212 = vmul.f32 %v303, %v1209
      %v1213 = vmul.f32 %v304, %v1209
      %1217 = vrot.lane.b32.xlu0 %v1211, 112
      %v1218 = vpop.permute.xlu0 %1217
      %1219 = vrot.lane.b32.xlu0 %v1212, 112
      %v1220 = vpop.permute.xlu0 %1219
      %1221 = vrot.lane.b32.xlu0 %v1213, 112
      %v1222 = vpop.permute.xlu0 %1221
      %v1223 = vsel %vm337, %v1218, %v1220
      %v1224 = vsel %vm337, %v1220, %v1222
      %v1228 = vadd.f32 %v1204, %v1223
      %v1229 = vadd.f32 %v1205, %v1224
      %v1230 = vadd.f32 %v1206, %v1222
      %1231 = vset.pattern.permute.xlu0 51
      %1232 = vperm.xlu0 %1231, %v309
      %v1233 = vpop.permute.xlu0 %1232
      %v1235 = vmul.f32 %v302, %v1233
      %v1236 = vmul.f32 %v303, %v1233
      %v1237 = vmul.f32 %v304, %v1233
      %v1238 = vadd.f32 %v1235, 0.0
      %v1239 = vadd.f32 %v1236, 0.0
      %v1240 = vadd.f32 %v1237, 0.0
      %1241 = vset.pattern.permute.xlu0 17
      %1242 = vperm.xlu0 %1241, %v309
      %v1243 = vpop.permute.xlu0 %1242
      %v1245 = vmul.f32 %v302, %v1243
      %v1246 = vmul.f32 %v303, %v1243
      %v1247 = vmul.f32 %v304, %v1243
      %1251 = vrot.lane.b32.xlu0 %v1245, 96
      %v1252 = vpop.permute.xlu0 %1251
      %1253 = vrot.lane.b32.xlu0 %v1246, 96
      %v1254 = vpop.permute.xlu0 %1253
      %1255 = vrot.lane.b32.xlu0 %v1247, 96
      %v1256 = vpop.permute.xlu0 %1255
      %v1257 = vsel %vm362, %v1252, %v1254
      %v1258 = vsel %vm362, %v1254, %v1256
      %v1262 = vadd.f32 %v1228, %v1257
      %v1263 = vadd.f32 %v1229, %v1258
      %v1264 = vadd.f32 %v1230, %v1256
      %1265 = vset.pattern.permute.xlu0 56
      %1266 = vperm.xlu0 %1265, %v309
      %v1267 = vpop.permute.xlu0 %1266
      %v1269 = vmul.f32 %v302, %v1267
      %v1270 = vmul.f32 %v303, %v1267
      %v1271 = vmul.f32 %v304, %v1267
      %1275 = vrot.lane.b32.xlu0 %v1269, 112
      %v1276 = vpop.permute.xlu0 %1275
      %1277 = vrot.lane.b32.xlu0 %v1270, 112
      %v1278 = vpop.permute.xlu0 %1277
      %1279 = vrot.lane.b32.xlu0 %v1271, 112
      %v1280 = vpop.permute.xlu0 %1279
      %v1281 = vsel %vm337, %v1276, %v1278
      %v1282 = vsel %vm337, %v1278, %v1280
      %v1286 = vadd.f32 %v1238, %v1281
      %v1287 = vadd.f32 %v1239, %v1282
      %v1288 = vadd.f32 %v1240, %v1280
      %1289 = vset.pattern.permute.xlu0 75
      %1290 = vperm.xlu0 %1289, %v309
      %v1291 = vpop.permute.xlu0 %1290
      %v1293 = vmul.f32 %v302, %v1291
      %v1294 = vmul.f32 %v303, %v1291
      %v1295 = vmul.f32 %v304, %v1291
      %v1296 = vadd.f32 %v1293, 0.0
      %v1297 = vadd.f32 %v1294, 0.0
      %v1298 = vadd.f32 %v1295, 0.0
      %1299 = vset.pattern.permute.xlu0 24
      %1300 = vperm.xlu0 %1299, %v309
      %v1301 = vpop.permute.xlu0 %1300
      %v1303 = vmul.f32 %v306, %v1301
      %v1304 = vmul.f32 %v307, %v1301
      %1307 = vrot.lane.b32.xlu0 %v1303, 80
      %v1308 = vpop.permute.xlu0 %1307
      %1309 = vrot.lane.b32.xlu0 %v1304, 80
      %v1310 = vpop.permute.xlu0 %1309
      %v1311 = vsel %vm387, %v1308, %v1310
      %v1315 = vadd.f32 %v1262, %v1308
      %v1316 = vadd.f32 %v1263, %v1311
      %v1317 = vadd.f32 %v1264, %v1310
      %1318 = vset.pattern.permute.xlu0 61
      %1319 = vperm.xlu0 %1318, %v309
      %v1320 = vpop.permute.xlu0 %1319
      %v1322 = vmul.f32 %v306, %v1320
      %v1323 = vmul.f32 %v307, %v1320
      %1326 = vrot.lane.b32.xlu0 %v1322, 96
      %v1327 = vpop.permute.xlu0 %1326
      %1328 = vrot.lane.b32.xlu0 %v1323, 96
      %v1329 = vpop.permute.xlu0 %1328
      %v1330 = vsel %vm362, %v1327, %v1329
      %v1334 = vadd.f32 %v1286, %v1327
      %v1335 = vadd.f32 %v1287, %v1330
      %v1336 = vadd.f32 %v1288, %v1329
      %1337 = vset.pattern.permute.xlu0 78
      %1338 = vperm.xlu0 %1337, %v309
      %v1339 = vpop.permute.xlu0 %1338
      %v1341 = vmul.f32 %v306, %v1339
      %v1342 = vmul.f32 %v307, %v1339
      %1345 = vrot.lane.b32.xlu0 %v1341, 112
      %v1346 = vpop.permute.xlu0 %1345
      %1347 = vrot.lane.b32.xlu0 %v1342, 112
      %v1348 = vpop.permute.xlu0 %1347
      %v1349 = vsel %vm337, %v1346, %v1348
      %v1353 = vadd.f32 %v1296, %v1346
      %v1354 = vadd.f32 %v1297, %v1349
      %v1355 = vadd.f32 %v1298, %v1348
      %1356 = vset.pattern.permute.xlu0 31
      %1357 = vperm.xlu0 %1356, %v309
      %v1358 = vpop.permute.xlu0 %1357
      %v1360 = vmul.f32 %v306, %v1358
      %v1361 = vmul.f32 %v307, %v1358
      %v1362 = vmul.f32 %v308, %v1358
      %1366 = vrot.lane.b32.xlu0 %v1360, 64
      %v1367 = vpop.permute.xlu0 %1366
      %1368 = vrot.lane.b32.xlu0 %v1361, 64
      %v1369 = vpop.permute.xlu0 %1368
      %1370 = vrot.lane.b32.xlu0 %v1362, 64
      %v1371 = vpop.permute.xlu0 %1370
      %v1372 = vsel %vm412, %v1367, %v1369
      %v1373 = vsel %vm412, %v1369, %v1371
      %v1377 = vadd.f32 %v1315, %v1367
      %v1378 = vadd.f32 %v1316, %v1372
      %v1379 = vadd.f32 %v1317, %v1373
      %1380 = vset.pattern.permute.xlu0 66
      %1381 = vperm.xlu0 %1380, %v309
      %v1382 = vpop.permute.xlu0 %1381
      %v1384 = vmul.f32 %v306, %v1382
      %v1385 = vmul.f32 %v307, %v1382
      %v1386 = vmul.f32 %v308, %v1382
      %1390 = vrot.lane.b32.xlu0 %v1384, 80
      %v1391 = vpop.permute.xlu0 %1390
      %1392 = vrot.lane.b32.xlu0 %v1385, 80
      %v1393 = vpop.permute.xlu0 %1392
      %1394 = vrot.lane.b32.xlu0 %v1386, 80
      %v1395 = vpop.permute.xlu0 %1394
      %v1396 = vsel %vm387, %v1391, %v1393
      %v1397 = vsel %vm387, %v1393, %v1395
      %v1401 = vadd.f32 %v1334, %v1391
      %v1402 = vadd.f32 %v1335, %v1396
      %v1403 = vadd.f32 %v1336, %v1397
      %1404 = vset.pattern.permute.xlu0 81
      %1405 = vperm.xlu0 %1404, %v309
      %v1406 = vpop.permute.xlu0 %1405
      %v1408 = vmul.f32 %v306, %v1406
      %v1409 = vmul.f32 %v307, %v1406
      %v1410 = vmul.f32 %v308, %v1406
      %1414 = vrot.lane.b32.xlu0 %v1408, 96
      %v1415 = vpop.permute.xlu0 %1414
      %1416 = vrot.lane.b32.xlu0 %v1409, 96
      %v1417 = vpop.permute.xlu0 %1416
      %1418 = vrot.lane.b32.xlu0 %v1410, 96
      %v1419 = vpop.permute.xlu0 %1418
      %v1420 = vsel %vm362, %v1415, %v1417
      %v1421 = vsel %vm362, %v1417, %v1419
      %v1425 = vadd.f32 %v1353, %v1415
      %v1426 = vadd.f32 %v1354, %v1420
      %v1427 = vadd.f32 %v1355, %v1421
      %1428 = vset.pattern.permute.xlu0 38
      %1429 = vperm.xlu0 %1428, %v309
      %v1430 = vpop.permute.xlu0 %1429
      %v1432 = vmul.f32 %v306, %v1430
      %v1433 = vmul.f32 %v307, %v1430
      %v1434 = vmul.f32 %v308, %v1430
      %1438 = vrot.lane.b32.xlu0 %v1432, 48
      %v1439 = vpop.permute.xlu0 %1438
      %1440 = vrot.lane.b32.xlu0 %v1433, 48
      %v1441 = vpop.permute.xlu0 %1440
      %1442 = vrot.lane.b32.xlu0 %v1434, 48
      %v1443 = vpop.permute.xlu0 %1442
      %v1444 = vsel %vm437, %v1439, %v1441
      %v1445 = vsel %vm437, %v1441, %v1443
      %v1449 = vadd.f32 %v1377, %v1439
      %v1450 = vadd.f32 %v1378, %v1444
      %v1451 = vadd.f32 %v1379, %v1445
      %1452 = vset.pattern.permute.xlu0 71
      %1453 = vperm.xlu0 %1452, %v309
      %v1454 = vpop.permute.xlu0 %1453
      %v1456 = vmul.f32 %v306, %v1454
      %v1457 = vmul.f32 %v307, %v1454
      %v1458 = vmul.f32 %v308, %v1454
      %1462 = vrot.lane.b32.xlu0 %v1456, 64
      %v1463 = vpop.permute.xlu0 %1462
      %1464 = vrot.lane.b32.xlu0 %v1457, 64
      %v1465 = vpop.permute.xlu0 %1464
      %1466 = vrot.lane.b32.xlu0 %v1458, 64
      %v1467 = vpop.permute.xlu0 %1466
      %v1468 = vsel %vm412, %v1463, %v1465
      %v1469 = vsel %vm412, %v1465, %v1467
      %v1473 = vadd.f32 %v1401, %v1463
      %v1474 = vadd.f32 %v1402, %v1468
      %v1475 = vadd.f32 %v1403, %v1469
      %1476 = vset.pattern.permute.xlu0 45
      %1477 = vperm.xlu0 %1476, %v309
      %v1478 = vpop.permute.xlu0 %1477
      %v1480 = vmul.f32 %v306, %v1478
      %v1481 = vmul.f32 %v307, %v1478
      %v1482 = vmul.f32 %v308, %v1478
      %1486 = vrot.lane.b32.xlu0 %v1480, 32
      %v1487 = vpop.permute.xlu0 %1486
      %1488 = vrot.lane.b32.xlu0 %v1481, 32
      %v1489 = vpop.permute.xlu0 %1488
      %1490 = vrot.lane.b32.xlu0 %v1482, 32
      %v1491 = vpop.permute.xlu0 %1490
      %v1492 = vsel %vm462, %v1487, %v1489
      %v1493 = vsel %vm462, %v1489, %v1491
      %v1497 = vadd.f32 %v1449, %v1487
      %v1498 = vadd.f32 %v1450, %v1492
      %v1499 = vadd.f32 %v1451, %v1493
      %s1500 = scalar_lea.vmem %s6, 3
      %v1501 = vld [vmem:[%s1500] ss:$8 sm:$0x3]
      %v1503 = vperm.slane %v1501, 0
      %v1504 = vperm.slane %v1501, 1
      %1505 = vrot.lane.b32.xlu0 %v1503, 80
      %v1506 = vpop.permute.xlu0 %1505
      %1507 = vrot.lane.b32.xlu0 %v1504, 80
      %v1508 = vpop.permute.xlu0 %1507
      %v1509 = vsel %vm387, %v1506, %v1508
      %v1513 = vmul.f32 %v1497, %v1506
      %v1514 = vmul.f32 %v1498, %v1509
      %v1515 = vmul.f32 %v1499, %v1508
      %1519 = vrot.lane.b32.xlu0 %v1513, 125
      %v1520 = vpop.permute.xlu0 %1519
      %1521 = vrot.lane.b32.xlu0 %v1514, 125
      %v1522 = vpop.permute.xlu0 %1521
      %1523 = vrot.lane.b32.xlu0 %v1515, 125
      %v1524 = vpop.permute.xlu0 %1523
      %vm1525 = vcmask 1022976
      %v1526 = vsel %vm1525, %v1520, %v1522
      %v1527 = vsel %vm1525, %v1522, %v1524
      %v1531 = vadd.f32 %v1150, %v1526
      %v1532 = vadd.f32 %v1151, %v1527
      %v1533 = vadd.f32 %v1152, %v1524
      %1534 = vrot.lane.b32.xlu0 %v1503, 96
      %v1535 = vpop.permute.xlu0 %1534
      %1536 = vrot.lane.b32.xlu0 %v1504, 96
      %v1537 = vpop.permute.xlu0 %1536
      %v1538 = vsel %vm362, %v1535, %v1537
      %v1542 = vmul.f32 %v1473, %v1535
      %v1543 = vmul.f32 %v1474, %v1538
      %v1544 = vmul.f32 %v1475, %v1537
      %1548 = vrot.lane.b32.xlu0 %v1542, 126
      %v1549 = vpop.permute.xlu0 %1548
      %1550 = vrot.lane.b32.xlu0 %v1543, 126
      %v1551 = vpop.permute.xlu0 %1550
      %1552 = vrot.lane.b32.xlu0 %v1544, 126
      %v1553 = vpop.permute.xlu0 %1552
      %v1554 = vsel %vm1144, %v1549, %v1551
      %v1555 = vsel %vm1144, %v1551, %v1553
      %v1559 = vadd.f32 %v1179, %v1554
      %v1560 = vadd.f32 %v1180, %v1555
      %v1561 = vadd.f32 %v1181, %v1553
      %1562 = vrot.lane.b32.xlu0 %v1503, 112
      %v1563 = vpop.permute.xlu0 %1562
      %1564 = vrot.lane.b32.xlu0 %v1504, 112
      %v1565 = vpop.permute.xlu0 %1564
      %v1566 = vsel %vm337, %v1563, %v1565
      %v1570 = vmul.f32 %v1425, %v1563
      %v1571 = vmul.f32 %v1426, %v1566
      %v1572 = vmul.f32 %v1427, %v1565
      %1576 = vrot.lane.b32.xlu0 %v1570, 127
      %v1577 = vpop.permute.xlu0 %1576
      %1578 = vrot.lane.b32.xlu0 %v1571, 127
      %v1579 = vpop.permute.xlu0 %1578
      %1580 = vrot.lane.b32.xlu0 %v1572, 127
      %v1581 = vpop.permute.xlu0 %1580
      %v1582 = vsel %vm776, %v1577, %v1579
      %v1583 = vsel %vm776, %v1579, %v1581
      %v1587 = vadd.f32 %v1194, %v1582
      %v1588 = vadd.f32 %v1195, %v1583
      %v1589 = vadd.f32 %v1196, %v1581
      %1590 = vset.pattern.permute.xlu0 4
      %1591 = vperm.xlu0 %1590, %v309
      %v1592 = vpop.permute.xlu0 %1591
      %v1594 = vmul.f32 %v302, %v1592
      %v1595 = vmul.f32 %v303, %v1592
      %v1596 = vmul.f32 %v304, %v1592
      %v1597 = vadd.f32 %v1594, 0.0
      %v1598 = vadd.f32 %v1595, 0.0
      %v1599 = vadd.f32 %v1596, 0.0
      %1600 = vset.pattern.permute.xlu0 11
      %1601 = vperm.xlu0 %1600, %v309
      %v1602 = vpop.permute.xlu0 %1601
      %v1604 = vmul.f32 %v302, %v1602
      %v1605 = vmul.f32 %v303, %v1602
      %v1606 = vmul.f32 %v304, %v1602
      %1610 = vrot.lane.b32.xlu0 %v1604, 112
      %v1611 = vpop.permute.xlu0 %1610
      %1612 = vrot.lane.b32.xlu0 %v1605, 112
      %v1613 = vpop.permute.xlu0 %1612
      %1614 = vrot.lane.b32.xlu0 %v1606, 112
      %v1615 = vpop.permute.xlu0 %1614
      %v1616 = vsel %vm337, %v1611, %v1613
      %v1617 = vsel %vm337, %v1613, %v1615
      %v1621 = vadd.f32 %v1597, %v1616
      %v1622 = vadd.f32 %v1598, %v1617
      %v1623 = vadd.f32 %v1599, %v1615
      %1624 = vset.pattern.permute.xlu0 52
      %1625 = vperm.xlu0 %1624, %v309
      %v1626 = vpop.permute.xlu0 %1625
      %v1628 = vmul.f32 %v302, %v1626
      %v1629 = vmul.f32 %v303, %v1626
      %v1630 = vmul.f32 %v304, %v1626
      %v1631 = vadd.f32 %v1628, 0.0
      %v1632 = vadd.f32 %v1629, 0.0
      %v1633 = vadd.f32 %v1630, 0.0
      %1634 = vset.pattern.permute.xlu0 18
      %1635 = vperm.xlu0 %1634, %v309
      %v1636 = vpop.permute.xlu0 %1635
      %v1638 = vmul.f32 %v302, %v1636
      %v1639 = vmul.f32 %v303, %v1636
      %v1640 = vmul.f32 %v304, %v1636
      %1644 = vrot.lane.b32.xlu0 %v1638, 96
      %v1645 = vpop.permute.xlu0 %1644
      %1646 = vrot.lane.b32.xlu0 %v1639, 96
      %v1647 = vpop.permute.xlu0 %1646
      %1648 = vrot.lane.b32.xlu0 %v1640, 96
      %v1649 = vpop.permute.xlu0 %1648
      %v1650 = vsel %vm362, %v1645, %v1647
      %v1651 = vsel %vm362, %v1647, %v1649
      %v1655 = vadd.f32 %v1621, %v1650
      %v1656 = vadd.f32 %v1622, %v1651
      %v1657 = vadd.f32 %v1623, %v1649
      %1658 = vset.pattern.permute.xlu0 57
      %1659 = vperm.xlu0 %1658, %v309
      %v1660 = vpop.permute.xlu0 %1659
      %v1662 = vmul.f32 %v302, %v1660
      %v1663 = vmul.f32 %v303, %v1660
      %v1664 = vmul.f32 %v304, %v1660
      %1668 = vrot.lane.b32.xlu0 %v1662, 112
      %v1669 = vpop.permute.xlu0 %1668
      %1670 = vrot.lane.b32.xlu0 %v1663, 112
      %v1671 = vpop.permute.xlu0 %1670
      %1672 = vrot.lane.b32.xlu0 %v1664, 112
      %v1673 = vpop.permute.xlu0 %1672
      %v1674 = vsel %vm337, %v1669, %v1671
      %v1675 = vsel %vm337, %v1671, %v1673
      %v1679 = vadd.f32 %v1631, %v1674
      %v1680 = vadd.f32 %v1632, %v1675
      %v1681 = vadd.f32 %v1633, %v1673
      %1682 = vset.pattern.permute.xlu0 76
      %1683 = vperm.xlu0 %1682, %v309
      %v1684 = vpop.permute.xlu0 %1683
      %v1686 = vmul.f32 %v302, %v1684
      %v1687 = vmul.f32 %v303, %v1684
      %v1688 = vmul.f32 %v304, %v1684
      %v1689 = vadd.f32 %v1686, 0.0
      %v1690 = vadd.f32 %v1687, 0.0
      %v1691 = vadd.f32 %v1688, 0.0
      %1692 = vset.pattern.permute.xlu0 25
      %1693 = vperm.xlu0 %1692, %v309
      %v1694 = vpop.permute.xlu0 %1693
      %v1696 = vmul.f32 %v306, %v1694
      %v1697 = vmul.f32 %v307, %v1694
      %v1698 = vmul.f32 %v308, %v1694
      %1702 = vrot.lane.b32.xlu0 %v1696, 80
      %v1703 = vpop.permute.xlu0 %1702
      %1704 = vrot.lane.b32.xlu0 %v1697, 80
      %v1705 = vpop.permute.xlu0 %1704
      %1706 = vrot.lane.b32.xlu0 %v1698, 80
      %v1707 = vpop.permute.xlu0 %1706
      %v1708 = vsel %vm387, %v1703, %v1705
      %v1709 = vsel %vm387, %v1705, %v1707
      %v1713 = vadd.f32 %v1655, %v1703
      %v1714 = vadd.f32 %v1656, %v1708
      %v1715 = vadd.f32 %v1657, %v1709
      %1716 = vset.pattern.permute.xlu0 62
      %1717 = vperm.xlu0 %1716, %v309
      %v1718 = vpop.permute.xlu0 %1717
      %v1720 = vmul.f32 %v306, %v1718
      %v1721 = vmul.f32 %v307, %v1718
      %v1722 = vmul.f32 %v308, %v1718
      %1726 = vrot.lane.b32.xlu0 %v1720, 96
      %v1727 = vpop.permute.xlu0 %1726
      %1728 = vrot.lane.b32.xlu0 %v1721, 96
      %v1729 = vpop.permute.xlu0 %1728
      %1730 = vrot.lane.b32.xlu0 %v1722, 96
      %v1731 = vpop.permute.xlu0 %1730
      %v1732 = vsel %vm362, %v1727, %v1729
      %v1733 = vsel %vm362, %v1729, %v1731
      %v1737 = vadd.f32 %v1679, %v1727
      %v1738 = vadd.f32 %v1680, %v1732
      %v1739 = vadd.f32 %v1681, %v1733
      %1740 = vset.pattern.permute.xlu0 79
      %1741 = vperm.xlu0 %1740, %v309
      %v1742 = vpop.permute.xlu0 %1741
      %v1744 = vmul.f32 %v306, %v1742
      %v1745 = vmul.f32 %v307, %v1742
      %v1746 = vmul.f32 %v308, %v1742
      %1750 = vrot.lane.b32.xlu0 %v1744, 112
      %v1751 = vpop.permute.xlu0 %1750
      %1752 = vrot.lane.b32.xlu0 %v1745, 112
      %v1753 = vpop.permute.xlu0 %1752
      %1754 = vrot.lane.b32.xlu0 %v1746, 112
      %v1755 = vpop.permute.xlu0 %1754
      %v1756 = vsel %vm337, %v1751, %v1753
      %v1757 = vsel %vm337, %v1753, %v1755
      %v1761 = vadd.f32 %v1689, %v1751
      %v1762 = vadd.f32 %v1690, %v1756
      %v1763 = vadd.f32 %v1691, %v1757
      %1764 = vset.pattern.permute.xlu0 32
      %1765 = vperm.xlu0 %1764, %v309
      %v1766 = vpop.permute.xlu0 %1765
      %v1768 = vmul.f32 %v306, %v1766
      %v1769 = vmul.f32 %v307, %v1766
      %v1770 = vmul.f32 %v308, %v1766
      %1774 = vrot.lane.b32.xlu0 %v1768, 64
      %v1775 = vpop.permute.xlu0 %1774
      %1776 = vrot.lane.b32.xlu0 %v1769, 64
      %v1777 = vpop.permute.xlu0 %1776
      %1778 = vrot.lane.b32.xlu0 %v1770, 64
      %v1779 = vpop.permute.xlu0 %1778
      %v1780 = vsel %vm412, %v1775, %v1777
      %v1781 = vsel %vm412, %v1777, %v1779
      %v1785 = vadd.f32 %v1713, %v1775
      %v1786 = vadd.f32 %v1714, %v1780
      %v1787 = vadd.f32 %v1715, %v1781
      %1788 = vset.pattern.permute.xlu0 67
      %1789 = vperm.xlu0 %1788, %v309
      %v1790 = vpop.permute.xlu0 %1789
      %v1792 = vmul.f32 %v306, %v1790
      %v1793 = vmul.f32 %v307, %v1790
      %v1794 = vmul.f32 %v308, %v1790
      %1798 = vrot.lane.b32.xlu0 %v1792, 80
      %v1799 = vpop.permute.xlu0 %1798
      %1800 = vrot.lane.b32.xlu0 %v1793, 80
      %v1801 = vpop.permute.xlu0 %1800
      %1802 = vrot.lane.b32.xlu0 %v1794, 80
      %v1803 = vpop.permute.xlu0 %1802
      %v1804 = vsel %vm387, %v1799, %v1801
      %v1805 = vsel %vm387, %v1801, %v1803
      %v1809 = vadd.f32 %v1737, %v1799
      %v1810 = vadd.f32 %v1738, %v1804
      %v1811 = vadd.f32 %v1739, %v1805
      %1812 = vset.pattern.permute.xlu0 82
      %1813 = vperm.xlu0 %1812, %v309
      %v1814 = vpop.permute.xlu0 %1813
      %v1816 = vmul.f32 %v306, %v1814
      %v1817 = vmul.f32 %v307, %v1814
      %v1818 = vmul.f32 %v308, %v1814
      %1822 = vrot.lane.b32.xlu0 %v1816, 96
      %v1823 = vpop.permute.xlu0 %1822
      %1824 = vrot.lane.b32.xlu0 %v1817, 96
      %v1825 = vpop.permute.xlu0 %1824
      %1826 = vrot.lane.b32.xlu0 %v1818, 96
      %v1827 = vpop.permute.xlu0 %1826
      %v1828 = vsel %vm362, %v1823, %v1825
      %v1829 = vsel %vm362, %v1825, %v1827
      %v1833 = vadd.f32 %v1761, %v1823
      %v1834 = vadd.f32 %v1762, %v1828
      %v1835 = vadd.f32 %v1763, %v1829
      %1836 = vset.pattern.permute.xlu0 39
      %1837 = vperm.xlu0 %1836, %v309
      %v1838 = vpop.permute.xlu0 %1837
      %v1840 = vmul.f32 %v306, %v1838
      %v1841 = vmul.f32 %v307, %v1838
      %v1842 = vmul.f32 %v308, %v1838
      %1846 = vrot.lane.b32.xlu0 %v1840, 48
      %v1847 = vpop.permute.xlu0 %1846
      %1848 = vrot.lane.b32.xlu0 %v1841, 48
      %v1849 = vpop.permute.xlu0 %1848
      %1850 = vrot.lane.b32.xlu0 %v1842, 48
      %v1851 = vpop.permute.xlu0 %1850
      %v1852 = vsel %vm437, %v1847, %v1849
      %v1853 = vsel %vm437, %v1849, %v1851
      %v1857 = vadd.f32 %v1785, %v1847
      %v1858 = vadd.f32 %v1786, %v1852
      %v1859 = vadd.f32 %v1787, %v1853
      %1860 = vset.pattern.permute.xlu0 72
      %1861 = vperm.xlu0 %1860, %v309
      %v1862 = vpop.permute.xlu0 %1861
      %v1864 = vmul.f32 %v306, %v1862
      %v1865 = vmul.f32 %v307, %v1862
      %v1866 = vmul.f32 %v308, %v1862
      %1870 = vrot.lane.b32.xlu0 %v1864, 64
      %v1871 = vpop.permute.xlu0 %1870
      %1872 = vrot.lane.b32.xlu0 %v1865, 64
      %v1873 = vpop.permute.xlu0 %1872
      %1874 = vrot.lane.b32.xlu0 %v1866, 64
      %v1875 = vpop.permute.xlu0 %1874
      %v1876 = vsel %vm412, %v1871, %v1873
      %v1877 = vsel %vm412, %v1873, %v1875
      %v1881 = vadd.f32 %v1809, %v1871
      %v1882 = vadd.f32 %v1810, %v1876
      %v1883 = vadd.f32 %v1811, %v1877
      %1884 = vset.pattern.permute.xlu0 46
      %1885 = vperm.xlu0 %1884, %v309
      %v1886 = vpop.permute.xlu0 %1885
      %v1888 = vmul.f32 %v306, %v1886
      %v1889 = vmul.f32 %v307, %v1886
      %v1890 = vmul.f32 %v308, %v1886
      %1894 = vrot.lane.b32.xlu0 %v1888, 32
      %v1895 = vpop.permute.xlu0 %1894
      %1896 = vrot.lane.b32.xlu0 %v1889, 32
      %v1897 = vpop.permute.xlu0 %1896
      %1898 = vrot.lane.b32.xlu0 %v1890, 32
      %v1899 = vpop.permute.xlu0 %1898
      %v1900 = vsel %vm462, %v1895, %v1897
      %v1901 = vsel %vm462, %v1897, %v1899
      %v1905 = vadd.f32 %v1857, %v1895
      %v1906 = vadd.f32 %v1858, %v1900
      %v1907 = vadd.f32 %v1859, %v1901
      %s1908 = scalar_lea.vmem %s6, 4
      %v1909 = vld [vmem:[%s1908] ss:$8 sm:$0x3]
      %v1911 = vperm.slane %v1909, 0
      %v1912 = vperm.slane %v1909, 1
      %1913 = vrot.lane.b32.xlu0 %v1911, 81
      %v1914 = vpop.permute.xlu0 %1913
      %1915 = vrot.lane.b32.xlu0 %v1912, 81
      %v1916 = vpop.permute.xlu0 %1915
      %vm1917 = vcmask 662528
      %v1918 = vsel %vm1917, %v1914, %v1916
      %v1922 = vmul.f32 %v1905, %v1914
      %v1923 = vmul.f32 %v1906, %v1918
      %v1924 = vmul.f32 %v1907, %v1916
      %1928 = vrot.lane.b32.xlu0 %v1922, 124
      %v1929 = vpop.permute.xlu0 %1928
      %1930 = vrot.lane.b32.xlu0 %v1923, 124
      %v1931 = vpop.permute.xlu0 %1930
      %1932 = vrot.lane.b32.xlu0 %v1924, 124
      %v1933 = vpop.permute.xlu0 %1932
      %vm1934 = vcmask 1014784
      %v1935 = vsel %vm1934, %v1929, %v1931
      %v1936 = vsel %vm1934, %v1931, %v1933
      %v1940 = vadd.f32 %v1531, %v1935
      %v1941 = vadd.f32 %v1532, %v1936
      %v1942 = vadd.f32 %v1533, %v1933
      %1943 = vrot.lane.b32.xlu0 %v1911, 97
      %v1944 = vpop.permute.xlu0 %1943
      %1945 = vrot.lane.b32.xlu0 %v1912, 97
      %v1946 = vpop.permute.xlu0 %1945
      %vm1947 = vcmask 793600
      %v1948 = vsel %vm1947, %v1944, %v1946
      %v1952 = vmul.f32 %v1881, %v1944
      %v1953 = vmul.f32 %v1882, %v1948
      %v1954 = vmul.f32 %v1883, %v1946
      %1958 = vrot.lane.b32.xlu0 %v1952, 125
      %v1959 = vpop.permute.xlu0 %1958
      %1960 = vrot.lane.b32.xlu0 %v1953, 125
      %v1961 = vpop.permute.xlu0 %1960
      %1962 = vrot.lane.b32.xlu0 %v1954, 125
      %v1963 = vpop.permute.xlu0 %1962
      %v1964 = vsel %vm1525, %v1959, %v1961
      %v1965 = vsel %vm1525, %v1961, %v1963
      %v1969 = vadd.f32 %v1559, %v1964
      %v1970 = vadd.f32 %v1560, %v1965
      %v1971 = vadd.f32 %v1561, %v1963
      %1972 = vrot.lane.b32.xlu0 %v1911, 113
      %v1973 = vpop.permute.xlu0 %1972
      %1974 = vrot.lane.b32.xlu0 %v1912, 113
      %v1975 = vpop.permute.xlu0 %1974
      %vm1976 = vcmask 924672
      %v1977 = vsel %vm1976, %v1973, %v1975
      %v1981 = vmul.f32 %v1833, %v1973
      %v1982 = vmul.f32 %v1834, %v1977
      %v1983 = vmul.f32 %v1835, %v1975
      %1987 = vrot.lane.b32.xlu0 %v1981, 126
      %v1988 = vpop.permute.xlu0 %1987
      %1989 = vrot.lane.b32.xlu0 %v1982, 126
      %v1990 = vpop.permute.xlu0 %1989
      %1991 = vrot.lane.b32.xlu0 %v1983, 126
      %v1992 = vpop.permute.xlu0 %1991
      %v1993 = vsel %vm1144, %v1988, %v1990
      %v1994 = vsel %vm1144, %v1990, %v1992
      %v1998 = vadd.f32 %v1587, %v1993
      %v1999 = vadd.f32 %v1588, %v1994
      %v2000 = vadd.f32 %v1589, %v1992
      %2001 = vset.pattern.permute.xlu0 5
      %2002 = vperm.xlu0 %2001, %v309
      %v2003 = vpop.permute.xlu0 %2002
      %v2005 = vmul.f32 %v302, %v2003
      %v2006 = vmul.f32 %v303, %v2003
      %v2007 = vmul.f32 %v304, %v2003
      %v2008 = vadd.f32 %v2005, 0.0
      %v2009 = vadd.f32 %v2006, 0.0
      %v2010 = vadd.f32 %v2007, 0.0
      %2011 = vset.pattern.permute.xlu0 12
      %2012 = vperm.xlu0 %2011, %v309
      %v2013 = vpop.permute.xlu0 %2012
      %v2015 = vmul.f32 %v302, %v2013
      %v2016 = vmul.f32 %v303, %v2013
      %v2017 = vmul.f32 %v304, %v2013
      %2021 = vrot.lane.b32.xlu0 %v2015, 112
      %v2022 = vpop.permute.xlu0 %2021
      %2023 = vrot.lane.b32.xlu0 %v2016, 112
      %v2024 = vpop.permute.xlu0 %2023
      %2025 = vrot.lane.b32.xlu0 %v2017, 112
      %v2026 = vpop.permute.xlu0 %2025
      %v2027 = vsel %vm337, %v2022, %v2024
      %v2028 = vsel %vm337, %v2024, %v2026
      %v2032 = vadd.f32 %v2008, %v2027
      %v2033 = vadd.f32 %v2009, %v2028
      %v2034 = vadd.f32 %v2010, %v2026
      %2035 = vset.pattern.permute.xlu0 53
      %2036 = vperm.xlu0 %2035, %v309
      %v2037 = vpop.permute.xlu0 %2036
      %v2039 = vmul.f32 %v302, %v2037
      %v2040 = vmul.f32 %v303, %v2037
      %v2041 = vmul.f32 %v304, %v2037
      %v2042 = vadd.f32 %v2039, 0.0
      %v2043 = vadd.f32 %v2040, 0.0
      %v2044 = vadd.f32 %v2041, 0.0
      %2045 = vset.pattern.permute.xlu0 19
      %2046 = vperm.xlu0 %2045, %v309
      %v2047 = vpop.permute.xlu0 %2046
      %v2049 = vmul.f32 %v302, %v2047
      %v2050 = vmul.f32 %v303, %v2047
      %v2051 = vmul.f32 %v304, %v2047
      %2055 = vrot.lane.b32.xlu0 %v2049, 96
      %v2056 = vpop.permute.xlu0 %2055
      %2057 = vrot.lane.b32.xlu0 %v2050, 96
      %v2058 = vpop.permute.xlu0 %2057
      %2059 = vrot.lane.b32.xlu0 %v2051, 96
      %v2060 = vpop.permute.xlu0 %2059
      %v2061 = vsel %vm362, %v2056, %v2058
      %v2062 = vsel %vm362, %v2058, %v2060
      %v2066 = vadd.f32 %v2032, %v2061
      %v2067 = vadd.f32 %v2033, %v2062
      %v2068 = vadd.f32 %v2034, %v2060
      %2069 = vset.pattern.permute.xlu0 58
      %2070 = vperm.xlu0 %2069, %v309
      %v2071 = vpop.permute.xlu0 %2070
      %v2073 = vmul.f32 %v302, %v2071
      %v2074 = vmul.f32 %v303, %v2071
      %v2075 = vmul.f32 %v304, %v2071
      %2079 = vrot.lane.b32.xlu0 %v2073, 112
      %v2080 = vpop.permute.xlu0 %2079
      %2081 = vrot.lane.b32.xlu0 %v2074, 112
      %v2082 = vpop.permute.xlu0 %2081
      %2083 = vrot.lane.b32.xlu0 %v2075, 112
      %v2084 = vpop.permute.xlu0 %2083
      %v2085 = vsel %vm337, %v2080, %v2082
      %v2086 = vsel %vm337, %v2082, %v2084
      %v2090 = vadd.f32 %v2042, %v2085
      %v2091 = vadd.f32 %v2043, %v2086
      %v2092 = vadd.f32 %v2044, %v2084
      %2093 = vset.pattern.permute.xlu0 26
      %2094 = vperm.xlu0 %2093, %v309
      %v2095 = vpop.permute.xlu0 %2094
      %v2097 = vmul.f32 %v306, %v2095
      %v2098 = vmul.f32 %v307, %v2095
      %v2099 = vmul.f32 %v308, %v2095
      %2103 = vrot.lane.b32.xlu0 %v2097, 80
      %v2104 = vpop.permute.xlu0 %2103
      %2105 = vrot.lane.b32.xlu0 %v2098, 80
      %v2106 = vpop.permute.xlu0 %2105
      %2107 = vrot.lane.b32.xlu0 %v2099, 80
      %v2108 = vpop.permute.xlu0 %2107
      %v2109 = vsel %vm387, %v2104, %v2106
      %v2110 = vsel %vm387, %v2106, %v2108
      %v2114 = vadd.f32 %v2066, %v2104
      %v2115 = vadd.f32 %v2067, %v2109
      %v2116 = vadd.f32 %v2068, %v2110
      %2117 = vset.pattern.permute.xlu0 63
      %2118 = vperm.xlu0 %2117, %v309
      %v2119 = vpop.permute.xlu0 %2118
      %v2121 = vmul.f32 %v306, %v2119
      %v2122 = vmul.f32 %v307, %v2119
      %v2123 = vmul.f32 %v308, %v2119
      %2127 = vrot.lane.b32.xlu0 %v2121, 96
      %v2128 = vpop.permute.xlu0 %2127
      %2129 = vrot.lane.b32.xlu0 %v2122, 96
      %v2130 = vpop.permute.xlu0 %2129
      %2131 = vrot.lane.b32.xlu0 %v2123, 96
      %v2132 = vpop.permute.xlu0 %2131
      %v2133 = vsel %vm362, %v2128, %v2130
      %v2134 = vsel %vm362, %v2130, %v2132
      %v2138 = vadd.f32 %v2090, %v2128
      %v2139 = vadd.f32 %v2091, %v2133
      %v2140 = vadd.f32 %v2092, %v2134
      %2141 = vset.pattern.permute.xlu0 33
      %2142 = vperm.xlu0 %2141, %v309
      %v2143 = vpop.permute.xlu0 %2142
      %v2145 = vmul.f32 %v306, %v2143
      %v2146 = vmul.f32 %v307, %v2143
      %v2147 = vmul.f32 %v308, %v2143
      %2151 = vrot.lane.b32.xlu0 %v2145, 64
      %v2152 = vpop.permute.xlu0 %2151
      %2153 = vrot.lane.b32.xlu0 %v2146, 64
      %v2154 = vpop.permute.xlu0 %2153
      %2155 = vrot.lane.b32.xlu0 %v2147, 64
      %v2156 = vpop.permute.xlu0 %2155
      %v2157 = vsel %vm412, %v2152, %v2154
      %v2158 = vsel %vm412, %v2154, %v2156
      %v2162 = vadd.f32 %v2114, %v2152
      %v2163 = vadd.f32 %v2115, %v2157
      %v2164 = vadd.f32 %v2116, %v2158
      %2165 = vset.pattern.permute.xlu0 68
      %2166 = vperm.xlu0 %2165, %v309
      %v2167 = vpop.permute.xlu0 %2166
      %v2169 = vmul.f32 %v306, %v2167
      %v2170 = vmul.f32 %v307, %v2167
      %v2171 = vmul.f32 %v308, %v2167
      %2175 = vrot.lane.b32.xlu0 %v2169, 80
      %v2176 = vpop.permute.xlu0 %2175
      %2177 = vrot.lane.b32.xlu0 %v2170, 80
      %v2178 = vpop.permute.xlu0 %2177
      %2179 = vrot.lane.b32.xlu0 %v2171, 80
      %v2180 = vpop.permute.xlu0 %2179
      %v2181 = vsel %vm387, %v2176, %v2178
      %v2182 = vsel %vm387, %v2178, %v2180
      %v2186 = vadd.f32 %v2138, %v2176
      %v2187 = vadd.f32 %v2139, %v2181
      %v2188 = vadd.f32 %v2140, %v2182
      %2189 = vset.pattern.permute.xlu0 40
      %2190 = vperm.xlu0 %2189, %v309
      %v2191 = vpop.permute.xlu0 %2190
      %v2193 = vmul.f32 %v306, %v2191
      %v2194 = vmul.f32 %v307, %v2191
      %v2195 = vmul.f32 %v308, %v2191
      %2199 = vrot.lane.b32.xlu0 %v2193, 48
      %v2200 = vpop.permute.xlu0 %2199
      %2201 = vrot.lane.b32.xlu0 %v2194, 48
      %v2202 = vpop.permute.xlu0 %2201
      %2203 = vrot.lane.b32.xlu0 %v2195, 48
      %v2204 = vpop.permute.xlu0 %2203
      %v2205 = vsel %vm437, %v2200, %v2202
      %v2206 = vsel %vm437, %v2202, %v2204
      %v2210 = vadd.f32 %v2162, %v2200
      %v2211 = vadd.f32 %v2163, %v2205
      %v2212 = vadd.f32 %v2164, %v2206
      %2213 = vset.pattern.permute.xlu0 73
      %2214 = vperm.xlu0 %2213, %v309
      %v2215 = vpop.permute.xlu0 %2214
      %v2217 = vmul.f32 %v306, %v2215
      %v2218 = vmul.f32 %v307, %v2215
      %v2219 = vmul.f32 %v308, %v2215
      %2223 = vrot.lane.b32.xlu0 %v2217, 64
      %v2224 = vpop.permute.xlu0 %2223
      %2225 = vrot.lane.b32.xlu0 %v2218, 64
      %v2226 = vpop.permute.xlu0 %2225
      %2227 = vrot.lane.b32.xlu0 %v2219, 64
      %v2228 = vpop.permute.xlu0 %2227
      %v2229 = vsel %vm412, %v2224, %v2226
      %v2230 = vsel %vm412, %v2226, %v2228
      %v2234 = vadd.f32 %v2186, %v2224
      %v2235 = vadd.f32 %v2187, %v2229
      %v2236 = vadd.f32 %v2188, %v2230
      %2237 = vset.pattern.permute.xlu0 47
      %2238 = vperm.xlu0 %2237, %v309
      %v2239 = vpop.permute.xlu0 %2238
      %v2241 = vmul.f32 %v306, %v2239
      %v2242 = vmul.f32 %v307, %v2239
      %v2243 = vmul.f32 %v308, %v2239
      %2247 = vrot.lane.b32.xlu0 %v2241, 32
      %v2248 = vpop.permute.xlu0 %2247
      %2249 = vrot.lane.b32.xlu0 %v2242, 32
      %v2250 = vpop.permute.xlu0 %2249
      %2251 = vrot.lane.b32.xlu0 %v2243, 32
      %v2252 = vpop.permute.xlu0 %2251
      %v2253 = vsel %vm462, %v2248, %v2250
      %v2254 = vsel %vm462, %v2250, %v2252
      %v2258 = vadd.f32 %v2210, %v2248
      %v2259 = vadd.f32 %v2211, %v2253
      %v2260 = vadd.f32 %v2212, %v2254
      %s2261 = scalar_lea.vmem %s6, 5
      %v2262 = vld [vmem:[%s2261] ss:$8 sm:$0x3]
      %v2264 = vperm.slane %v2262, 0
      %v2265 = vperm.slane %v2262, 1
      %2266 = vrot.lane.b32.xlu0 %v2264, 82
      %v2267 = vpop.permute.xlu0 %2266
      %2268 = vrot.lane.b32.xlu0 %v2265, 82
      %v2269 = vpop.permute.xlu0 %2268
      %vm2270 = vcmask 670720
      %v2271 = vsel %vm2270, %v2267, %v2269
      %v2275 = vmul.f32 %v2258, %v2267
      %v2276 = vmul.f32 %v2259, %v2271
      %v2277 = vmul.f32 %v2260, %v2269
      %2281 = vrot.lane.b32.xlu0 %v2275, 123
      %v2282 = vpop.permute.xlu0 %2281
      %2283 = vrot.lane.b32.xlu0 %v2276, 123
      %v2284 = vpop.permute.xlu0 %2283
      %2285 = vrot.lane.b32.xlu0 %v2277, 123
      %v2286 = vpop.permute.xlu0 %2285
      %vm2287 = vcmask 1006592
      %v2288 = vsel %vm2287, %v2282, %v2284
      %v2289 = vsel %vm2287, %v2284, %v2286
      %v2293 = vadd.f32 %v1940, %v2288
      %v2294 = vadd.f32 %v1941, %v2289
      %v2295 = vadd.f32 %v1942, %v2286
      %2296 = vrot.lane.b32.xlu0 %v2264, 98
      %v2297 = vpop.permute.xlu0 %2296
      %2298 = vrot.lane.b32.xlu0 %v2265, 98
      %v2299 = vpop.permute.xlu0 %2298
      %vm2300 = vcmask 801792
      %v2301 = vsel %vm2300, %v2297, %v2299
      %v2305 = vmul.f32 %v2234, %v2297
      %v2306 = vmul.f32 %v2235, %v2301
      %v2307 = vmul.f32 %v2236, %v2299
      %2311 = vrot.lane.b32.xlu0 %v2305, 124
      %v2312 = vpop.permute.xlu0 %2311
      %2313 = vrot.lane.b32.xlu0 %v2306, 124
      %v2314 = vpop.permute.xlu0 %2313
      %2315 = vrot.lane.b32.xlu0 %v2307, 124
      %v2316 = vpop.permute.xlu0 %2315
      %v2317 = vsel %vm1934, %v2312, %v2314
      %v2318 = vsel %vm1934, %v2314, %v2316
      %v2322 = vadd.f32 %v1969, %v2317
      %v2323 = vadd.f32 %v1970, %v2318
      %v2324 = vadd.f32 %v1971, %v2316
      %2325 = vset.pattern.permute.xlu0 6
      %2326 = vperm.xlu0 %2325, %v309
      %v2327 = vpop.permute.xlu0 %2326
      %v2329 = vmul.f32 %v302, %v2327
      %v2330 = vmul.f32 %v303, %v2327
      %v2331 = vmul.f32 %v304, %v2327
      %v2332 = vadd.f32 %v2329, 0.0
      %v2333 = vadd.f32 %v2330, 0.0
      %v2334 = vadd.f32 %v2331, 0.0
      %2335 = vset.pattern.permute.xlu0 13
      %2336 = vperm.xlu0 %2335, %v309
      %v2337 = vpop.permute.xlu0 %2336
      %v2339 = vmul.f32 %v302, %v2337
      %v2340 = vmul.f32 %v303, %v2337
      %v2341 = vmul.f32 %v304, %v2337
      %2345 = vrot.lane.b32.xlu0 %v2339, 112
      %v2346 = vpop.permute.xlu0 %2345
      %2347 = vrot.lane.b32.xlu0 %v2340, 112
      %v2348 = vpop.permute.xlu0 %2347
      %2349 = vrot.lane.b32.xlu0 %v2341, 112
      %v2350 = vpop.permute.xlu0 %2349
      %v2351 = vsel %vm337, %v2346, %v2348
      %v2352 = vsel %vm337, %v2348, %v2350
      %v2356 = vadd.f32 %v2332, %v2351
      %v2357 = vadd.f32 %v2333, %v2352
      %v2358 = vadd.f32 %v2334, %v2350
      %2359 = vset.pattern.permute.xlu0 20
      %2360 = vperm.xlu0 %2359, %v309
      %v2361 = vpop.permute.xlu0 %2360
      %v2363 = vmul.f32 %v302, %v2361
      %v2364 = vmul.f32 %v303, %v2361
      %v2365 = vmul.f32 %v304, %v2361
      %2369 = vrot.lane.b32.xlu0 %v2363, 96
      %v2370 = vpop.permute.xlu0 %2369
      %2371 = vrot.lane.b32.xlu0 %v2364, 96
      %v2372 = vpop.permute.xlu0 %2371
      %2373 = vrot.lane.b32.xlu0 %v2365, 96
      %v2374 = vpop.permute.xlu0 %2373
      %v2375 = vsel %vm362, %v2370, %v2372
      %v2376 = vsel %vm362, %v2372, %v2374
      %v2380 = vadd.f32 %v2356, %v2375
      %v2381 = vadd.f32 %v2357, %v2376
      %v2382 = vadd.f32 %v2358, %v2374
      %2383 = vset.pattern.permute.xlu0 27
      %2384 = vperm.xlu0 %2383, %v309
      %v2385 = vpop.permute.xlu0 %2384
      %v2387 = vmul.f32 %v306, %v2385
      %v2388 = vmul.f32 %v307, %v2385
      %v2389 = vmul.f32 %v308, %v2385
      %2393 = vrot.lane.b32.xlu0 %v2387, 80
      %v2394 = vpop.permute.xlu0 %2393
      %2395 = vrot.lane.b32.xlu0 %v2388, 80
      %v2396 = vpop.permute.xlu0 %2395
      %2397 = vrot.lane.b32.xlu0 %v2389, 80
      %v2398 = vpop.permute.xlu0 %2397
      %v2399 = vsel %vm387, %v2394, %v2396
      %v2400 = vsel %vm387, %v2396, %v2398
      %v2404 = vadd.f32 %v2380, %v2394
      %v2405 = vadd.f32 %v2381, %v2399
      %v2406 = vadd.f32 %v2382, %v2400
      %2407 = vset.pattern.permute.xlu0 34
      %2408 = vperm.xlu0 %2407, %v309
      %v2409 = vpop.permute.xlu0 %2408
      %v2411 = vmul.f32 %v306, %v2409
      %v2412 = vmul.f32 %v307, %v2409
      %v2413 = vmul.f32 %v308, %v2409
      %2417 = vrot.lane.b32.xlu0 %v2411, 64
      %v2418 = vpop.permute.xlu0 %2417
      %2419 = vrot.lane.b32.xlu0 %v2412, 64
      %v2420 = vpop.permute.xlu0 %2419
      %2421 = vrot.lane.b32.xlu0 %v2413, 64
      %v2422 = vpop.permute.xlu0 %2421
      %v2423 = vsel %vm412, %v2418, %v2420
      %v2424 = vsel %vm412, %v2420, %v2422
      %v2428 = vadd.f32 %v2404, %v2418
      %v2429 = vadd.f32 %v2405, %v2423
      %v2430 = vadd.f32 %v2406, %v2424
      %2431 = vset.pattern.permute.xlu0 41
      %2432 = vperm.xlu0 %2431, %v309
      %v2433 = vpop.permute.xlu0 %2432
      %v2435 = vmul.f32 %v306, %v2433
      %v2436 = vmul.f32 %v307, %v2433
      %v2437 = vmul.f32 %v308, %v2433
      %2441 = vrot.lane.b32.xlu0 %v2435, 48
      %v2442 = vpop.permute.xlu0 %2441
      %2443 = vrot.lane.b32.xlu0 %v2436, 48
      %v2444 = vpop.permute.xlu0 %2443
      %2445 = vrot.lane.b32.xlu0 %v2437, 48
      %v2446 = vpop.permute.xlu0 %2445
      %v2447 = vsel %vm437, %v2442, %v2444
      %v2448 = vsel %vm437, %v2444, %v2446
      %v2452 = vadd.f32 %v2428, %v2442
      %v2453 = vadd.f32 %v2429, %v2447
      %v2454 = vadd.f32 %v2430, %v2448
      %2455 = vset.pattern.permute.xlu0 48
      %2456 = vperm.xlu0 %2455, %v309
      %v2457 = vpop.permute.xlu0 %2456
      %v2459 = vmul.f32 %v306, %v2457
      %v2460 = vmul.f32 %v307, %v2457
      %v2461 = vmul.f32 %v308, %v2457
      %2465 = vrot.lane.b32.xlu0 %v2459, 32
      %v2466 = vpop.permute.xlu0 %2465
      %2467 = vrot.lane.b32.xlu0 %v2460, 32
      %v2468 = vpop.permute.xlu0 %2467
      %2469 = vrot.lane.b32.xlu0 %v2461, 32
      %v2470 = vpop.permute.xlu0 %2469
      %v2471 = vsel %vm462, %v2466, %v2468
      %v2472 = vsel %vm462, %v2468, %v2470
      %v2476 = vadd.f32 %v2452, %v2466
      %v2477 = vadd.f32 %v2453, %v2471
      %v2478 = vadd.f32 %v2454, %v2472
      %s2479 = scalar_lea.vmem %s6, 6
      %v2480 = vld [vmem:[%s2479] ss:$8 sm:$0x3]
      %v2482 = vperm.slane %v2480, 0
      %v2483 = vperm.slane %v2480, 1
      %2484 = vrot.lane.b32.xlu0 %v2482, 83
      %v2485 = vpop.permute.xlu0 %2484
      %2486 = vrot.lane.b32.xlu0 %v2483, 83
      %v2487 = vpop.permute.xlu0 %2486
      %vm2488 = vcmask 678912
      %v2489 = vsel %vm2488, %v2485, %v2487
      %v2493 = vmul.f32 %v2476, %v2485
      %v2494 = vmul.f32 %v2477, %v2489
      %v2495 = vmul.f32 %v2478, %v2487
      %2499 = vrot.lane.b32.xlu0 %v2493, 122
      %v2500 = vpop.permute.xlu0 %2499
      %2501 = vrot.lane.b32.xlu0 %v2494, 122
      %v2502 = vpop.permute.xlu0 %2501
      %2503 = vrot.lane.b32.xlu0 %v2495, 122
      %v2504 = vpop.permute.xlu0 %2503
      %vm2505 = vcmask 998400
      %v2506 = vsel %vm2505, %v2500, %v2502
      %v2507 = vsel %vm2505, %v2502, %v2504
      %v2511 = vadd.f32 %v2293, %v2506
      %v2512 = vadd.f32 %v2294, %v2507
      %v2513 = vadd.f32 %v2295, %v2504
      %v2514 = vld [vmem:[%s1] sm:$0xff]
      %2516 = vset.pattern.permute.xlu0 2
      %2517 = vperm.xlu0 %2516, %v2514
      %v2518 = vpop.permute.xlu0 %2517
      %v2520 = vadd.f32 %v2511, %v2518
      %v2521 = vadd.f32 %v2512, %v2518
      %v2522 = vadd.f32 %v2513, %v2518
      %v2523 = vmul.f32 %v2520, 0.5
      %v2524 = vmul.f32 %v2521, 0.5
      %v2525 = vmul.f32 %v2522, 0.5
      %v2526 = vmul.f32 %v2520, 0.70710677
      %v2527 = vmul.f32 %v2521, 0.70710677
      %v2528 = vmul.f32 %v2522, 0.70710677
      %vm2529 = vcmp.ge.f32.partialorder %v2526, 0.0
      %vm2530 = vcmp.ge.f32.partialorder %v2527, 0.0
      %vm2531 = vcmp.ge.f32.partialorder %v2528, 0.0
      %v2532 = vsel %vm2529, 1.0, -1.0
      %v2533 = vsel %vm2530, 1.0, -1.0
      %v2534 = vsel %vm2531, 1.0, -1.0
      %v2535 = vand.u32 2147483647, %v2526
      %v2536 = vand.u32 2147483647, %v2527
      %v2537 = vand.u32 2147483647, %v2528
      %v2538 = vmul.f32 %v2535, 0.3275911
      %v2539 = vmul.f32 %v2536, 0.3275911
      %v2540 = vmul.f32 %v2537, 0.3275911
      %v2541 = vadd.f32 %v2538, 1.0
      %v2542 = vadd.f32 %v2539, 1.0
      %v2543 = vadd.f32 %v2540, 1.0
      %v2544 = vrcp.pop %v2541
      %v2545 = vrcp.pop %v2542
      %v2546 = vrcp.pop %v2543
      %v2547 = vmul.f32 %v2544, 1.0614054
      %v2548 = vmul.f32 %v2545, 1.0614054
      %v2549 = vmul.f32 %v2546, 1.0614054
      %v2550 = vadd.f32 %v2547, -1.4531521
      %v2551 = vadd.f32 %v2548, -1.4531521
      %v2552 = vadd.f32 %v2549, -1.4531521
      %v2553 = vmul.f32 %v2550, %v2544
      %v2554 = vmul.f32 %v2551, %v2545
      %v2555 = vmul.f32 %v2552, %v2546
      %v2556 = vadd.f32 %v2553, 1.4214138
      %v2557 = vadd.f32 %v2554, 1.4214138
      %v2558 = vadd.f32 %v2555, 1.4214138
      %v2559 = vmul.f32 %v2556, %v2544
      %v2560 = vmul.f32 %v2557, %v2545
      %v2561 = vmul.f32 %v2558, %v2546
      %v2562 = vadd.f32 %v2559, -0.28449672
      %v2563 = vadd.f32 %v2560, -0.28449672
      %v2564 = vadd.f32 %v2561, -0.28449672
      %v2565 = vmul.f32 %v2562, %v2544
      %v2566 = vmul.f32 %v2563, %v2545
      %v2567 = vmul.f32 %v2564, %v2546
      %v2568 = vadd.f32 %v2565, 0.2548296
      %v2569 = vadd.f32 %v2566, 0.2548296
      %v2570 = vadd.f32 %v2567, 0.2548296
      %v2571 = vmul.f32 %v2568, %v2544
      %v2572 = vmul.f32 %v2569, %v2545
      %v2573 = vmul.f32 %v2570, %v2546
      %v2574 = vsub.f32 0.0, %v2535
      %v2575 = vsub.f32 0.0, %v2536
      %v2576 = vsub.f32 0.0, %v2537
      %v2577 = vmul.f32 %v2574, %v2535
      %v2578 = vmul.f32 %v2575, %v2536
      %v2579 = vmul.f32 %v2576, %v2537
      %v2580 = vmul.f32 %v2577, 1.442695
      %v2581 = vpow.pop %v2580
      %v2582 = vmul.f32 %v2578, 1.442695
      %v2583 = vpow.pop %v2582
      %v2584 = vmul.f32 %v2579, 1.442695
      %v2585 = vpow.pop %v2584
      %v2586 = vmul.f32 %v2571, %v2581
      %v2587 = vmul.f32 %v2572, %v2583
      %v2588 = vmul.f32 %v2573, %v2585
      %v2589 = vsub.f32 1.0, %v2586
      %v2590 = vsub.f32 1.0, %v2587
      %v2591 = vsub.f32 1.0, %v2588
      %v2592 = vmul.f32 %v2532, %v2589
      %v2593 = vmul.f32 %v2533, %v2590
      %v2594 = vmul.f32 %v2534, %v2591
      %v2595 = vadd.f32 %v2592, 1.0
      %v2596 = vadd.f32 %v2593, 1.0
      %v2597 = vadd.f32 %v2594, 1.0
      %v2598 = vmul.f32 %v2523, %v2595
      %v2599 = vmul.f32 %v2524, %v2596
      %v2600 = vmul.f32 %v2525, %v2597
      %2601 = vset.pattern.permute.xlu0 3
      %2602 = vperm.xlu0 %2601, %v2514
      %v2603 = vpop.permute.xlu0 %2602
      %v2605 = vadd.f32 %v2322, %v2603
      %v2606 = vadd.f32 %v2323, %v2603
      %v2607 = vadd.f32 %v2324, %v2603
      %v2608 = vmul.f32 %v2605, 0.5
      %v2609 = vmul.f32 %v2606, 0.5
      %v2610 = vmul.f32 %v2607, 0.5
      %v2611 = vmul.f32 %v2605, 0.70710677
      %v2612 = vmul.f32 %v2606, 0.70710677
      %v2613 = vmul.f32 %v2607, 0.70710677
      %vm2614 = vcmp.ge.f32.partialorder %v2611, 0.0
      %vm2615 = vcmp.ge.f32.partialorder %v2612, 0.0
      %vm2616 = vcmp.ge.f32.partialorder %v2613, 0.0
      %v2617 = vsel %vm2614, 1.0, -1.0
      %v2618 = vsel %vm2615, 1.0, -1.0
      %v2619 = vsel %vm2616, 1.0, -1.0
      %v2620 = vand.u32 2147483647, %v2611
      %v2621 = vand.u32 2147483647, %v2612
      %v2622 = vand.u32 2147483647, %v2613
      %v2623 = vmul.f32 %v2620, 0.3275911
      %v2624 = vmul.f32 %v2621, 0.3275911
      %v2625 = vmul.f32 %v2622, 0.3275911
      %v2626 = vadd.f32 %v2623, 1.0
      %v2627 = vadd.f32 %v2624, 1.0
      %v2628 = vadd.f32 %v2625, 1.0
      %v2629 = vrcp.pop %v2626
      %v2630 = vrcp.pop %v2627
      %v2631 = vrcp.pop %v2628
      %v2632 = vmul.f32 %v2629, 1.0614054
      %v2633 = vmul.f32 %v2630, 1.0614054
      %v2634 = vmul.f32 %v2631, 1.0614054
      %v2635 = vadd.f32 %v2632, -1.4531521
      %v2636 = vadd.f32 %v2633, -1.4531521
      %v2637 = vadd.f32 %v2634, -1.4531521
      %v2638 = vmul.f32 %v2635, %v2629
      %v2639 = vmul.f32 %v2636, %v2630
      %v2640 = vmul.f32 %v2637, %v2631
      %v2641 = vadd.f32 %v2638, 1.4214138
      %v2642 = vadd.f32 %v2639, 1.4214138
      %v2643 = vadd.f32 %v2640, 1.4214138
      %v2644 = vmul.f32 %v2641, %v2629
      %v2645 = vmul.f32 %v2642, %v2630
      %v2646 = vmul.f32 %v2643, %v2631
      %v2647 = vadd.f32 %v2644, -0.28449672
      %v2648 = vadd.f32 %v2645, -0.28449672
      %v2649 = vadd.f32 %v2646, -0.28449672
      %v2650 = vmul.f32 %v2647, %v2629
      %v2651 = vmul.f32 %v2648, %v2630
      %v2652 = vmul.f32 %v2649, %v2631
      %v2653 = vadd.f32 %v2650, 0.2548296
      %v2654 = vadd.f32 %v2651, 0.2548296
      %v2655 = vadd.f32 %v2652, 0.2548296
      %v2656 = vmul.f32 %v2653, %v2629
      %v2657 = vmul.f32 %v2654, %v2630
      %v2658 = vmul.f32 %v2655, %v2631
      %v2659 = vsub.f32 0.0, %v2620
      %v2660 = vsub.f32 0.0, %v2621
      %v2661 = vsub.f32 0.0, %v2622
      %v2662 = vmul.f32 %v2659, %v2620
      %v2663 = vmul.f32 %v2660, %v2621
      %v2664 = vmul.f32 %v2661, %v2622
      %v2665 = vmul.f32 %v2662, 1.442695
      %v2666 = vpow.pop %v2665
      %v2667 = vmul.f32 %v2663, 1.442695
      %v2668 = vpow.pop %v2667
      %v2669 = vmul.f32 %v2664, 1.442695
      %v2670 = vpow.pop %v2669
      %v2671 = vmul.f32 %v2656, %v2666
      %v2672 = vmul.f32 %v2657, %v2668
      %v2673 = vmul.f32 %v2658, %v2670
      %v2674 = vsub.f32 1.0, %v2671
      %v2675 = vsub.f32 1.0, %v2672
      %v2676 = vsub.f32 1.0, %v2673
      %v2677 = vmul.f32 %v2617, %v2674
      %v2678 = vmul.f32 %v2618, %v2675
      %v2679 = vmul.f32 %v2619, %v2676
      %v2680 = vadd.f32 %v2677, 1.0
      %v2681 = vadd.f32 %v2678, 1.0
      %v2682 = vadd.f32 %v2679, 1.0
      %v2683 = vmul.f32 %v2608, %v2680
      %v2684 = vmul.f32 %v2609, %v2681
      %v2685 = vmul.f32 %v2610, %v2682
      %2686 = vset.pattern.permute.xlu0 4
      %2687 = vperm.xlu0 %2686, %v2514
      %v2688 = vpop.permute.xlu0 %2687
      %v2690 = vadd.f32 %v1998, %v2688
      %v2691 = vadd.f32 %v1999, %v2688
      %v2692 = vadd.f32 %v2000, %v2688
      %v2693 = vmul.f32 %v2690, 0.5
      %v2694 = vmul.f32 %v2691, 0.5
      %v2695 = vmul.f32 %v2692, 0.5
      %v2696 = vmul.f32 %v2690, 0.70710677
      %v2697 = vmul.f32 %v2691, 0.70710677
      %v2698 = vmul.f32 %v2692, 0.70710677
      %vm2699 = vcmp.ge.f32.partialorder %v2696, 0.0
      %vm2700 = vcmp.ge.f32.partialorder %v2697, 0.0
      %vm2701 = vcmp.ge.f32.partialorder %v2698, 0.0
      %v2702 = vsel %vm2699, 1.0, -1.0
      %v2703 = vsel %vm2700, 1.0, -1.0
      %v2704 = vsel %vm2701, 1.0, -1.0
      %v2705 = vand.u32 2147483647, %v2696
      %v2706 = vand.u32 2147483647, %v2697
      %v2707 = vand.u32 2147483647, %v2698
      %v2708 = vmul.f32 %v2705, 0.3275911
      %v2709 = vmul.f32 %v2706, 0.3275911
      %v2710 = vmul.f32 %v2707, 0.3275911
      %v2711 = vadd.f32 %v2708, 1.0
      %v2712 = vadd.f32 %v2709, 1.0
      %v2713 = vadd.f32 %v2710, 1.0
      %v2714 = vrcp.pop %v2711
      %v2715 = vrcp.pop %v2712
      %v2716 = vrcp.pop %v2713
      %v2717 = vmul.f32 %v2714, 1.0614054
      %v2718 = vmul.f32 %v2715, 1.0614054
      %v2719 = vmul.f32 %v2716, 1.0614054
      %v2720 = vadd.f32 %v2717, -1.4531521
      %v2721 = vadd.f32 %v2718, -1.4531521
      %v2722 = vadd.f32 %v2719, -1.4531521
      %v2723 = vmul.f32 %v2720, %v2714
      %v2724 = vmul.f32 %v2721, %v2715
      %v2725 = vmul.f32 %v2722, %v2716
      %v2726 = vadd.f32 %v2723, 1.4214138
      %v2727 = vadd.f32 %v2724, 1.4214138
      %v2728 = vadd.f32 %v2725, 1.4214138
      %v2729 = vmul.f32 %v2726, %v2714
      %v2730 = vmul.f32 %v2727, %v2715
      %v2731 = vmul.f32 %v2728, %v2716
      %v2732 = vadd.f32 %v2729, -0.28449672
      %v2733 = vadd.f32 %v2730, -0.28449672
      %v2734 = vadd.f32 %v2731, -0.28449672
      %v2735 = vmul.f32 %v2732, %v2714
      %v2736 = vmul.f32 %v2733, %v2715
      %v2737 = vmul.f32 %v2734, %v2716
      %v2738 = vadd.f32 %v2735, 0.2548296
      %v2739 = vadd.f32 %v2736, 0.2548296
      %v2740 = vadd.f32 %v2737, 0.2548296
      %v2741 = vmul.f32 %v2738, %v2714
      %v2742 = vmul.f32 %v2739, %v2715
      %v2743 = vmul.f32 %v2740, %v2716
      %v2744 = vsub.f32 0.0, %v2705
      %v2745 = vsub.f32 0.0, %v2706
      %v2746 = vsub.f32 0.0, %v2707
      %v2747 = vmul.f32 %v2744, %v2705
      %v2748 = vmul.f32 %v2745, %v2706
      %v2749 = vmul.f32 %v2746, %v2707
      %v2750 = vmul.f32 %v2747, 1.442695
      %v2751 = vpow.pop %v2750
      %v2752 = vmul.f32 %v2748, 1.442695
      %v2753 = vpow.pop %v2752
      %v2754 = vmul.f32 %v2749, 1.442695
      %v2755 = vpow.pop %v2754
      %v2756 = vmul.f32 %v2741, %v2751
      %v2757 = vmul.f32 %v2742, %v2753
      %v2758 = vmul.f32 %v2743, %v2755
      %v2759 = vsub.f32 1.0, %v2756
      %v2760 = vsub.f32 1.0, %v2757
      %v2761 = vsub.f32 1.0, %v2758
      %v2762 = vmul.f32 %v2702, %v2759
      %v2763 = vmul.f32 %v2703, %v2760
      %v2764 = vmul.f32 %v2704, %v2761
      %v2765 = vadd.f32 %v2762, 1.0
      %v2766 = vadd.f32 %v2763, 1.0
      %v2767 = vadd.f32 %v2764, 1.0
      %v2768 = vmul.f32 %v2693, %v2765
      %v2769 = vmul.f32 %v2694, %v2766
      %v2770 = vmul.f32 %v2695, %v2767
      %2774 = vrot.lane.b32.xlu0 %v2683, 111
      %v2775 = vpop.permute.xlu0 %2774
      %2776 = vrot.lane.b32.xlu0 %v2684, 111
      %v2777 = vpop.permute.xlu0 %2776
      %2778 = vrot.lane.b32.xlu0 %v2685, 111
      %v2779 = vpop.permute.xlu0 %2778
      %v2780 = vsel %vm1186, %v2775, %v2777
      %v2781 = vsel %vm1186, %v2777, %v2779
      %2788 = vrot.lane.b32.xlu0 %v2768, 94
      %v2789 = vpop.permute.xlu0 %2788
      %2790 = vrot.lane.b32.xlu0 %v2769, 94
      %v2791 = vpop.permute.xlu0 %2790
      %2792 = vrot.lane.b32.xlu0 %v2770, 94
      %v2793 = vpop.permute.xlu0 %2792
      %v2794 = vsel %vm789, %v2789, %v2791
      %v2795 = vsel %vm789, %v2791, %v2793
      %v2799 = vpack.c.bf16 %v2780, %v2598
      %v2800 = vpack.c.bf16 %v2781, %v2599
      %v2801 = vpack.c.bf16 %v2779, %v2600
      %v2802 = vpack.c.bf16 %v2794, %v2794
      %v2803 = vpack.c.bf16 %v2795, %v2795
      %v2804 = vpack.c.bf16 %v2793, %v2793
      %v2805 = vld [vmem:[%s3] sm:$0xf]
      %2806 = vset.pattern.permute.xlu0 5
      %2807 = vperm.xlu0 %2806, %v2514
      %v2808 = vpop.permute.xlu0 %2807
      %2816 = vrot.lane.b32.xlu0 %v2799, 51
      %v2817 = vpop.permute.xlu0 %2816
      %2818 = vrot.lane.b32.xlu0 %v2800, 51
      %v2819 = vpop.permute.xlu0 %2818
      %2820 = vrot.lane.b32.xlu0 %v2801, 51
      %v2821 = vpop.permute.xlu0 %2820
      %2822 = vrot.lane.b32.xlu0 %v2802, 51
      %v2823 = vpop.permute.xlu0 %2822
      %2824 = vrot.lane.b32.xlu0 %v2803, 51
      %v2825 = vpop.permute.xlu0 %2824
      %2826 = vrot.lane.b32.xlu0 %v2804, 51
      %v2827 = vpop.permute.xlu0 %2826
      %vm2828 = vcmask 416768
      %v2829 = vsel %vm2828, %v2817, %v2819
      %v2830 = vsel %vm2828, %v2819, %v2821
      %v2831 = vsel %vm2828, %v2823, %v2825
      %v2832 = vsel %vm2828, %v2825, %v2827
      %vm2835 = vcmask 195584
      %v2837 = vsel %vm2835, %v2805, 0
      %vm2839 = vcmask 1043456
      %v2841 = vsel %vm2839, %v2831, 0
      %v2844 = vsel %vm2839, %v2832, 0
      %2846 = vmatpush.bf16.msra.mxu0 0
      %2847 = vmatpush.bf16.msra.mxu0 0
      %2848 = vmatpush.bf16.msra.mxu0 0
      %2849 = vmatpush.bf16.msra.mxu0 0
      %2850 = vmatpush.bf16.msra.mxu0 0
      %2851 = vmatpush.bf16.msra.mxu0 0
      %2852 = vmatpush.bf16.msra.mxu0 %v2841
      %2853 = vmatpush.bf16.msra.mxu0 %v2829
      %2854 = vmatmul.bf16.gmra.mxu0 %v2837
      %v2855 = vpop.f32.mrf.mxu0
      %v2856 = vadd.f32 %v2808, %v2855
      %v2857 = vpop.f32.mrf.mxu0
      %2858 = vdwg.mxu0
      %2859 = vmatpush.bf16.msra.mxu0 0
      %2860 = vmatpush.bf16.msra.mxu0 0
      %2861 = vmatpush.bf16.msra.mxu0 0
      %2862 = vmatpush.bf16.msra.mxu0 0
      %2863 = vmatpush.bf16.msra.mxu0 0
      %2864 = vmatpush.bf16.msra.mxu0 0
      %2865 = vmatpush.bf16.msra.mxu0 %v2844
      %2866 = vmatpush.bf16.msra.mxu0 %v2830
      %2867 = vmatmul.bf16.gmra.mxu0 %v2837
      %v2868 = vpop.f32.mrf.mxu0
      %v2869 = vadd.f32 %v2808, %v2868
      %v2870 = vpop.f32.mrf.mxu0
      %2871 = vdwg.mxu0
      %2872 = vst [vmem:[#allocation2 + $0x8] sm:$0xff] %v2856
      %2873 = vst [vmem:[#allocation2 + $0x10] sm:$0xff] %v2869
      %v2874 = vld [vmem:[#allocation2] sm:$0xff]
      %v2875 = vld [vmem:[#allocation2 + $0x8] sm:$0xff]
      %v2876 = vld [vmem:[#allocation2 + $0x10] sm:$0xff]
      %v2877 = vadd.f32 %v2874, 0.0
      %v2878 = vadd.f32 %v2875, 0.0
      %v2879 = vadd.f32 %v2876, 0.0
      %2883 = vrot.lane.b32.xlu0 %v2874, 112
      %v2884 = vpop.permute.xlu0 %2883
      %2885 = vrot.lane.b32.xlu0 %v2875, 112
      %v2886 = vpop.permute.xlu0 %2885
      %2887 = vrot.lane.b32.xlu0 %v2876, 112
      %v2888 = vpop.permute.xlu0 %2887
      %v2889 = vsel %vm337, %v2884, %v2886
      %v2890 = vsel %vm337, %v2886, %v2888
      %v2894 = vadd.f32 %v2877, %v2889
      %v2895 = vadd.f32 %v2878, %v2890
      %v2896 = vadd.f32 %v2879, %v2888
      %v2897 = vld [vmem:[#allocation2 + $0x8] sm:$0xff]
      %v2898 = vld [vmem:[#allocation2 + $0x10] sm:$0xff]
      %v2899 = vld [vmem:[#allocation2 + $0x18] sm:$0xff]
      %2903 = vrot.lane.b32.xlu0 %v2897, 96
      %v2904 = vpop.permute.xlu0 %2903
      %2905 = vrot.lane.b32.xlu0 %v2898, 96
      %v2906 = vpop.permute.xlu0 %2905
      %2907 = vrot.lane.b32.xlu0 %v2899, 96
      %v2908 = vpop.permute.xlu0 %2907
      %v2909 = vsel %vm362, %v2904, %v2906
      %v2910 = vsel %vm362, %v2906, %v2908
      %v2914 = vadd.f32 %v2894, %v2904
      %v2915 = vadd.f32 %v2895, %v2909
      %v2916 = vadd.f32 %v2896, %v2910
      %v2917 = vld [vmem:[%s1118] ss:$8 sm:$0x3]
      %v2919 = vperm.slane %v2917, 0
      %v2920 = vperm.slane %v2917, 1
      %2921 = vrot.lane.b32.xlu0 %v2919, 111
      %v2922 = vpop.permute.xlu0 %2921
      %2923 = vrot.lane.b32.xlu0 %v2920, 111
      %v2924 = vpop.permute.xlu0 %2923
      %v2925 = vsel %vm1186, %v2922, %v2924
      %v2929 = vmul.f32 %v2914, %v2922
      %v2930 = vmul.f32 %v2915, %v2925
      %v2931 = vmul.f32 %v2916, %v2924
      %v2932 = vadd.f32 %v2929, 0.0
      %v2933 = vadd.f32 %v2930, 0.0
      %v2934 = vadd.f32 %v2931, 0.0
      %v2936 = vadd.f32 %v2877, %v2886
      %v2937 = vadd.f32 %v2936, %v2904
      %v2938 = vld [vmem:[%s1500] ss:$8 sm:$0x3]
      %v2940 = vperm.slane %v2938, 0
      %v2941 = vperm.slane %v2938, 1
      %2942 = vrot.lane.b32.xlu0 %v2940, 112
      %v2943 = vpop.permute.xlu0 %2942
      %2944 = vrot.lane.b32.xlu0 %v2941, 112
      %v2945 = vpop.permute.xlu0 %2944
      %v2946 = vsel %vm337, %v2943, %v2945
      %v2950 = vmul.f32 %v2937, %v2943
      %v2951 = vmul.f32 %v2915, %v2946
      %v2952 = vmul.f32 %v2916, %v2945
      %2956 = vrot.lane.b32.xlu0 %v2950, 127
      %v2957 = vpop.permute.xlu0 %2956
      %2958 = vrot.lane.b32.xlu0 %v2951, 127
      %v2959 = vpop.permute.xlu0 %2958
      %2960 = vrot.lane.b32.xlu0 %v2952, 127
      %v2961 = vpop.permute.xlu0 %2960
      %v2962 = vsel %vm776, %v2957, %v2959
      %v2963 = vsel %vm776, %v2959, %v2961
      %v2967 = vadd.f32 %v2932, %v2962
      %v2968 = vadd.f32 %v2933, %v2963
      %v2969 = vadd.f32 %v2934, %v2961
      %2970 = vrot.lane.b32.xlu0 %v2897, 112
      %v2971 = vpop.permute.xlu0 %2970
      %2972 = vrot.lane.b32.xlu0 %v2898, 112
      %v2973 = vpop.permute.xlu0 %2972
      %2974 = vrot.lane.b32.xlu0 %v2899, 112
      %v2975 = vpop.permute.xlu0 %2974
      %v2976 = vsel %vm337, %v2971, %v2973
      %v2977 = vsel %vm337, %v2973, %v2975
      %v2981 = vadd.f32 %v2877, %v2971
      %v2982 = vadd.f32 %v2878, %v2976
      %v2983 = vadd.f32 %v2879, %v2977
      %v2984 = vadd.f32 %v2981, %v2904
      %v2985 = vadd.f32 %v2982, %v2909
      %v2986 = vadd.f32 %v2983, %v2910
      %v2987 = vld [vmem:[%s1908] ss:$8 sm:$0x3]
      %v2989 = vperm.slane %v2987, 0
      %v2990 = vperm.slane %v2987, 1
      %2991 = vrot.lane.b32.xlu0 %v2989, 113
      %v2992 = vpop.permute.xlu0 %2991
      %2993 = vrot.lane.b32.xlu0 %v2990, 113
      %v2994 = vpop.permute.xlu0 %2993
      %v2995 = vsel %vm1976, %v2992, %v2994
      %v2999 = vmul.f32 %v2984, %v2992
      %v3000 = vmul.f32 %v2985, %v2995
      %v3001 = vmul.f32 %v2986, %v2994
      %3005 = vrot.lane.b32.xlu0 %v2999, 126
      %v3006 = vpop.permute.xlu0 %3005
      %3007 = vrot.lane.b32.xlu0 %v3000, 126
      %v3008 = vpop.permute.xlu0 %3007
      %3009 = vrot.lane.b32.xlu0 %v3001, 126
      %v3010 = vpop.permute.xlu0 %3009
      %v3011 = vsel %vm1144, %v3006, %v3008
      %v3012 = vsel %vm1144, %v3008, %v3010
      %v3016 = vadd.f32 %v2967, %v3011
      %v3017 = vadd.f32 %v2968, %v3012
      %v3018 = vadd.f32 %v2969, %v3010
      %v3019 = vmul.f32 %v3016, 0.11111111
      %v3020 = vmul.f32 %v3017, 0.11111111
      %v3021 = vmul.f32 %v3018, 0.11111111
      %3025 = vrot.lane.b32.xlu0 %v3019, 17
      %v3026 = vpop.permute.xlu0 %3025
      %3027 = vrot.lane.b32.xlu0 %v3020, 17
      %v3028 = vpop.permute.xlu0 %3027
      %3029 = vrot.lane.b32.xlu0 %v3021, 17
      %v3030 = vpop.permute.xlu0 %3029
      %vm3031 = vcmask 138240
      %v3032 = vsel %vm3031, %v3026, %v3028
      %v3033 = vsel %vm3031, %v3028, %v3030
      %v3036 = vsub.f32 %v2856, %v3032
      %v3037 = vsub.f32 %v2869, %v3033
      %v3038 = vld [vmem:[%s3] sm:$0xf]
      %v3039 = vpack.c.bf16 %v3036, %v3036
      %v3040 = vpack.c.bf16 %v3037, %v3037
      %v3041 = vld [vmem:[%s1] sm:$0xff]
      %3043 = vset.pattern.permute.xlu0 6
      %3044 = vperm.xlu0 %3043, %v3041
      %v3045 = vpop.permute.xlu0 %3044
      %v3048 = vunpack.c.l.b16 %v3038
      %v3049 = vpack.c.b16 %v3048, %v3048
      %3050 = vrot.lane.b32.xlu0 %v3049, 104
      %v3051 = vpop.permute.xlu0 %3050
      %vm3052 = vcmask 64512
      %v3054 = vsel %vm3052, %v3051, 0
      %v3057 = vsel %vm2839, %v3039, 0
      %v3060 = vsel %vm2839, %v3040, 0
      %3062 = vmatpush.bf16.msra.mxu0 0
      %3063 = vmatpush.bf16.msra.mxu0 0
      %3064 = vmatpush.bf16.msra.mxu0 0
      %3065 = vmatpush.bf16.msra.mxu0 0
      %3066 = vmatpush.bf16.msra.mxu0 0
      %3067 = vmatpush.bf16.msra.mxu0 0
      %3068 = vmatpush.bf16.msra.mxu0 0
      %3069 = vmatpush.bf16.msra.mxu0 %v3057
      %3070 = vmatmul.bf16.gmra.mxu0 %v3054
      %v3071 = vpop.f32.mrf.mxu0
      %v3072 = vadd.f32 %v3045, %v3071
      %v3073 = vpop.f32.mrf.mxu0
      %3074 = vdwg.mxu0
      %3075 = vmatpush.bf16.msra.mxu0 0
      %3076 = vmatpush.bf16.msra.mxu0 0
      %3077 = vmatpush.bf16.msra.mxu0 0
      %3078 = vmatpush.bf16.msra.mxu0 0
      %3079 = vmatpush.bf16.msra.mxu0 0
      %3080 = vmatpush.bf16.msra.mxu0 0
      %3081 = vmatpush.bf16.msra.mxu0 0
      %3082 = vmatpush.bf16.msra.mxu0 %v3060
      %3083 = vmatmul.bf16.gmra.mxu0 %v3054
      %v3084 = vpop.f32.mrf.mxu0
      %v3085 = vadd.f32 %v3045, %v3084
      %v3086 = vpop.f32.mrf.mxu0
      %3087 = vdwg.mxu0
      %v3088 = vsub.f32 0.0, %v3072
      %v3089 = vsub.f32 0.0, %v3085
      %v3090 = vmul.f32 %v3088, 1.442695
      %v3091 = vpow.pop %v3090
      %v3092 = vmul.f32 %v3089, 1.442695
      %v3093 = vpow.pop %v3092
      %v3094 = vadd.f32 %v3091, 1.0
      %v3095 = vadd.f32 %v3093, 1.0
      %v3096 = vrcp.pop %v3094
      %v3097 = vrcp.pop %v3095
      %v3098 = vadd.f32 %v3096, 1.0
      %v3099 = vadd.f32 %v3097, 1.0
      %v3100 = vmul.f32 %v2856, %v3098
      %v3101 = vmul.f32 %v2869, %v3099
      %3102 = vst [vmem:[#allocation2 + $0x8] sm:$0xff] %v3100
      %3103 = vst [vmem:[#allocation2 + $0x10] sm:$0xff] %v3101
      %v3104 = vld [vmem:[#allocation2] sm:$0xff]
      %v3105 = vld [vmem:[#allocation2 + $0x8] sm:$0xff]
      %v3106 = vld [vmem:[#allocation2 + $0x10] sm:$0xff]
      %v3107 = vadd.f32 %v3104, 0.0
      %v3108 = vadd.f32 %v3105, 0.0
      %v3109 = vadd.f32 %v3106, 0.0
      %3113 = vrot.lane.b32.xlu0 %v3104, 112
      %v3114 = vpop.permute.xlu0 %3113
      %3115 = vrot.lane.b32.xlu0 %v3105, 112
      %v3116 = vpop.permute.xlu0 %3115
      %3117 = vrot.lane.b32.xlu0 %v3106, 112
      %v3118 = vpop.permute.xlu0 %3117
      %v3119 = vsel %vm337, %v3114, %v3116
      %v3120 = vsel %vm337, %v3116, %v3118
      %v3124 = vadd.f32 %v3107, %v3119
      %v3125 = vadd.f32 %v3108, %v3120
      %v3126 = vadd.f32 %v3109, %v3118
      %v3127 = vld [vmem:[#allocation2 + $0x8] sm:$0xff]
      %v3128 = vld [vmem:[#allocation2 + $0x10] sm:$0xff]
      %v3129 = vld [vmem:[#allocation2 + $0x18] sm:$0xff]
      %3133 = vrot.lane.b32.xlu0 %v3127, 96
      %v3134 = vpop.permute.xlu0 %3133
      %3135 = vrot.lane.b32.xlu0 %v3128, 96
      %v3136 = vpop.permute.xlu0 %3135
      %3137 = vrot.lane.b32.xlu0 %v3129, 96
      %v3138 = vpop.permute.xlu0 %3137
      %v3139 = vsel %vm362, %v3134, %v3136
      %v3140 = vsel %vm362, %v3136, %v3138
      %v3144 = vadd.f32 %v3124, %v3134
      %v3145 = vadd.f32 %v3125, %v3139
      %v3146 = vadd.f32 %v3126, %v3140
      %v3147 = vld [vmem:[%s1118] ss:$8 sm:$0x3]
      %v3149 = vperm.slane %v3147, 0
      %v3150 = vperm.slane %v3147, 1
      %3151 = vrot.lane.b32.xlu0 %v3149, 111
      %v3152 = vpop.permute.xlu0 %3151
      %3153 = vrot.lane.b32.xlu0 %v3150, 111
      %v3154 = vpop.permute.xlu0 %3153
      %v3155 = vsel %vm1186, %v3152, %v3154
      %v3159 = vmul.f32 %v3144, %v3152
      %v3160 = vmul.f32 %v3145, %v3155
      %v3161 = vmul.f32 %v3146, %v3154
      %v3162 = vadd.f32 %v3159, 0.0
      %v3163 = vadd.f32 %v3160, 0.0
      %v3164 = vadd.f32 %v3161, 0.0
      %v3166 = vadd.f32 %v3107, %v3116
      %v3167 = vadd.f32 %v3166, %v3134
      %v3168 = vld [vmem:[%s1500] ss:$8 sm:$0x3]
      %v3170 = vperm.slane %v3168, 0
      %v3171 = vperm.slane %v3168, 1
      %3172 = vrot.lane.b32.xlu0 %v3170, 112
      %v3173 = vpop.permute.xlu0 %3172
      %3174 = vrot.lane.b32.xlu0 %v3171, 112
      %v3175 = vpop.permute.xlu0 %3174
      %v3176 = vsel %vm337, %v3173, %v3175
      %v3180 = vmul.f32 %v3167, %v3173
      %v3181 = vmul.f32 %v3145, %v3176
      %v3182 = vmul.f32 %v3146, %v3175
      %3186 = vrot.lane.b32.xlu0 %v3180, 127
      %v3187 = vpop.permute.xlu0 %3186
      %3188 = vrot.lane.b32.xlu0 %v3181, 127
      %v3189 = vpop.permute.xlu0 %3188
      %3190 = vrot.lane.b32.xlu0 %v3182, 127
      %v3191 = vpop.permute.xlu0 %3190
      %v3192 = vsel %vm776, %v3187, %v3189
      %v3193 = vsel %vm776, %v3189, %v3191
      %v3197 = vadd.f32 %v3162, %v3192
      %v3198 = vadd.f32 %v3163, %v3193
      %v3199 = vadd.f32 %v3164, %v3191
      %3200 = vrot.lane.b32.xlu0 %v3127, 112
      %v3201 = vpop.permute.xlu0 %3200
      %3202 = vrot.lane.b32.xlu0 %v3128, 112
      %v3203 = vpop.permute.xlu0 %3202
      %3204 = vrot.lane.b32.xlu0 %v3129, 112
      %v3205 = vpop.permute.xlu0 %3204
      %v3206 = vsel %vm337, %v3201, %v3203
      %v3207 = vsel %vm337, %v3203, %v3205
      %v3211 = vadd.f32 %v3107, %v3201
      %v3212 = vadd.f32 %v3108, %v3206
      %v3213 = vadd.f32 %v3109, %v3207
      %v3214 = vadd.f32 %v3211, %v3134
      %v3215 = vadd.f32 %v3212, %v3139
      %v3216 = vadd.f32 %v3213, %v3140
      %v3217 = vld [vmem:[%s1908] ss:$8 sm:$0x3]
      %v3219 = vperm.slane %v3217, 0
      %v3220 = vperm.slane %v3217, 1
      %3221 = vrot.lane.b32.xlu0 %v3219, 113
      %v3222 = vpop.permute.xlu0 %3221
      %3223 = vrot.lane.b32.xlu0 %v3220, 113
      %v3224 = vpop.permute.xlu0 %3223
      %v3225 = vsel %vm1976, %v3222, %v3224
      %v3229 = vmul.f32 %v3214, %v3222
      %v3230 = vmul.f32 %v3215, %v3225
      %v3231 = vmul.f32 %v3216, %v3224
      %3235 = vrot.lane.b32.xlu0 %v3229, 126
      %v3236 = vpop.permute.xlu0 %3235
      %3237 = vrot.lane.b32.xlu0 %v3230, 126
      %v3238 = vpop.permute.xlu0 %3237
      %3239 = vrot.lane.b32.xlu0 %v3231, 126
      %v3240 = vpop.permute.xlu0 %3239
      %v3241 = vsel %vm1144, %v3236, %v3238
      %v3242 = vsel %vm1144, %v3238, %v3240
      %v3246 = vadd.f32 %v3197, %v3241
      %v3247 = vadd.f32 %v3198, %v3242
      %v3248 = vadd.f32 %v3199, %v3240
      %vm3249 = vcmask 1048440
      %3250 = vst.msk [vmem:[#allocation2] sm:$0xff] %vm3249, -1e+30
      %3251 = vst.msk [vmem:[#allocation2 + $0x18] sm:$0xff] %vm3031, -1e+30
      %v3252 = vld [vmem:[#allocation2] sm:$0xff]
      %v3253 = vld [vmem:[#allocation2 + $0x8] sm:$0xff]
      %v3254 = vld [vmem:[#allocation2 + $0x10] sm:$0xff]
      %v3255 = vmax.f32 %v3252, -1e+30
      %v3256 = vmax.f32 %v3253, -1e+30
      %v3257 = vmax.f32 %v3254, -1e+30
      %3261 = vrot.lane.b32.xlu0 %v3252, 112
      %v3262 = vpop.permute.xlu0 %3261
      %3263 = vrot.lane.b32.xlu0 %v3253, 112
      %v3264 = vpop.permute.xlu0 %3263
      %3265 = vrot.lane.b32.xlu0 %v3254, 112
      %v3266 = vpop.permute.xlu0 %3265
      %v3267 = vsel %vm337, %v3262, %v3264
      %v3268 = vsel %vm337, %v3264, %v3266
      %v3272 = vmax.f32 %v3255, %v3267
      %v3273 = vmax.f32 %v3256, %v3268
      %v3274 = vmax.f32 %v3257, %v3266
      %v3275 = vld [vmem:[#allocation2 + $0x8] sm:$0xff]
      %v3276 = vld [vmem:[#allocation2 + $0x10] sm:$0xff]
      %v3277 = vld [vmem:[#allocation2 + $0x18] sm:$0xff]
      %3281 = vrot.lane.b32.xlu0 %v3275, 96
      %v3282 = vpop.permute.xlu0 %3281
      %3283 = vrot.lane.b32.xlu0 %v3276, 96
      %v3284 = vpop.permute.xlu0 %3283
      %3285 = vrot.lane.b32.xlu0 %v3277, 96
      %v3286 = vpop.permute.xlu0 %3285
      %v3287 = vsel %vm362, %v3282, %v3284
      %v3288 = vsel %vm362, %v3284, %v3286
      %v3292 = vmax.f32 %v3272, %v3282
      %v3293 = vmax.f32 %v3273, %v3287
      %v3294 = vmax.f32 %v3274, %v3288
      %v3295 = vld [vmem:[%s1118] ss:$8 sm:$0x3]
      %vm3296 = vcmp.gt.f32.partialorder %v3295, 0.0
      %v3297 = vsel %vm3296, 1, 0
      %v3298 = vperm.slane %v3297, 0
      %v3299 = vperm.slane %v3297, 1
      %vm3300 = vcmp.eq.s32.totalorder %v3298, 1
      %vm3301 = vcmp.eq.s32.totalorder %v3299, 1
      %3305 = vrot.lane.b32.xlu0 %v3292, 17
      %v3306 = vpop.permute.xlu0 %3305
      %3307 = vrot.lane.b32.xlu0 %v3293, 17
      %v3308 = vpop.permute.xlu0 %3307
      %3309 = vrot.lane.b32.xlu0 %v3294, 17
      %v3310 = vpop.permute.xlu0 %3309
      %v3311 = vsel %vm3031, %v3306, %v3308
      %v3312 = vsel %vm3031, %v3308, %v3310
      %v3315 = vsel %vm3300, %v3311, -1e+30
      %v3316 = vsel %vm3301, %v3312, -1e+30
      %v3317 = vmax.f32 %v3315, -1e+30
      %v3318 = vmax.f32 %v3316, -1e+30
      %v3320 = vmax.f32 %v3255, %v3264
      %v3321 = vmax.f32 %v3320, %v3282
      %v3322 = vld [vmem:[%s1500] ss:$8 sm:$0x3]
      %vm3323 = vcmp.gt.f32.partialorder %v3322, 0.0
      %v3324 = vsel %vm3323, 1, 0
      %v3325 = vperm.slane %v3324, 0
      %v3326 = vperm.slane %v3324, 1
      %vm3327 = vcmp.eq.s32.totalorder %v3325, 1
      %vm3328 = vcmp.eq.s32.totalorder %v3326, 1
      %3330 = vrot.lane.b32.xlu0 %v3321, 16
      %v3331 = vpop.permute.xlu0 %3330
      %3332 = vrot.lane.b32.xlu0 %v3293, 16
      %v3333 = vpop.permute.xlu0 %3332
      %3334 = vrot.lane.b32.xlu0 %v3294, 16
      %v3335 = vpop.permute.xlu0 %3334
      %vm3336 = vcmask 130048
      %v3337 = vsel %vm3336, %v3331, %v3333
      %v3338 = vsel %vm3336, %v3333, %v3335
      %v3341 = vsel %vm3327, %v3337, -1e+30
      %v3342 = vsel %vm3328, %v3338, -1e+30
      %v3343 = vmax.f32 %v3317, %v3341
      %v3344 = vmax.f32 %v3318, %v3342
      %3345 = vrot.lane.b32.xlu0 %v3275, 112
      %v3346 = vpop.permute.xlu0 %3345
      %3347 = vrot.lane.b32.xlu0 %v3276, 112
      %v3348 = vpop.permute.xlu0 %3347
      %3349 = vrot.lane.b32.xlu0 %v3277, 112
      %v3350 = vpop.permute.xlu0 %3349
      %v3351 = vsel %vm337, %v3346, %v3348
      %v3352 = vsel %vm337, %v3348, %v3350
      %v3356 = vmax.f32 %v3255, %v3346
      %v3357 = vmax.f32 %v3256, %v3351
      %v3358 = vmax.f32 %v3257, %v3352
      %v3359 = vmax.f32 %v3356, %v3282
      %v3360 = vmax.f32 %v3357, %v3287
      %v3361 = vmax.f32 %v3358, %v3288
      %v3362 = vld [vmem:[%s1908] ss:$8 sm:$0x3]
      %vm3363 = vcmp.gt.f32.partialorder %v3362, 0.0
      %v3364 = vsel %vm3363, 1, 0
      %v3365 = vperm.slane %v3364, 0
      %v3366 = vperm.slane %v3364, 1
      %vm3367 = vcmp.eq.s32.totalorder %v3365, 1
      %vm3368 = vcmp.eq.s32.totalorder %v3366, 1
      %3372 = vrot.lane.b32.xlu0 %v3359, 15
      %v3373 = vpop.permute.xlu0 %3372
      %3374 = vrot.lane.b32.xlu0 %v3360, 15
      %v3375 = vpop.permute.xlu0 %3374
      %3376 = vrot.lane.b32.xlu0 %v3361, 15
      %v3377 = vpop.permute.xlu0 %3376
      %vm3378 = vcmask 121856
      %v3379 = vsel %vm3378, %v3373, %v3375
      %v3380 = vsel %vm3378, %v3375, %v3377
      %v3383 = vsel %vm3367, %v3379, -1e+30
      %v3384 = vsel %vm3368, %v3380, -1e+30
      %v3385 = vmax.f32 %v3343, %v3383
      %v3386 = vmax.f32 %v3344, %v3384
      %v3387 = vld [vmem:[%s3] sm:$0xf]
      %v3388 = vpack.c.bf16 %v3246, %v3246
      %v3389 = vpack.c.bf16 %v3247, %v3247
      %v3390 = vpack.c.bf16 %v3248, %v3248
      %v3391 = vld [vmem:[%s1] sm:$0xff]
      %3393 = vset.pattern.permute.xlu0 7
      %3394 = vperm.xlu0 %3393, %v3391
      %v3395 = vpop.permute.xlu0 %3394
      %v3398 = vunpack.c.l.b16 %v3387
      %v3399 = vpack.c.b16 %v3398, %v3398
      %3400 = vrot.lane.b32.xlu0 %v3399, 96
      %v3401 = vpop.permute.xlu0 %3400
      %3405 = vrot.lane.b32.xlu0 %v3388, 17
      %v3406 = vpop.permute.xlu0 %3405
      %3407 = vrot.lane.b32.xlu0 %v3389, 17
      %v3408 = vpop.permute.xlu0 %3407
      %3409 = vrot.lane.b32.xlu0 %v3390, 17
      %v3410 = vpop.permute.xlu0 %3409
      %vm3411 = vcmask 138240
      %v3412 = vsel %vm3411, %v3406, %v3408
      %v3413 = vsel %vm3411, %v3408, %v3410
      %v3415 = vsel %vm3052, %v3401, 0
      %v3418 = vsel %vm2839, %v3412, 0
      %v3421 = vsel %vm2839, %v3413, 0
      %3423 = vmatpush.bf16.msra.mxu0 0
      %3424 = vmatpush.bf16.msra.mxu0 0
      %3425 = vmatpush.bf16.msra.mxu0 0
      %3426 = vmatpush.bf16.msra.mxu0 0
      %3427 = vmatpush.bf16.msra.mxu0 0
      %3428 = vmatpush.bf16.msra.mxu0 0
      %3429 = vmatpush.bf16.msra.mxu0 0
      %3430 = vmatpush.bf16.msra.mxu0 %v3418
      %3431 = vmatmul.bf16.gmra.mxu0 %v3415
      %v3432 = vpop.f32.mrf.mxu0
      %v3433 = vadd.f32 %v3395, %v3432
      %v3434 = vpop.f32.mrf.mxu0
      %3435 = vdwg.mxu0
      %3436 = vmatpush.bf16.msra.mxu0 0
      %3437 = vmatpush.bf16.msra.mxu0 0
      %3438 = vmatpush.bf16.msra.mxu0 0
      %3439 = vmatpush.bf16.msra.mxu0 0
      %3440 = vmatpush.bf16.msra.mxu0 0
      %3441 = vmatpush.bf16.msra.mxu0 0
      %3442 = vmatpush.bf16.msra.mxu0 0
      %3443 = vmatpush.bf16.msra.mxu0 %v3421
      %3444 = vmatmul.bf16.gmra.mxu0 %v3415
      %v3445 = vpop.f32.mrf.mxu0
      %v3446 = vadd.f32 %v3395, %v3445
      %v3447 = vpop.f32.mrf.mxu0
      %3448 = vdwg.mxu0
      %v3449 = vmul.f32 %v3433, 0.5
      %v3450 = vmul.f32 %v3446, 0.5
      %v3451 = vmul.f32 %v3433, 0.70710677
      %v3452 = vmul.f32 %v3446, 0.70710677
      %vm3453 = vcmp.ge.f32.partialorder %v3451, 0.0
      %vm3454 = vcmp.ge.f32.partialorder %v3452, 0.0
      %v3455 = vsel %vm3453, 1.0, -1.0
      %v3456 = vsel %vm3454, 1.0, -1.0
      %v3457 = vand.u32 2147483647, %v3451
      %v3458 = vand.u32 2147483647, %v3452
      %v3459 = vmul.f32 %v3457, 0.3275911
      %v3460 = vmul.f32 %v3458, 0.3275911
      %v3461 = vadd.f32 %v3459, 1.0
      %v3462 = vadd.f32 %v3460, 1.0
      %v3463 = vrcp.pop %v3461
      %v3464 = vrcp.pop %v3462
      %v3465 = vmul.f32 %v3463, 1.0614054
      %v3466 = vmul.f32 %v3464, 1.0614054
      %v3467 = vadd.f32 %v3465, -1.4531521
      %v3468 = vadd.f32 %v3466, -1.4531521
      %v3469 = vmul.f32 %v3467, %v3463
      %v3470 = vmul.f32 %v3468, %v3464
      %v3471 = vadd.f32 %v3469, 1.4214138
      %v3472 = vadd.f32 %v3470, 1.4214138
      %v3473 = vmul.f32 %v3471, %v3463
      %v3474 = vmul.f32 %v3472, %v3464
      %v3475 = vadd.f32 %v3473, -0.28449672
      %v3476 = vadd.f32 %v3474, -0.28449672
      %v3477 = vmul.f32 %v3475, %v3463
      %v3478 = vmul.f32 %v3476, %v3464
      %v3479 = vadd.f32 %v3477, 0.2548296
      %v3480 = vadd.f32 %v3478, 0.2548296
      %v3481 = vmul.f32 %v3479, %v3463
      %v3482 = vmul.f32 %v3480, %v3464
      %v3483 = vsub.f32 0.0, %v3457
      %v3484 = vsub.f32 0.0, %v3458
      %v3485 = vmul.f32 %v3483, %v3457
      %v3486 = vmul.f32 %v3484, %v3458
      %v3487 = vmul.f32 %v3485, 1.442695
      %v3488 = vpow.pop %v3487
      %v3489 = vmul.f32 %v3486, 1.442695
      %v3490 = vpow.pop %v3489
      %v3491 = vmul.f32 %v3481, %v3488
      %v3492 = vmul.f32 %v3482, %v3490
      %v3493 = vsub.f32 1.0, %v3491
      %v3494 = vsub.f32 1.0, %v3492
      %v3495 = vmul.f32 %v3455, %v3493
      %v3496 = vmul.f32 %v3456, %v3494
      %v3497 = vadd.f32 %v3495, 1.0
      %v3498 = vadd.f32 %v3496, 1.0
      %v3499 = vmul.f32 %v3449, %v3497
      %v3500 = vmul.f32 %v3450, %v3498
      %v3501 = vpack.c.bf16 %v3385, %v3385
      %v3502 = vpack.c.bf16 %v3386, %v3386
      %3503 = vset.pattern.permute.xlu0 8
      %3504 = vperm.xlu0 %3503, %v3391
      %v3505 = vpop.permute.xlu0 %3504
      %3507 = vrot.lane.b32.xlu0 %v3399, 88
      %v3508 = vpop.permute.xlu0 %3507
      %v3510 = vsel %vm3052, %v3508, 0
      %v3513 = vsel %vm2839, %v3501, 0
      %v3516 = vsel %vm2839, %v3502, 0
      %3518 = vmatpush.bf16.msra.mxu0 0
      %3519 = vmatpush.bf16.msra.mxu0 0
      %3520 = vmatpush.bf16.msra.mxu0 0
      %3521 = vmatpush.bf16.msra.mxu0 0
      %3522 = vmatpush.bf16.msra.mxu0 0
      %3523 = vmatpush.bf16.msra.mxu0 0
      %3524 = vmatpush.bf16.msra.mxu0 0
      %3525 = vmatpush.bf16.msra.mxu0 %v3513
      %3526 = vmatmul.bf16.gmra.mxu0 %v3510
      %v3527 = vpop.f32.mrf.mxu0
      %v3528 = vadd.f32 %v3505, %v3527
      %v3529 = vpop.f32.mrf.mxu0
      %3530 = vdwg.mxu0
      %3531 = vmatpush.bf16.msra.mxu0 0
      %3532 = vmatpush.bf16.msra.mxu0 0
      %3533 = vmatpush.bf16.msra.mxu0 0
      %3534 = vmatpush.bf16.msra.mxu0 0
      %3535 = vmatpush.bf16.msra.mxu0 0
      %3536 = vmatpush.bf16.msra.mxu0 0
      %3537 = vmatpush.bf16.msra.mxu0 0
      %3538 = vmatpush.bf16.msra.mxu0 %v3516
      %3539 = vmatmul.bf16.gmra.mxu0 %v3510
      %v3540 = vpop.f32.mrf.mxu0
      %v3541 = vadd.f32 %v3505, %v3540
      %v3542 = vpop.f32.mrf.mxu0
      %3543 = vdwg.mxu0
      %v3544 = vmul.f32 %v3528, 0.5
      %v3545 = vmul.f32 %v3541, 0.5
      %v3546 = vmul.f32 %v3528, 0.70710677
      %v3547 = vmul.f32 %v3541, 0.70710677
      %vm3548 = vcmp.ge.f32.partialorder %v3546, 0.0
      %vm3549 = vcmp.ge.f32.partialorder %v3547, 0.0
      %v3550 = vsel %vm3548, 1.0, -1.0
      %v3551 = vsel %vm3549, 1.0, -1.0
      %v3552 = vand.u32 2147483647, %v3546
      %v3553 = vand.u32 2147483647, %v3547
      %v3554 = vmul.f32 %v3552, 0.3275911
      %v3555 = vmul.f32 %v3553, 0.3275911
      %v3556 = vadd.f32 %v3554, 1.0
      %v3557 = vadd.f32 %v3555, 1.0
      %v3558 = vrcp.pop %v3556
      %v3559 = vrcp.pop %v3557
      %v3560 = vmul.f32 %v3558, 1.0614054
      %v3561 = vmul.f32 %v3559, 1.0614054
      %v3562 = vadd.f32 %v3560, -1.4531521
      %v3563 = vadd.f32 %v3561, -1.4531521
      %v3564 = vmul.f32 %v3562, %v3558
      %v3565 = vmul.f32 %v3563, %v3559
      %v3566 = vadd.f32 %v3564, 1.4214138
      %v3567 = vadd.f32 %v3565, 1.4214138
      %v3568 = vmul.f32 %v3566, %v3558
      %v3569 = vmul.f32 %v3567, %v3559
      %v3570 = vadd.f32 %v3568, -0.28449672
      %v3571 = vadd.f32 %v3569, -0.28449672
      %v3572 = vmul.f32 %v3570, %v3558
      %v3573 = vmul.f32 %v3571, %v3559
      %v3574 = vadd.f32 %v3572, 0.2548296
      %v3575 = vadd.f32 %v3573, 0.2548296
      %v3576 = vmul.f32 %v3574, %v3558
      %v3577 = vmul.f32 %v3575, %v3559
      %v3578 = vsub.f32 0.0, %v3552
      %v3579 = vsub.f32 0.0, %v3553
      %v3580 = vmul.f32 %v3578, %v3552
      %v3581 = vmul.f32 %v3579, %v3553
      %v3582 = vmul.f32 %v3580, 1.442695
      %v3583 = vpow.pop %v3582
      %v3584 = vmul.f32 %v3581, 1.442695
      %v3585 = vpow.pop %v3584
      %v3586 = vmul.f32 %v3576, %v3583
      %v3587 = vmul.f32 %v3577, %v3585
      %v3588 = vsub.f32 1.0, %v3586
      %v3589 = vsub.f32 1.0, %v3587
      %v3590 = vmul.f32 %v3550, %v3588
      %v3591 = vmul.f32 %v3551, %v3589
      %v3592 = vadd.f32 %v3590, 1.0
      %v3593 = vadd.f32 %v3591, 1.0
      %v3594 = vmul.f32 %v3544, %v3592
      %v3595 = vmul.f32 %v3545, %v3593
      %3596 = vset.pattern.permute.xlu0 9
      %3597 = vperm.xlu0 %3596, %v3391
      %v3598 = vpop.permute.xlu0 %3597
      %v3600 = vmul.f32 %v3499, %v3598
      %v3601 = vmul.f32 %v3500, %v3598
      %v3602 = vrot.slane %v3600, 4
      %v3603 = vadd.f32 %v3600, %v3602
      %v3604 = vrot.slane %v3603, 2
      %v3605 = vadd.f32 %v3603, %v3604
      %v3606 = vrot.slane %v3605, 1
      %v3607 = vadd.f32 %v3605, %v3606
      %v3608 = vrot.slane %v3601, 4
      %v3609 = vadd.f32 %v3601, %v3608
      %v3610 = vrot.slane %v3609, 2
      %v3611 = vadd.f32 %v3609, %v3610
      %v3612 = vrot.slane %v3611, 1
      %v3613 = vadd.f32 %v3611, %v3612
      %v3614 = vld [vmem:[%s5] sm:$0x1]
      %3616 = vset.pattern.permute.xlu0 0
      %3617 = vperm.xlu0 %3616, %v3614
      %v3618 = vpop.permute.xlu0 %3617
      %v3620 = vadd.f32 %v3607, %v3618
      %v3621 = vadd.f32 %v3613, %v3618
      %3622 = vset.pattern.permute.xlu0 10
      %3623 = vperm.xlu0 %3622, %v3391
      %v3624 = vpop.permute.xlu0 %3623
      %v3626 = vmul.f32 %v3594, %v3624
      %v3627 = vmul.f32 %v3595, %v3624
      %v3628 = vrot.slane %v3626, 4
      %v3629 = vadd.f32 %v3626, %v3628
      %v3630 = vrot.slane %v3629, 2
      %v3631 = vadd.f32 %v3629, %v3630
      %v3632 = vrot.slane %v3631, 1
      %v3633 = vadd.f32 %v3631, %v3632
      %v3634 = vrot.slane %v3627, 4
      %v3635 = vadd.f32 %v3627, %v3634
      %v3636 = vrot.slane %v3635, 2
      %v3637 = vadd.f32 %v3635, %v3636
      %v3638 = vrot.slane %v3637, 1
      %v3639 = vadd.f32 %v3637, %v3638
      %3640 = vset.pattern.permute.xlu0 1
      %3641 = vperm.xlu0 %3640, %v3614
      %v3642 = vpop.permute.xlu0 %3641
      %v3644 = vadd.f32 %v3633, %v3642
      %v3645 = vadd.f32 %v3639, %v3642
      %v3648 = vrot.slane %v3621, 7
      %vm3649 = vcmask 1040384
      %v3650 = vsel %vm3649, %v3620, %v3648
      %v3652 = vlaneseq
      %vm3653 = vcmp.ge.s32.totalorder %v3652, 0
      %vm3654 = vcmp.lt.s32.totalorder %v3652, 256
      %vm3655 = vmand %vm3653, %vm3654
      %s3656 = scalar_lea.vmem [#allocation3], 2
      %3657 = vst.msk [vmem:[%s3656] ss:$2 sm:$0x3] %vm3655, %v3650
      %v3660 = vrot.slane %v3645, 7
      %v3661 = vsel %vm3649, %v3644, %v3660
      %s3663 = scalar_lea.vmem [#allocation3], 3
      %3664 = vst.msk [vmem:[%s3663] ss:$2 sm:$0x3] %vm3655, %v3661
      %v3665 = vld [vmem:[#allocation3] sm:$0x3f]
      %v3666 = vld [vmem:[#allocation3] sm:$0xff]
      %v3667 = vld [vmem:[#allocation3 + $0x2] sm:$0x3f]
      %v3668 = vld [vmem:[%s4] sm:$0x3]
      %3670 = vset.pattern.permute.xlu0 0
      %3671 = vperm.xlu0 %3670, %v3668
      %v3672 = vpop.permute.xlu0 %3671
      %v3674 = vunpack.c.l.s4 269488144
      %v3675 = vunpack.c.0.s8 %v3674
      %v3676 = vperm.slane %v3672, %v3675
      %v3678 = vmul.f32 %v3665, %v3676
      %v3679 = vadd.f32 %v3678, 0.0
      %3680 = vset.pattern.permute.xlu0 7
      %3681 = vperm.xlu0 %3680, %v3668
      %v3682 = vpop.permute.xlu0 %3681
      %v3684 = vunpack.c.l.s4 269488144
      %v3685 = vunpack.c.0.s8 %v3684
      %v3686 = vperm.slane %v3682, %v3685
      %v3688 = vmul.f32 %v3665, %v3686
      %3690 = vrot.lane.b32.xlu0 %v3688, 112
      %v3691 = vpop.permute.xlu0 %3690
      %v3692 = vrot.slane %v3691, 2
      %v3693 = vsel %vm337, %v3691, %v3692
      %v3695 = vadd.f32 %v3679, %v3693
      %3696 = vset.pattern.permute.xlu0 14
      %3697 = vperm.xlu0 %3696, %v3668
      %v3698 = vpop.permute.xlu0 %3697
      %v3700 = vunpack.c.l.s4 269488144
      %v3701 = vunpack.c.0.s8 %v3700
      %v3702 = vperm.slane %v3698, %v3701
      %v3704 = vmul.f32 %v3665, %v3702
      %3706 = vrot.lane.b32.xlu0 %v3704, 96
      %v3707 = vpop.permute.xlu0 %3706
      %v3708 = vrot.slane %v3707, 2
      %v3709 = vsel %vm362, %v3707, %v3708
      %v3711 = vadd.f32 %v3695, %v3709
      %3712 = vset.pattern.permute.xlu0 21
      %3713 = vperm.xlu0 %3712, %v3668
      %v3714 = vpop.permute.xlu0 %3713
      %v3716 = vunpack.c.l.s4 269488144
      %v3717 = vunpack.c.0.s8 %v3716
      %v3718 = vperm.slane %v3714, %v3717
      %v3720 = vmul.f32 %v3666, %v3718
      %3722 = vrot.lane.b32.xlu0 %v3720, 80
      %v3723 = vpop.permute.xlu0 %3722
      %v3724 = vrot.slane %v3723, 2
      %v3725 = vsel %vm387, %v3723, %v3724
      %v3727 = vadd.f32 %v3711, %v3725
      %3728 = vset.pattern.permute.xlu0 28
      %3729 = vperm.xlu0 %3728, %v3668
      %v3730 = vpop.permute.xlu0 %3729
      %v3732 = vunpack.c.l.s4 269488144
      %v3733 = vunpack.c.0.s8 %v3732
      %v3734 = vperm.slane %v3730, %v3733
      %v3736 = vmul.f32 %v3667, %v3734
      %3738 = vrot.lane.b32.xlu0 %v3736, 64
      %v3739 = vpop.permute.xlu0 %3738
      %v3740 = vrot.slane %v3739, 6
      %v3741 = vsel %vm412, %v3740, %v3739
      %v3743 = vadd.f32 %v3727, %v3741
      %3744 = vset.pattern.permute.xlu0 35
      %3745 = vperm.xlu0 %3744, %v3668
      %v3746 = vpop.permute.xlu0 %3745
      %v3748 = vunpack.c.l.s4 269488144
      %v3749 = vunpack.c.0.s8 %v3748
      %v3750 = vperm.slane %v3746, %v3749
      %v3752 = vmul.f32 %v3667, %v3750
      %3754 = vrot.lane.b32.xlu0 %v3752, 48
      %v3755 = vpop.permute.xlu0 %3754
      %v3756 = vrot.slane %v3755, 6
      %v3757 = vsel %vm437, %v3756, %v3755
      %v3759 = vadd.f32 %v3743, %v3757
      %3760 = vset.pattern.permute.xlu0 42
      %3761 = vperm.xlu0 %3760, %v3668
      %v3762 = vpop.permute.xlu0 %3761
      %v3764 = vunpack.c.l.s4 269488144
      %v3765 = vunpack.c.0.s8 %v3764
      %v3766 = vperm.slane %v3762, %v3765
      %v3768 = vmul.f32 %v3667, %v3766
      %3770 = vrot.lane.b32.xlu0 %v3768, 32
      %v3771 = vpop.permute.xlu0 %3770
      %v3772 = vrot.slane %v3771, 6
      %v3773 = vsel %vm462, %v3772, %v3771
      %v3775 = vadd.f32 %v3759, %v3773
      %v3776 = vld [vmem:[%s6] ss:$8 sm:$0x3]
      %v3778 = vperm.slane %v3776, 0
      %v3779 = vperm.slane %v3776, 1
      %v3780 = vrot.slane %v3779, 6
      %vm3781 = vcmask 1041408
      %v3782 = vsel %vm3781, %v3778, %v3780
      %3783 = vrot.lane.b32.xlu0 %v3782, 77
      %v3784 = vpop.permute.xlu0 %3783
      %v3785 = vrot.slane %v3784, 6
      %v3786 = vsel %vm479, %v3785, %v3784
      %v3788 = vmul.f32 %v3775, %v3786
      %v3789 = vadd.f32 %v3788, 0.0
      %3790 = vset.pattern.permute.xlu0 1
      %3791 = vperm.xlu0 %3790, %v3668
      %v3792 = vpop.permute.xlu0 %3791
      %v3794 = vunpack.c.l.s4 269488144
      %v3795 = vunpack.c.0.s8 %v3794
      %v3796 = vperm.slane %v3792, %v3795
      %v3798 = vmul.f32 %v3665, %v3796
      %v3799 = vadd.f32 %v3798, 0.0
      %3800 = vset.pattern.permute.xlu0 8
      %3801 = vperm.xlu0 %3800, %v3668
      %v3802 = vpop.permute.xlu0 %3801
      %v3804 = vunpack.c.l.s4 269488144
      %v3805 = vunpack.c.0.s8 %v3804
      %v3806 = vperm.slane %v3802, %v3805
      %v3808 = vmul.f32 %v3665, %v3806
      %3810 = vrot.lane.b32.xlu0 %v3808, 112
      %v3811 = vpop.permute.xlu0 %3810
      %v3812 = vrot.slane %v3811, 2
      %v3813 = vsel %vm337, %v3811, %v3812
      %v3815 = vadd.f32 %v3799, %v3813
      %3816 = vset.pattern.permute.xlu0 15
      %3817 = vperm.xlu0 %3816, %v3668
      %v3818 = vpop.permute.xlu0 %3817
      %v3820 = vunpack.c.l.s4 269488144
      %v3821 = vunpack.c.0.s8 %v3820
      %v3822 = vperm.slane %v3818, %v3821
      %v3824 = vmul.f32 %v3665, %v3822
      %3826 = vrot.lane.b32.xlu0 %v3824, 96
      %v3827 = vpop.permute.xlu0 %3826
      %v3828 = vrot.slane %v3827, 2
      %v3829 = vsel %vm362, %v3827, %v3828
      %v3831 = vadd.f32 %v3815, %v3829
      %3832 = vset.pattern.permute.xlu0 22
      %3833 = vperm.xlu0 %3832, %v3668
      %v3834 = vpop.permute.xlu0 %3833
      %v3836 = vunpack.c.l.s4 269488144
      %v3837 = vunpack.c.0.s8 %v3836
      %v3838 = vperm.slane %v3834, %v3837
      %v3840 = vmul.f32 %v3666, %v3838
      %3842 = vrot.lane.b32.xlu0 %v3840, 80
      %v3843 = vpop.permute.xlu0 %3842
      %v3844 = vrot.slane %v3843, 2
      %v3845 = vsel %vm387, %v3843, %v3844
      %v3847 = vadd.f32 %v3831, %v3845
      %3848 = vset.pattern.permute.xlu0 29
      %3849 = vperm.xlu0 %3848, %v3668
      %v3850 = vpop.permute.xlu0 %3849
      %v3852 = vunpack.c.l.s4 269488144
      %v3853 = vunpack.c.0.s8 %v3852
      %v3854 = vperm.slane %v3850, %v3853
      %v3856 = vmul.f32 %v3667, %v3854
      %3858 = vrot.lane.b32.xlu0 %v3856, 64
      %v3859 = vpop.permute.xlu0 %3858
      %v3860 = vrot.slane %v3859, 6
      %v3861 = vsel %vm412, %v3860, %v3859
      %v3863 = vadd.f32 %v3847, %v3861
      %3864 = vset.pattern.permute.xlu0 36
      %3865 = vperm.xlu0 %3864, %v3668
      %v3866 = vpop.permute.xlu0 %3865
      %v3868 = vunpack.c.l.s4 269488144
      %v3869 = vunpack.c.0.s8 %v3868
      %v3870 = vperm.slane %v3866, %v3869
      %v3872 = vmul.f32 %v3667, %v3870
      %3874 = vrot.lane.b32.xlu0 %v3872, 48
      %v3875 = vpop.permute.xlu0 %3874
      %v3876 = vrot.slane %v3875, 6
      %v3877 = vsel %vm437, %v3876, %v3875
      %v3879 = vadd.f32 %v3863, %v3877
      %3880 = vset.pattern.permute.xlu0 43
      %3881 = vperm.xlu0 %3880, %v3668
      %v3882 = vpop.permute.xlu0 %3881
      %v3884 = vunpack.c.l.s4 269488144
      %v3885 = vunpack.c.0.s8 %v3884
      %v3886 = vperm.slane %v3882, %v3885
      %v3888 = vmul.f32 %v3667, %v3886
      %3890 = vrot.lane.b32.xlu0 %v3888, 32
      %v3891 = vpop.permute.xlu0 %3890
      %v3892 = vrot.slane %v3891, 6
      %v3893 = vsel %vm462, %v3892, %v3891
      %v3895 = vadd.f32 %v3879, %v3893
      %v3896 = vld [vmem:[%s750] ss:$8 sm:$0x3]
      %v3898 = vperm.slane %v3896, 0
      %v3899 = vperm.slane %v3896, 1
      %v3900 = vrot.slane %v3899, 6
      %v3901 = vsel %vm3781, %v3898, %v3900
      %3902 = vrot.lane.b32.xlu0 %v3901, 78
      %v3903 = vpop.permute.xlu0 %3902
      %v3904 = vrot.slane %v3903, 6
      %v3905 = vsel %vm759, %v3904, %v3903
      %v3907 = vmul.f32 %v3895, %v3905
      %3909 = vrot.lane.b32.xlu0 %v3907, 127
      %v3910 = vpop.permute.xlu0 %3909
      %v3911 = vrot.slane %v3910, 2
      %v3912 = vsel %vm776, %v3910, %v3911
      %v3914 = vadd.f32 %v3789, %v3912
      %3915 = vset.pattern.permute.xlu0 2
      %3916 = vperm.xlu0 %3915, %v3668
      %v3917 = vpop.permute.xlu0 %3916
      %v3919 = vunpack.c.l.s4 269488144
      %v3920 = vunpack.c.0.s8 %v3919
      %v3921 = vperm.slane %v3917, %v3920
      %v3923 = vmul.f32 %v3665, %v3921
      %v3924 = vadd.f32 %v3923, 0.0
      %3925 = vset.pattern.permute.xlu0 9
      %3926 = vperm.xlu0 %3925, %v3668
      %v3927 = vpop.permute.xlu0 %3926
      %v3929 = vunpack.c.l.s4 269488144
      %v3930 = vunpack.c.0.s8 %v3929
      %v3931 = vperm.slane %v3927, %v3930
      %v3933 = vmul.f32 %v3665, %v3931
      %3935 = vrot.lane.b32.xlu0 %v3933, 112
      %v3936 = vpop.permute.xlu0 %3935
      %v3937 = vrot.slane %v3936, 2
      %v3938 = vsel %vm337, %v3936, %v3937
      %v3940 = vadd.f32 %v3924, %v3938
      %3941 = vset.pattern.permute.xlu0 16
      %3942 = vperm.xlu0 %3941, %v3668
      %v3943 = vpop.permute.xlu0 %3942
      %v3945 = vunpack.c.l.s4 269488144
      %v3946 = vunpack.c.0.s8 %v3945
      %v3947 = vperm.slane %v3943, %v3946
      %v3949 = vmul.f32 %v3665, %v3947
      %3951 = vrot.lane.b32.xlu0 %v3949, 96
      %v3952 = vpop.permute.xlu0 %3951
      %v3953 = vrot.slane %v3952, 2
      %v3954 = vsel %vm362, %v3952, %v3953
      %v3956 = vadd.f32 %v3940, %v3954
      %3957 = vset.pattern.permute.xlu0 23
      %3958 = vperm.xlu0 %3957, %v3668
      %v3959 = vpop.permute.xlu0 %3958
      %v3961 = vunpack.c.l.s4 269488144
      %v3962 = vunpack.c.0.s8 %v3961
      %v3963 = vperm.slane %v3959, %v3962
      %v3965 = vmul.f32 %v3666, %v3963
      %3967 = vrot.lane.b32.xlu0 %v3965, 80
      %v3968 = vpop.permute.xlu0 %3967
      %v3969 = vrot.slane %v3968, 2
      %v3970 = vsel %vm387, %v3968, %v3969
      %v3972 = vadd.f32 %v3956, %v3970
      %3973 = vset.pattern.permute.xlu0 30
      %3974 = vperm.xlu0 %3973, %v3668
      %v3975 = vpop.permute.xlu0 %3974
      %v3977 = vunpack.c.l.s4 269488144
      %v3978 = vunpack.c.0.s8 %v3977
      %v3979 = vperm.slane %v3975, %v3978
      %v3981 = vmul.f32 %v3667, %v3979
      %3983 = vrot.lane.b32.xlu0 %v3981, 64
      %v3984 = vpop.permute.xlu0 %3983
      %v3985 = vrot.slane %v3984, 6
      %v3986 = vsel %vm412, %v3985, %v3984
      %v3988 = vadd.f32 %v3972, %v3986
      %3989 = vset.pattern.permute.xlu0 37
      %3990 = vperm.xlu0 %3989, %v3668
      %v3991 = vpop.permute.xlu0 %3990
      %v3993 = vunpack.c.l.s4 269488144
      %v3994 = vunpack.c.0.s8 %v3993
      %v3995 = vperm.slane %v3991, %v3994
      %v3997 = vmul.f32 %v3667, %v3995
      %3999 = vrot.lane.b32.xlu0 %v3997, 48
      %v4000 = vpop.permute.xlu0 %3999
      %v4001 = vrot.slane %v4000, 6
      %v4002 = vsel %vm437, %v4001, %v4000
      %v4004 = vadd.f32 %v3988, %v4002
      %4005 = vset.pattern.permute.xlu0 44
      %4006 = vperm.xlu0 %4005, %v3668
      %v4007 = vpop.permute.xlu0 %4006
      %v4009 = vunpack.c.l.s4 269488144
      %v4010 = vunpack.c.0.s8 %v4009
      %v4011 = vperm.slane %v4007, %v4010
      %v4013 = vmul.f32 %v3667, %v4011
      %4015 = vrot.lane.b32.xlu0 %v4013, 32
      %v4016 = vpop.permute.xlu0 %4015
      %v4017 = vrot.slane %v4016, 6
      %v4018 = vsel %vm462, %v4017, %v4016
      %v4020 = vadd.f32 %v4004, %v4018
      %v4021 = vld [vmem:[%s1118] ss:$8 sm:$0x3]
      %v4023 = vperm.slane %v4021, 0
      %v4024 = vperm.slane %v4021, 1
      %v4025 = vrot.slane %v4024, 6
      %v4026 = vsel %vm3781, %v4023, %v4025
      %4027 = vrot.lane.b32.xlu0 %v4026, 79
      %v4028 = vpop.permute.xlu0 %4027
      %v4029 = vrot.slane %v4028, 6
      %v4030 = vsel %vm1127, %v4029, %v4028
      %v4032 = vmul.f32 %v4020, %v4030
      %4034 = vrot.lane.b32.xlu0 %v4032, 126
      %v4035 = vpop.permute.xlu0 %4034
      %v4036 = vrot.slane %v4035, 2
      %v4037 = vsel %vm1144, %v4035, %v4036
      %v4039 = vadd.f32 %v3914, %v4037
      %4040 = vset.pattern.permute.xlu0 3
      %4041 = vperm.xlu0 %4040, %v3668
      %v4042 = vpop.permute.xlu0 %4041
      %v4044 = vunpack.c.l.s4 269488144
      %v4045 = vunpack.c.0.s8 %v4044
      %v4046 = vperm.slane %v4042, %v4045
      %v4048 = vmul.f32 %v3665, %v4046
      %v4049 = vadd.f32 %v4048, 0.0
      %4050 = vset.pattern.permute.xlu0 10
      %4051 = vperm.xlu0 %4050, %v3668
      %v4052 = vpop.permute.xlu0 %4051
      %v4054 = vunpack.c.l.s4 269488144
      %v4055 = vunpack.c.0.s8 %v4054
      %v4056 = vperm.slane %v4052, %v4055
      %v4058 = vmul.f32 %v3665, %v4056
      %4060 = vrot.lane.b32.xlu0 %v4058, 112
      %v4061 = vpop.permute.xlu0 %4060
      %v4062 = vrot.slane %v4061, 2
      %v4063 = vsel %vm337, %v4061, %v4062
      %v4065 = vadd.f32 %v4049, %v4063
      %4066 = vset.pattern.permute.xlu0 17
      %4067 = vperm.xlu0 %4066, %v3668
      %v4068 = vpop.permute.xlu0 %4067
      %v4070 = vunpack.c.l.s4 269488144
      %v4071 = vunpack.c.0.s8 %v4070
      %v4072 = vperm.slane %v4068, %v4071
      %v4074 = vmul.f32 %v3665, %v4072
      %4076 = vrot.lane.b32.xlu0 %v4074, 96
      %v4077 = vpop.permute.xlu0 %4076
      %v4078 = vrot.slane %v4077, 2
      %v4079 = vsel %vm362, %v4077, %v4078
      %v4081 = vadd.f32 %v4065, %v4079
      %4082 = vset.pattern.permute.xlu0 24
      %4083 = vperm.xlu0 %4082, %v3668
      %v4084 = vpop.permute.xlu0 %4083
      %v4086 = vrot.slane %v3666, 2
      %v4089 = vunpack.c.l.s4 269488144
      %v4090 = vunpack.c.0.s8 %v4089
      %v4091 = vperm.slane %v4084, %v4090
      %v4093 = vmul.f32 %v4086, %v4091
      %4095 = vrot.lane.b32.xlu0 %v4093, 80
      %v4096 = vpop.permute.xlu0 %4095
      %v4097 = vrot.slane %v4096, 6
      %v4098 = vsel %vm387, %v4097, %v4096
      %v4100 = vadd.f32 %v4081, %v4098
      %4101 = vset.pattern.permute.xlu0 31
      %4102 = vperm.xlu0 %4101, %v3668
      %v4103 = vpop.permute.xlu0 %4102
      %v4105 = vunpack.c.l.s4 269488144
      %v4106 = vunpack.c.0.s8 %v4105
      %v4107 = vperm.slane %v4103, %v4106
      %v4109 = vmul.f32 %v3667, %v4107
      %4111 = vrot.lane.b32.xlu0 %v4109, 64
      %v4112 = vpop.permute.xlu0 %4111
      %v4113 = vrot.slane %v4112, 6
      %v4114 = vsel %vm412, %v4113, %v4112
      %v4116 = vadd.f32 %v4100, %v4114
      %4117 = vset.pattern.permute.xlu0 38
      %4118 = vperm.xlu0 %4117, %v3668
      %v4119 = vpop.permute.xlu0 %4118
      %v4121 = vunpack.c.l.s4 269488144
      %v4122 = vunpack.c.0.s8 %v4121
      %v4123 = vperm.slane %v4119, %v4122
      %v4125 = vmul.f32 %v3667, %v4123
      %4127 = vrot.lane.b32.xlu0 %v4125, 48
      %v4128 = vpop.permute.xlu0 %4127
      %v4129 = vrot.slane %v4128, 6
      %v4130 = vsel %vm437, %v4129, %v4128
      %v4132 = vadd.f32 %v4116, %v4130
      %4133 = vset.pattern.permute.xlu0 45
      %4134 = vperm.xlu0 %4133, %v3668
      %v4135 = vpop.permute.xlu0 %4134
      %v4137 = vunpack.c.l.s4 269488144
      %v4138 = vunpack.c.0.s8 %v4137
      %v4139 = vperm.slane %v4135, %v4138
      %v4141 = vmul.f32 %v3667, %v4139
      %4143 = vrot.lane.b32.xlu0 %v4141, 32
      %v4144 = vpop.permute.xlu0 %4143
      %v4145 = vrot.slane %v4144, 6
      %v4146 = vsel %vm462, %v4145, %v4144
      %v4148 = vadd.f32 %v4132, %v4146
      %v4149 = vld [vmem:[%s1500] ss:$8 sm:$0x3]
      %v4151 = vperm.slane %v4149, 0
      %v4152 = vperm.slane %v4149, 1
      %v4153 = vrot.slane %v4152, 6
      %v4154 = vsel %vm3781, %v4151, %v4153
      %4155 = vrot.lane.b32.xlu0 %v4154, 80
      %v4156 = vpop.permute.xlu0 %4155
      %v4157 = vrot.slane %v4156, 6
      %v4158 = vsel %vm387, %v4157, %v4156
      %v4160 = vmul.f32 %v4148, %v4158
      %4162 = vrot.lane.b32.xlu0 %v4160, 125
      %v4163 = vpop.permute.xlu0 %4162
      %v4164 = vrot.slane %v4163, 2
      %v4165 = vsel %vm1525, %v4163, %v4164
      %v4167 = vadd.f32 %v4039, %v4165
      %4168 = vset.pattern.permute.xlu0 4
      %4169 = vperm.xlu0 %4168, %v3668
      %v4170 = vpop.permute.xlu0 %4169
      %v4172 = vunpack.c.l.s4 269488144
      %v4173 = vunpack.c.0.s8 %v4172
      %v4174 = vperm.slane %v4170, %v4173
      %v4176 = vmul.f32 %v3665, %v4174
      %v4177 = vadd.f32 %v4176, 0.0
      %4178 = vset.pattern.permute.xlu0 11
      %4179 = vperm.xlu0 %4178, %v3668
      %v4180 = vpop.permute.xlu0 %4179
      %v4182 = vunpack.c.l.s4 269488144
      %v4183 = vunpack.c.0.s8 %v4182
      %v4184 = vperm.slane %v4180, %v4183
      %v4186 = vmul.f32 %v3665, %v4184
      %4188 = vrot.lane.b32.xlu0 %v4186, 112
      %v4189 = vpop.permute.xlu0 %4188
      %v4190 = vrot.slane %v4189, 2
      %v4191 = vsel %vm337, %v4189, %v4190
      %v4193 = vadd.f32 %v4177, %v4191
      %4194 = vset.pattern.permute.xlu0 18
      %4195 = vperm.xlu0 %4194, %v3668
      %v4196 = vpop.permute.xlu0 %4195
      %v4198 = vunpack.c.l.s4 269488144
      %v4199 = vunpack.c.0.s8 %v4198
      %v4200 = vperm.slane %v4196, %v4199
      %v4202 = vmul.f32 %v3665, %v4200
      %4204 = vrot.lane.b32.xlu0 %v4202, 96
      %v4205 = vpop.permute.xlu0 %4204
      %v4206 = vrot.slane %v4205, 2
      %v4207 = vsel %vm362, %v4205, %v4206
      %v4209 = vadd.f32 %v4193, %v4207
      %4210 = vset.pattern.permute.xlu0 25
      %4211 = vperm.xlu0 %4210, %v3668
      %v4212 = vpop.permute.xlu0 %4211
      %4213 = vrot.lane.b32.xlu0 %v3666, 127
      %v4214 = vpop.permute.xlu0 %4213
      %v4215 = vrot.slane %v4214, 2
      %v4216 = vrot.slane %v4214, 4
      %v4217 = vsel %vm776, %v4215, %v4216
      %v4220 = vunpack.c.l.s4 269488144
      %v4221 = vunpack.c.0.s8 %v4220
      %v4222 = vperm.slane %v4212, %v4221
      %v4224 = vmul.f32 %v4217, %v4222
      %4226 = vrot.lane.b32.xlu0 %v4224, 81
      %v4227 = vpop.permute.xlu0 %4226
      %v4228 = vrot.slane %v4227, 6
      %v4229 = vsel %vm1917, %v4228, %v4227
      %v4231 = vadd.f32 %v4209, %v4229
      %4232 = vset.pattern.permute.xlu0 32
      %4233 = vperm.xlu0 %4232, %v3668
      %v4234 = vpop.permute.xlu0 %4233
      %v4236 = vunpack.c.l.s4 269488144
      %v4237 = vunpack.c.0.s8 %v4236
      %v4238 = vperm.slane %v4234, %v4237
      %v4240 = vmul.f32 %v3667, %v4238
      %4242 = vrot.lane.b32.xlu0 %v4240, 64
      %v4243 = vpop.permute.xlu0 %4242
      %v4244 = vrot.slane %v4243, 6
      %v4245 = vsel %vm412, %v4244, %v4243
      %v4247 = vadd.f32 %v4231, %v4245
      %4248 = vset.pattern.permute.xlu0 39
      %4249 = vperm.xlu0 %4248, %v3668
      %v4250 = vpop.permute.xlu0 %4249
      %v4252 = vunpack.c.l.s4 269488144
      %v4253 = vunpack.c.0.s8 %v4252
      %v4254 = vperm.slane %v4250, %v4253
      %v4256 = vmul.f32 %v3667, %v4254
      %4258 = vrot.lane.b32.xlu0 %v4256, 48
      %v4259 = vpop.permute.xlu0 %4258
      %v4260 = vrot.slane %v4259, 6
      %v4261 = vsel %vm437, %v4260, %v4259
      %v4263 = vadd.f32 %v4247, %v4261
      %4264 = vset.pattern.permute.xlu0 46
      %4265 = vperm.xlu0 %4264, %v3668
      %v4266 = vpop.permute.xlu0 %4265
      %v4268 = vunpack.c.l.s4 269488144
      %v4269 = vunpack.c.0.s8 %v4268
      %v4270 = vperm.slane %v4266, %v4269
      %v4272 = vmul.f32 %v3667, %v4270
      %4274 = vrot.lane.b32.xlu0 %v4272, 32
      %v4275 = vpop.permute.xlu0 %4274
      %v4276 = vrot.slane %v4275, 6
      %v4277 = vsel %vm462, %v4276, %v4275
      %v4279 = vadd.f32 %v4263, %v4277
      %v4280 = vld [vmem:[%s1908] ss:$8 sm:$0x3]
      %v4282 = vperm.slane %v4280, 0
      %v4283 = vperm.slane %v4280, 1
      %v4284 = vrot.slane %v4283, 6
      %v4285 = vsel %vm3781, %v4282, %v4284
      %4286 = vrot.lane.b32.xlu0 %v4285, 81
      %v4287 = vpop.permute.xlu0 %4286
      %v4288 = vrot.slane %v4287, 6
      %v4289 = vsel %vm1917, %v4288, %v4287
      %v4291 = vmul.f32 %v4279, %v4289
      %4293 = vrot.lane.b32.xlu0 %v4291, 124
      %v4294 = vpop.permute.xlu0 %4293
      %v4295 = vrot.slane %v4294, 2
      %v4296 = vsel %vm1934, %v4294, %v4295
      %v4298 = vadd.f32 %v4167, %v4296
      %4299 = vset.pattern.permute.xlu0 5
      %4300 = vperm.xlu0 %4299, %v3668
      %v4301 = vpop.permute.xlu0 %4300
      %v4303 = vunpack.c.l.s4 269488144
      %v4304 = vunpack.c.0.s8 %v4303
      %v4305 = vperm.slane %v4301, %v4304
      %v4307 = vmul.f32 %v3665, %v4305
      %v4308 = vadd.f32 %v4307, 0.0
      %4309 = vset.pattern.permute.xlu0 12
      %4310 = vperm.xlu0 %4309, %v3668
      %v4311 = vpop.permute.xlu0 %4310
      %v4313 = vunpack.c.l.s4 269488144
      %v4314 = vunpack.c.0.s8 %v4313
      %v4315 = vperm.slane %v4311, %v4314
      %v4317 = vmul.f32 %v3665, %v4315
      %4319 = vrot.lane.b32.xlu0 %v4317, 112
      %v4320 = vpop.permute.xlu0 %4319
      %v4321 = vrot.slane %v4320, 2
      %v4322 = vsel %vm337, %v4320, %v4321
      %v4324 = vadd.f32 %v4308, %v4322
      %4325 = vset.pattern.permute.xlu0 19
      %4326 = vperm.xlu0 %4325, %v3668
      %v4327 = vpop.permute.xlu0 %4326
      %v4329 = vunpack.c.l.s4 269488144
      %v4330 = vunpack.c.0.s8 %v4329
      %v4331 = vperm.slane %v4327, %v4330
      %v4333 = vmul.f32 %v3665, %v4331
      %4335 = vrot.lane.b32.xlu0 %v4333, 96
      %v4336 = vpop.permute.xlu0 %4335
      %v4337 = vrot.slane %v4336, 2
      %v4338 = vsel %vm362, %v4336, %v4337
      %v4340 = vadd.f32 %v4324, %v4338
      %4341 = vset.pattern.permute.xlu0 26
      %4342 = vperm.xlu0 %4341, %v3668
      %v4343 = vpop.permute.xlu0 %4342
      %4344 = vrot.lane.b32.xlu0 %v3666, 126
      %v4345 = vpop.permute.xlu0 %4344
      %v4346 = vrot.slane %v4345, 2
      %v4347 = vrot.slane %v4345, 4
      %v4348 = vsel %vm1144, %v4346, %v4347
      %v4351 = vunpack.c.l.s4 269488144
      %v4352 = vunpack.c.0.s8 %v4351
      %v4353 = vperm.slane %v4343, %v4352
      %v4355 = vmul.f32 %v4348, %v4353
      %4357 = vrot.lane.b32.xlu0 %v4355, 82
      %v4358 = vpop.permute.xlu0 %4357
      %v4359 = vrot.slane %v4358, 6
      %v4360 = vsel %vm2270, %v4359, %v4358
      %v4362 = vadd.f32 %v4340, %v4360
      %4363 = vset.pattern.permute.xlu0 33
      %4364 = vperm.xlu0 %4363, %v3668
      %v4365 = vpop.permute.xlu0 %4364
      %v4367 = vunpack.c.l.s4 269488144
      %v4368 = vunpack.c.0.s8 %v4367
      %v4369 = vperm.slane %v4365, %v4368
      %v4371 = vmul.f32 %v3667, %v4369
      %4373 = vrot.lane.b32.xlu0 %v4371, 64
      %v4374 = vpop.permute.xlu0 %4373
      %v4375 = vrot.slane %v4374, 6
      %v4376 = vsel %vm412, %v4375, %v4374
      %v4378 = vadd.f32 %v4362, %v4376
      %4379 = vset.pattern.permute.xlu0 40
      %4380 = vperm.xlu0 %4379, %v3668
      %v4381 = vpop.permute.xlu0 %4380
      %v4383 = vunpack.c.l.s4 269488144
      %v4384 = vunpack.c.0.s8 %v4383
      %v4385 = vperm.slane %v4381, %v4384
      %v4387 = vmul.f32 %v3667, %v4385
      %4389 = vrot.lane.b32.xlu0 %v4387, 48
      %v4390 = vpop.permute.xlu0 %4389
      %v4391 = vrot.slane %v4390, 6
      %v4392 = vsel %vm437, %v4391, %v4390
      %v4394 = vadd.f32 %v4378, %v4392
      %4395 = vset.pattern.permute.xlu0 47
      %4396 = vperm.xlu0 %4395, %v3668
      %v4397 = vpop.permute.xlu0 %4396
      %v4399 = vunpack.c.l.s4 269488144
      %v4400 = vunpack.c.0.s8 %v4399
      %v4401 = vperm.slane %v4397, %v4400
      %v4403 = vmul.f32 %v3667, %v4401
      %4405 = vrot.lane.b32.xlu0 %v4403, 32
      %v4406 = vpop.permute.xlu0 %4405
      %v4407 = vrot.slane %v4406, 6
      %v4408 = vsel %vm462, %v4407, %v4406
      %v4410 = vadd.f32 %v4394, %v4408
      %v4411 = vld [vmem:[%s2261] ss:$8 sm:$0x3]
      %v4413 = vperm.slane %v4411, 0
      %v4414 = vperm.slane %v4411, 1
      %v4415 = vrot.slane %v4414, 6
      %v4416 = vsel %vm3781, %v4413, %v4415
      %4417 = vrot.lane.b32.xlu0 %v4416, 82
      %v4418 = vpop.permute.xlu0 %4417
      %v4419 = vrot.slane %v4418, 6
      %v4420 = vsel %vm2270, %v4419, %v4418
      %v4422 = vmul.f32 %v4410, %v4420
      %4424 = vrot.lane.b32.xlu0 %v4422, 123
      %v4425 = vpop.permute.xlu0 %4424
      %v4426 = vrot.slane %v4425, 2
      %v4427 = vsel %vm2287, %v4425, %v4426
      %v4429 = vadd.f32 %v4298, %v4427
      %4430 = vset.pattern.permute.xlu0 6
      %4431 = vperm.xlu0 %4430, %v3668
      %v4432 = vpop.permute.xlu0 %4431
      %v4434 = vunpack.c.l.s4 269488144
      %v4435 = vunpack.c.0.s8 %v4434
      %v4436 = vperm.slane %v4432, %v4435
      %v4438 = vmul.f32 %v3665, %v4436
      %v4439 = vadd.f32 %v4438, 0.0
      %4440 = vset.pattern.permute.xlu0 13
      %4441 = vperm.xlu0 %4440, %v3668
      %v4442 = vpop.permute.xlu0 %4441
      %v4444 = vunpack.c.l.s4 269488144
      %v4445 = vunpack.c.0.s8 %v4444
      %v4446 = vperm.slane %v4442, %v4445
      %v4448 = vmul.f32 %v3665, %v4446
      %4450 = vrot.lane.b32.xlu0 %v4448, 112
      %v4451 = vpop.permute.xlu0 %4450
      %v4452 = vrot.slane %v4451, 2
      %v4453 = vsel %vm337, %v4451, %v4452
      %v4455 = vadd.f32 %v4439, %v4453
      %4456 = vset.pattern.permute.xlu0 20
      %4457 = vperm.xlu0 %4456, %v3668
      %v4458 = vpop.permute.xlu0 %4457
      %v4460 = vunpack.c.l.s4 269488144
      %v4461 = vunpack.c.0.s8 %v4460
      %v4462 = vperm.slane %v4458, %v4461
      %v4464 = vmul.f32 %v3665, %v4462
      %4466 = vrot.lane.b32.xlu0 %v4464, 96
      %v4467 = vpop.permute.xlu0 %4466
      %v4468 = vrot.slane %v4467, 2
      %v4469 = vsel %vm362, %v4467, %v4468
      %v4471 = vadd.f32 %v4455, %v4469
      %4472 = vset.pattern.permute.xlu0 27
      %4473 = vperm.xlu0 %4472, %v3668
      %v4474 = vpop.permute.xlu0 %4473
      %4475 = vrot.lane.b32.xlu0 %v3666, 125
      %v4476 = vpop.permute.xlu0 %4475
      %v4477 = vrot.slane %v4476, 2
      %v4478 = vrot.slane %v4476, 4
      %v4479 = vsel %vm1525, %v4477, %v4478
      %v4482 = vunpack.c.l.s4 269488144
      %v4483 = vunpack.c.0.s8 %v4482
      %v4484 = vperm.slane %v4474, %v4483
      %v4486 = vmul.f32 %v4479, %v4484
      %4488 = vrot.lane.b32.xlu0 %v4486, 83
      %v4489 = vpop.permute.xlu0 %4488
      %v4490 = vrot.slane %v4489, 6
      %v4491 = vsel %vm2488, %v4490, %v4489
      %v4493 = vadd.f32 %v4471, %v4491
      %4494 = vset.pattern.permute.xlu0 34
      %4495 = vperm.xlu0 %4494, %v3668
      %v4496 = vpop.permute.xlu0 %4495
      %v4498 = vunpack.c.l.s4 269488144
      %v4499 = vunpack.c.0.s8 %v4498
      %v4500 = vperm.slane %v4496, %v4499
      %v4502 = vmul.f32 %v3667, %v4500
      %4504 = vrot.lane.b32.xlu0 %v4502, 64
      %v4505 = vpop.permute.xlu0 %4504
      %v4506 = vrot.slane %v4505, 6
      %v4507 = vsel %vm412, %v4506, %v4505
      %v4509 = vadd.f32 %v4493, %v4507
      %4510 = vset.pattern.permute.xlu0 41
      %4511 = vperm.xlu0 %4510, %v3668
      %v4512 = vpop.permute.xlu0 %4511
      %v4514 = vunpack.c.l.s4 269488144
      %v4515 = vunpack.c.0.s8 %v4514
      %v4516 = vperm.slane %v4512, %v4515
      %v4518 = vmul.f32 %v3667, %v4516
      %4520 = vrot.lane.b32.xlu0 %v4518, 48
      %v4521 = vpop.permute.xlu0 %4520
      %v4522 = vrot.slane %v4521, 6
      %v4523 = vsel %vm437, %v4522, %v4521
      %v4525 = vadd.f32 %v4509, %v4523
      %4526 = vset.pattern.permute.xlu0 48
      %4527 = vperm.xlu0 %4526, %v3668
      %v4528 = vpop.permute.xlu0 %4527
      %v4530 = vunpack.c.l.s4 269488144
      %v4531 = vunpack.c.0.s8 %v4530
      %v4532 = vperm.slane %v4528, %v4531
      %v4534 = vmul.f32 %v3667, %v4532
      %4536 = vrot.lane.b32.xlu0 %v4534, 32
      %v4537 = vpop.permute.xlu0 %4536
      %v4538 = vrot.slane %v4537, 6
      %v4539 = vsel %vm462, %v4538, %v4537
      %v4541 = vadd.f32 %v4525, %v4539
      %v4542 = vld [vmem:[%s2479] ss:$8 sm:$0x3]
      %v4544 = vperm.slane %v4542, 0
      %v4545 = vperm.slane %v4542, 1
      %v4546 = vrot.slane %v4545, 6
      %v4547 = vsel %vm3781, %v4544, %v4546
      %4548 = vrot.lane.b32.xlu0 %v4547, 83
      %v4549 = vpop.permute.xlu0 %4548
      %v4550 = vrot.slane %v4549, 6
      %v4551 = vsel %vm2488, %v4550, %v4549
      %v4553 = vmul.f32 %v4541, %v4551
      %4555 = vrot.lane.b32.xlu0 %v4553, 122
      %v4556 = vpop.permute.xlu0 %4555
      %v4557 = vrot.slane %v4556, 2
      %v4558 = vsel %vm2505, %v4556, %v4557
      %v4560 = vadd.f32 %v4429, %v4558
      %4562 = vst [vmem:[#allocation1] ss:$4 sm:$0xff] %v4560
      %v4563 = vld.sshfl [vmem:[#allocation1] sm:$0xff pattern:$0x73625140]
      %v4564 = vld.sshfl [vmem:[#allocation1 + $0x8] sm:$0xff pattern:$0x73625140]
      %v4565 = vld.sshfl [vmem:[#allocation1 + $0x10] sm:$0xff pattern:$0x73625140]
      %vm4569 = vcmask 1042024
      %v4570 = vsel %vm4569, %v4563, 0.0
      %v4571 = vrot.slane %v4570, 4
      %v4572 = vadd.f32 %v4570, %v4571
      %v4573 = vrot.slane %v4572, 2
      %v4574 = vadd.f32 %v4572, %v4573
      %v4575 = vrot.slane %v4574, 1
      %v4576 = vadd.f32 %v4574, %v4575
      %v4577 = vsel %vm3781, %v4564, 0.0
      %v4578 = vrot.slane %v4577, 4
      %v4579 = vadd.f32 %v4577, %v4578
      %v4580 = vrot.slane %v4579, 2
      %v4581 = vadd.f32 %v4579, %v4580
      %v4582 = vrot.slane %v4581, 1
      %v4583 = vadd.f32 %v4581, %v4582
      %vm4584 = vcmask 623616
      %v4585 = vsel %vm4584, %v4565, 0.0
      %v4586 = vrot.slane %v4585, 4
      %v4587 = vadd.f32 %v4585, %v4586
      %v4588 = vrot.slane %v4587, 2
      %v4589 = vadd.f32 %v4587, %v4588
      %v4590 = vrot.slane %v4589, 1
      %v4591 = vadd.f32 %v4589, %v4590
      %v4592 = vld [vmem:[%s5] sm:$0x1]
      %4594 = vset.pattern.permute.xlu0 2
      %4595 = vperm.xlu0 %4594, %v4592
      %v4596 = vpop.permute.xlu0 %4595
      %v4598 = vadd.f32 %v4576, %v4596
      %v4599 = vadd.f32 %v4583, %v4596
      %v4600 = vadd.f32 %v4591, %v4596
      %v4601 = vsub.f32 0.0, %v4598
      %v4602 = vsub.f32 0.0, %v4599
      %v4603 = vsub.f32 0.0, %v4600
      %v4604 = vmul.f32 %v4601, 1.442695
      %v4605 = vpow.pop %v4604
      %v4606 = vmul.f32 %v4602, 1.442695
      %v4607 = vpow.pop %v4606
      %v4608 = vmul.f32 %v4603, 1.442695
      %v4609 = vpow.pop %v4608
      %v4610 = vadd.f32 %v4605, 1.0
      %v4611 = vadd.f32 %v4607, 1.0
      %v4612 = vadd.f32 %v4609, 1.0
      %v4613 = vrcp.pop %v4610
      %v4614 = vrcp.pop %v4611
      %v4615 = vrcp.pop %v4612
      %v4616 = vadd.f32 %v4613, 1.0
      %v4617 = vadd.f32 %v4614, 1.0
      %v4618 = vadd.f32 %v4615, 1.0
      %v4619 = vperm.slane %v4616, 0
      %v4620 = vperm.slane %v4617, 0
      %v4621 = vperm.slane %v4618, 0
      %4625 = vrot.lane.b32.xlu0 %v4619, 51
      %v4626 = vpop.permute.xlu0 %4625
      %4627 = vrot.lane.b32.xlu0 %v4620, 51
      %v4628 = vpop.permute.xlu0 %4627
      %4629 = vrot.lane.b32.xlu0 %v4621, 51
      %v4630 = vpop.permute.xlu0 %4629
      %vm4631 = vcmask 416768
      %v4632 = vsel %vm4631, %v4626, %v4628
      %v4633 = vsel %vm4631, %v4628, %v4630
      %v4636 = vmul.f32 %v3100, %v4632
      %v4637 = vmul.f32 %v3101, %v4633
      %v4638 = vmax.f32 %v4636, %v4637
      %4639 = vmax.xlane.f32.xlu0 %v4638
      %v4640 = vpop.xlane.xlu0 %4639
      %v4641 = vadd.f32 %v4636, %v4637
      %4642 = vadd.xlane.f32.xlu0 %v4641
      %v4643 = vpop.xlane.xlu0 %4642
      %v4644 = vmul.f32 %v4643, 0.00390625
      %v4645 = vadd.f32 %v4640, %v4644
      %v4646 = vld [vmem:[%s3] sm:$0xf]
      %v4647 = vunpack.c.l.bf16 %v4646
      %v4648 = vmul.f32 %v4647, %v4645
      %vm4649 = vcmask 458112
      %v4650 = vsel %vm4649, %v4648, 0.0
      %v4651 = vrot.slane %v4650, 4
      %v4652 = vadd.f32 %v4650, %v4651
      %v4653 = vrot.slane %v4652, 2
      %v4654 = vadd.f32 %v4652, %v4653
      %v4655 = vrot.slane %v4654, 1
      %v4656 = vadd.f32 %v4654, %v4655
      %v4657 = vld [vmem:[%s5 + $0x1] sm:$0x1]
      %4659 = vrot.lane.b32.xlu0 %v4657, 48
      %v4660 = vpop.permute.xlu0 %4659
      %v4662 = vadd.f32 %v4656, %v4660
      %v4663 = vmul.f32 %v4662, 0.5
      %v4664 = vmul.f32 %v4662, 0.70710677
      %vm4665 = vcmp.ge.f32.partialorder %v4664, 0.0
      %v4666 = vsel %vm4665, 1.0, -1.0
      %v4667 = vand.u32 2147483647, %v4664
      %v4668 = vmul.f32 %v4667, 0.3275911
      %v4669 = vadd.f32 %v4668, 1.0
      %v4670 = vrcp.pop %v4669
      %v4671 = vmul.f32 %v4670, 1.0614054
      %v4672 = vadd.f32 %v4671, -1.4531521
      %v4673 = vmul.f32 %v4672, %v4670
      %v4674 = vadd.f32 %v4673, 1.4214138
      %v4675 = vmul.f32 %v4674, %v4670
      %v4676 = vadd.f32 %v4675, -0.28449672
      %v4677 = vmul.f32 %v4676, %v4670
      %v4678 = vadd.f32 %v4677, 0.2548296
      %v4679 = vmul.f32 %v4678, %v4670
      %v4680 = vsub.f32 0.0, %v4667
      %v4681 = vmul.f32 %v4680, %v4667
      %v4682 = vmul.f32 %v4681, 1.442695
      %v4683 = vpow.pop %v4682
      %v4684 = vmul.f32 %v4679, %v4683
      %v4685 = vsub.f32 1.0, %v4684
      %v4686 = vmul.f32 %v4666, %v4685
      %v4687 = vadd.f32 %v4686, 1.0
      %v4688 = vmul.f32 %v4663, %v4687
      %v4689 = vperm.slane %v4688, 0
      %4691 = vrot.lane.b32.xlu0 %v4689, 8
      %v4692 = vpop.permute.xlu0 %4691
      %v4694 = vmul.f32 %v4647, %v4692
      %4696 = vrot.lane.b32.xlu0 %v4694, 72
      %v4697 = vpop.permute.xlu0 %4696
      %v4699 = vsel %vm3052, %v4697, 0.0
      %4700 = vadd.xlane.f32.xlu0 %v4699
      %v4701 = vpop.xlane.xlu0 %4700
      %v4702 = vld [vmem:[%s1] sm:$0xff]
      %v4703 = vadd.f32 %v4701, %v4702
      %v4704 = vsub.f32 0.0, %v4703
      %v4705 = vmul.f32 %v4704, 1.442695
      %v4706 = vpow.pop %v4705
      %v4707 = vadd.f32 %v4706, 1.0
      %v4708 = vrcp.pop %v4707
      %v4709 = vadd.f32 %v4708, 1.0
      %4711 = vset.pattern.permute.xlu0 11
      %4712 = vperm.xlu0 %4711, %v4709
      %v4713 = vpop.permute.xlu0 %4712
      %v4715 = vmul.f32 %v4636, %v4713
      %v4716 = vmul.f32 %v4637, %v4713
      %4717 = vst [vmem:[%s278] sm:$0xff] %v4715
      %4718 = vst [vmem:[%s278 + $0x8] sm:$0xff] %v4716
      %p4719 = scmp.lt.s32.totalorder %s18, 1
      %s4720 = scalar_select %p4719, %s18, 1
      %s4721 = smul.addr %s4720, 2
      %s4722 = smul.addr %s4721, 8
      %s4723 = scalar_lea.vmem %s7, %s4722
      // Predicated region
      $region49: #{sfm_forward.1} parent=47 // pred_check
        %p4724 = pneg %p188
      $region50: #{sfm_forward.1} parent=47 // pred_check_branch
        %4726 = sbr.rel (%p4724) target = $region52
      $region51: #{sfm_forward.1} parent=47 // pred_region
        _
      $region52: #{sfm_forward.1} parent=47 // pred_fallthru
        _
    $region48: #{sfm_forward.1} parent=5 // pred_fallthru
      _
    %p4727 = scmp.le.s32.totalorder 2, %s13
    // Predicated region
    $region53: #{sfm_forward.1} parent=5 // pred_check
      %p4728 = pneg %p4727
    $region54: #{sfm_forward.1} parent=5 // pred_check_branch
      %4730 = sbr.rel (%p4728) target = $region56
    $region55: #{sfm_forward.1} parent=5 // pred_region
      %s4731 = ssub.s32 %s13, 2
      // Predicated region
      $region57: #{sfm_forward.1} parent=55 // pred_check
        %p4732 = pneg %p194
      $region58: #{sfm_forward.1} parent=55 // pred_check_branch
        %4734 = sbr.rel (%p4732) target = $region60
      $region59: #{sfm_forward.1} parent=55 // pred_region
        %p4735 = scmp.lt.s32.totalorder %s19, 1
        %s4736 = scalar_select %p4735, %s19, 1
        %s4737 = smul.addr %s4736, 2
        %s4738 = smul.addr %s4737, 8
        %s4739 = scalar_lea.vmem %s7, %s4738
      $region60: #{sfm_forward.1} parent=55 // pred_fallthru
        _
    $region56: #{sfm_forward.1} parent=5 // pred_fallthru
      _
  $region6: #{sfm_forward.1} parent=0 // loop_footer
    %s17 = sadd.s32 1, %s13
  $region7: #{sfm_forward.1} parent=0 // loop_footer_branch
    %12 = sbr.rel target = $region3
  $region8: #{sfm_forward.1} parent=0 // loop_exit
    _

</llo_original>
